<compile_context>
chip_gen: v7x
topology: tpu7x:2x2x1
jax: 0.10.0
libtpu: 0.0.40
codegen_flags: <defaults>
</compile_context>

<pallas_src>
import jax
import jax.numpy as jnp
from jax.experimental import pallas as pl
from jax.experimental.pallas import tpu as pltpu


def _round_up(x, m):
    return ((x + m - 1) // m) * m


def coatten_block(xlh, xll, xrh, xrl, params):
    """Forward of CoAttenBlock.  Inputs/outputs are PyTorch-style NCHW float32."""
    bs, ch, H, W = xlh.shape
    P = H * W
    f32 = jnp.float32
    bf16 = jnp.bfloat16

    # ---- packed lane layout -------------------------------------------------
    SI = 2 * ch                                   # real input channels per side
    WX = _round_up(2 * SI, 128)                   # packed conv-input width  [xl_cat | xr_cat]
    XS = WX // 2                                  # lane offset of the R input half
    WM = _round_up(2 * (ch + 2), 128)             # packed mid width [xL, gL | xR, gR]
    SM = WM // 2                                  # lane offset of the R mid half
    WOUT = _round_up(2 * ch, 128)                 # packed output width [out_L | out_R]
    GL = ch                                       # lane carrying the fused gateL logit
    GR = SM + ch + 1                              # lane carrying the fused gateR logit
    CW = max(WM, WOUT)

    # ---- layout glue: one NCHW -> (P, C) token transform per tensor --------
    def tok(x):
        return jnp.transpose(x, (0, 2, 3, 1)).reshape(bs, P, ch).astype(f32)

    xl_cat = jnp.concatenate([tok(xlh), tok(xll)], axis=-1)        # (bs, P, 2ch)
    xr_cat = jnp.concatenate([tok(xrh), tok(xrl)], axis=-1)
    x_in = jnp.zeros((bs, P, WX), f32)
    x_in = x_in.at[:, :, :SI].set(xl_cat).at[:, :, XS:XS + SI].set(xr_cat)

    # ---- weight packing ------------------------------------------------------
    def wmat(w):      # torch (cout, cin, 1, 1) -> (cin, cout) matmul weight
        return jnp.transpose(w.reshape(w.shape[0], w.shape[1]), (1, 0)).astype(f32)

    WL, WR = wmat(params["concaL_w"]), wmat(params["concaR_w"])    # (2ch, ch)
    bL = params["concaL_b"].astype(f32)
    bR = params["concaR_b"].astype(f32)
    wgL = params["gateL_w"].reshape(ch).astype(f32)
    wgR = params["gateR_w"].reshape(ch).astype(f32)
    bgL = params["gateL_b"].reshape(()).astype(f32)
    bgR = params["gateR_b"].reshape(()).astype(f32)

    # block-diagonal input conv; gate projections ride in padded output lanes.
    # (gateL at lane ch of the L half, gateR at lane ch+1 of the R half so the
    #  cross terms of the affinity contraction are exactly zero.)
    w_in = jnp.zeros((WX, WM), f32)
    w_in = w_in.at[:SI, :ch].set(WL)
    w_in = w_in.at[:SI, GL].set(WL @ wgL)
    w_in = w_in.at[XS:XS + SI, SM:SM + ch].set(WR)
    w_in = w_in.at[XS:XS + SI, GR].set(WR @ wgR)

    b_in = jnp.zeros((WM,), f32)
    b_in = b_in.at[:ch].set(bL).at[GL].set(bL @ wgL)
    b_in = b_in.at[SM:SM + ch].set(bR).at[GR].set(bR @ wgR)

    WLo, WRo = wmat(params["concaL_out_w"]), wmat(params["concaR_out_w"])  # (2ch, ch)
    bLo = params["concaL_out_b"].astype(f32)
    bRo = params["concaR_out_b"].astype(f32)

    # output conv split by concat half (x-half / branch-half), block-diagonal L/R.
    w_out_x = jnp.zeros((WM, WOUT), f32)
    w_out_x = w_out_x.at[:ch, :ch].set(WLo[:ch]).at[SM:SM + ch, ch:2 * ch].set(WRo[:ch])
    w_out_br = jnp.zeros((WM, WOUT), f32)
    w_out_br = w_out_br.at[:ch, :ch].set(WLo[ch:]).at[SM:SM + ch, ch:2 * ch].set(WRo[ch:])

    b_out = jnp.zeros((WOUT,), f32).at[:ch].set(bLo).at[ch:2 * ch].set(bRo)

    consts = jnp.zeros((2, CW), f32).at[0, :WM].set(b_in).at[1, :WOUT].set(b_out)
    bg = jnp.stack([bgL, bgR])                     # (2,) gate biases -> SMEM

    # ---- the fused kernel ----------------------------------------------------
    def kernel(bg_ref, x_ref, w_in_ref, w_ox_ref, w_ob_ref, cv_ref, out_ref):
        x = x_ref[0]                                                 # (P, WX)
        b_in_row = cv_ref[0:1, :WM]                                  # (1, WM)
        b_out_row = cv_ref[1:2, :WOUT]                               # (1, WOUT)

        # packed input conv (+ fused gate columns): one MXU dot.
        y = jnp.dot(x, w_in_ref[...], preferred_element_type=jnp.float32) + b_in_row
        xLa = y[:, :SM]                    # [xL | gateL col | 0]
        xRa = y[:, SM:2 * SM]              # [xR | 0 | gateR col | 0]

        # affinity in both orientations -> all softmax stats are lane reductions.
        at = jax.lax.dot_general(xRa, xLa, (((1,), (1,)), ((), ())),
                                 preferred_element_type=jnp.float32)  # at[j,i] = Aff[i,j]
        aff = jax.lax.dot_general(xLa, xRa, (((1,), (1,)), ((), ())),
                                  preferred_element_type=jnp.float32) # aff[i,j] = Aff[i,j]

        lane = jax.lax.broadcasted_iota(jnp.int32, (1, WM), 1)
        is_l = lane < SM

        # Branch 1: softmax(Affinity, dim=1) == lane softmax of `at` rows.
        m1 = jnp.max(at, axis=-1, keepdims=True)
        e1 = jnp.exp(at - m1)
        den1 = jnp.sum(e1, axis=-1, keepdims=True)
        yL = jnp.where(is_l, y, 0.0).astype(bf16)                    # L half only
        br1 = jnp.dot(e1.astype(bf16), yL, preferred_element_type=jnp.float32)
        br1 = br1 * pl.reciprocal(den1, approx=True)                 # normalize (P,1) scale
        g1 = jax.nn.sigmoid(br1[:, GL:GL + 1] + bg_ref[0])           # fused gateL logit
        br1 = br1 * g1

        # Branch 2: softmax(Affinity, dim=2) == lane softmax of `aff` rows;
        # normalizer folded into the RHS rows, contraction over dim 0.
        m2 = jnp.max(aff, axis=-1, keepdims=True)
        e2 = jnp.exp(aff - m2)
        den2 = jnp.sum(e2, axis=-1, keepdims=True)
        yR = jnp.where(is_l, 0.0, y * pl.reciprocal(den2, approx=True)).astype(bf16)
        br2 = jax.lax.dot_general(e2.astype(bf16), yR, (((0,), (0,)), ((), ())),
                                  preferred_element_type=jnp.float32)
        g2 = jax.nn.sigmoid(br2[:, GR:GR + 1] + bg_ref[1])           # fused gateR logit
        br2 = br2 * g2

        # br1 / br2 live in disjoint lane halves -> the channel concat is a VPU add.
        br = br1 + br2
        out = (jnp.dot(y, w_ox_ref[...], preferred_element_type=jnp.float32)
               + jnp.dot(br, w_ob_ref[...], preferred_element_type=jnp.float32)
               + b_out_row)
        out_ref[0] = out.astype(out_ref.dtype)                       # one lane-dense store

    grid_spec = pltpu.PrefetchScalarGridSpec(
        num_scalar_prefetch=0,
        grid=(bs,),
        in_specs=[
            pl.BlockSpec(memory_space=pltpu.MemorySpace.SMEM),       # gate biases (2,)
            pl.BlockSpec((1, P, WX), lambda b: (b, 0, 0)),           # packed inputs
            pl.BlockSpec((WX, WM), lambda b: (0, 0)),                # w_in     (resident)
            pl.BlockSpec((WM, WOUT), lambda b: (0, 0)),              # w_out_x  (resident)
            pl.BlockSpec((WM, WOUT), lambda b: (0, 0)),              # w_out_br (resident)
            pl.BlockSpec((2, CW), lambda b: (0, 0)),                 # merged bias vectors
        ],
        out_specs=pl.BlockSpec((1, P, WOUT), lambda b: (b, 0, 0)),
    )

    out = pl.pallas_call(
        kernel,
        out_shape=jax.ShapeDtypeStruct((bs, P, WOUT), f32),
        grid_spec=grid_spec,
        compiler_params=pltpu.CompilerParams(
            dimension_semantics=("parallel",),        # shard batch across v7x's 2 TCs
            vmem_limit_bytes=32 * 1024 * 1024,
        ),
    )(bg, x_in, w_in, w_out_x, w_out_br, consts)

    def untok(y):
        return jnp.transpose(y.reshape(bs, H, W, ch), (0, 3, 1, 2))

    return untok(out[:, :, :ch]), untok(out[:, :, ch:2 * ch])


# ----------------------------------------------------------------------------
# Pure-JAX reference (mirrors the PyTorch forward exactly, NCHW layout).
# ----------------------------------------------------------------------------
def _reference(xlh, xll, xrh, xrl, p):
    hp = jax.lax.Precision.HIGHEST

    def conv1x1(x, w, b):
        y = jax.lax.conv_general_dilated(
            x, w, (1, 1), "VALID",
            dimension_numbers=("NCHW", "OIHW", "NCHW"), precision=hp)
        return y + b[None, :, None, None]

    bs, ch, H, W = xlh.shape
    xL = conv1x1(jnp.concatenate([xlh, xll], 1), p["concaL_w"], p["concaL_b"])
    xR = conv1x1(jnp.concatenate([xrh, xrl], 1), p["concaR_w"], p["concaR_b"])
    xLr = xL.reshape(bs, ch, H * W)
    xRr = xR.reshape(bs, ch, H * W)
    aff = jnp.einsum("bci,bcj->bij", xLr, xRr, precision=hp)
    at1 = jax.nn.softmax(aff, axis=1)
    at2 = jax.nn.softmax(aff, axis=2)
    br1 = jnp.einsum("bci,bij->bcj", xLr, at1, precision=hp).reshape(bs, ch, H, W)
    g1 = jax.nn.sigmoid(conv1x1(br1, p["gateL_w"], p["gateL_b"]))
    br1 = br1 * g1
    br2 = jnp.einsum("bci,bij->bcj", xRr, at2, precision=hp).reshape(bs, ch, H, W)
    g2 = jax.nn.sigmoid(conv1x1(br2, p["gateR_w"], p["gateR_b"]))
    br2 = br2 * g2
    outL = conv1x1(jnp.concatenate([xL, br1], 1), p["concaL_out_w"], p["concaL_out_b"])
    outR = conv1x1(jnp.concatenate([xR, br2], 1), p["concaR_out_w"], p["concaR_out_b"])
    return outL, outR


if __name__ == "__main__":
    BS, CH, H, W = 2, 32, 16, 16          # CoAttenBlock(channel=32), 16x16 feature maps

    key = jax.random.PRNGKey(0)
    keys = jax.random.split(key, 16)

    def rnd(k, shape, scale=1.0):
        return scale * jax.random.normal(k, shape, dtype=jnp.float32)

    xlh = rnd(keys[0], (BS, CH, H, W))
    xll = rnd(keys[1], (BS, CH, H, W))
    xrh = rnd(keys[2], (BS, CH, H, W))
    xrl = rnd(keys[3], (BS, CH, H, W))

    params = {
        "concaL_w": rnd(keys[4], (CH, 2 * CH, 1, 1), 0.1), "concaL_b": rnd(keys[5], (CH,), 0.1),
        "concaR_w": rnd(keys[6], (CH, 2 * CH, 1, 1), 0.1), "concaR_b": rnd(keys[7], (CH,), 0.1),
        "gateL_w": rnd(keys[8], (1, CH, 1, 1), 0.1), "gateL_b": rnd(keys[9], (1,), 0.1),
        "gateR_w": rnd(keys[10], (1, CH, 1, 1), 0.1), "gateR_b": rnd(keys[11], (1,), 0.1),
        "concaL_out_w": rnd(keys[12], (CH, 2 * CH, 1, 1), 0.1),
        "concaL_out_b": rnd(keys[13], (CH,), 0.1),
        "concaR_out_w": rnd(keys[14], (CH, 2 * CH, 1, 1), 0.1),
        "concaR_out_b": rnd(keys[15], (CH,), 0.1),
    }

    fwd = jax.jit(coatten_block)
    out_l, out_r = fwd(xlh, xll, xrh, xrl, params)
    out_l, out_r = jax.block_until_ready((out_l, out_r))

    ref_l, ref_r = _reference(xlh, xll, xrh, xrl, params)

    assert out_l.shape == (BS, CH, H, W), out_l.shape
    assert out_r.shape == (BS, CH, H, W), out_r.shape
    err_l = float(jnp.max(jnp.abs(out_l - ref_l)))
    err_r = float(jnp.max(jnp.abs(out_r - ref_r)))
    # Tolerance covers the bf16 probability-matrix dots + approx reciprocal
    # (logit path, affinity and both convolutions are kept in f32).
    assert err_l < 3e-2 and err_r < 3e-2, (err_l, err_r)

    print("KERNEL_OK")
</pallas_src>

<mosaic_0001>
module attributes {stable_mosaic.version = 11 : i64} {
  func.func @kernel(%arg0: i32, %arg1: memref<2xf32, #tpu.memory_space<smem>>, %arg2: memref<1x256x128xf32, #tpu.memory_space<vmem>>, %arg3: memref<128x128xf32, #tpu.memory_space<vmem>>, %arg4: memref<128x128xf32, #tpu.memory_space<vmem>>, %arg5: memref<128x128xf32, #tpu.memory_space<vmem>>, %arg6: memref<2x128xf32, #tpu.memory_space<vmem>>, %arg7: memref<1x256x128xf32, #tpu.memory_space<vmem>>) attributes {dimension_semantics = [#tpu.dimension_semantics<parallel>], iteration_bounds = array<i64: 2>, scalar_prefetch = 0 : i64, scratch_operands = 0 : i64, tpu.core_type = #tpu.core_type<tc>, window_params = [{transform_indices = @transform_0, window_bounds = array<i64: 2>}, {transform_indices = @transform_1, window_bounds = array<i64: 1, 256, 128>}, {pipeline_mode = #tpu.pipeline_mode<synchronous>, transform_indices = @transform_2, window_bounds = array<i64: 128, 128>}, {pipeline_mode = #tpu.pipeline_mode<synchronous>, transform_indices = @transform_3, window_bounds = array<i64: 128, 128>}, {pipeline_mode = #tpu.pipeline_mode<synchronous>, transform_indices = @transform_4, window_bounds = array<i64: 128, 128>}, {pipeline_mode = #tpu.pipeline_mode<synchronous>, transform_indices = @transform_5, window_bounds = array<i64: 2, 128>}, {transform_indices = @transform_6, window_bounds = array<i64: 1, 256, 128>}]} {
    %c0 = arith.constant 0 : index
    %c0_0 = arith.constant 0 : index
    %c0_1 = arith.constant 0 : index
    %0 = vector.load %arg2[%c0, %c0_0, %c0_1] : memref<1x256x128xf32, #tpu.memory_space<vmem>>, vector<1x256x128xf32>
    %1 = vector.shape_cast %0 : vector<1x256x128xf32> to vector<256x128xf32>
    %c0_2 = arith.constant 0 : index
    %c0_3 = arith.constant 0 : index
    %2 = vector.load %arg6[%c0_2, %c0_3] : memref<2x128xf32, #tpu.memory_space<vmem>>, vector<1x128xf32>
    %c1 = arith.constant 1 : index
    %c0_4 = arith.constant 0 : index
    %3 = vector.load %arg6[%c1, %c0_4] : memref<2x128xf32, #tpu.memory_space<vmem>>, vector<1x128xf32>
    %c0_5 = arith.constant 0 : index
    %c0_6 = arith.constant 0 : index
    %4 = vector.load %arg3[%c0_5, %c0_6] : memref<128x128xf32, #tpu.memory_space<vmem>>, vector<128x128xf32>
    %cst = arith.constant dense<0.000000e+00> : vector<256x128xf32>
    %5 = tpu.matmul %1, %4, %cst {dimension_numbers = #tpu.dot_dimension_numbers<[1], [0], [0], [1], [0, 0, 1, 1], [], []>} : vector<256x128xf32>, vector<128x128xf32>, vector<256x128xf32> -> vector<256x128xf32>
    %6 = vector.broadcast %2 : vector<1x128xf32> to vector<256x128xf32>
    %7 = arith.addf %5, %6 : vector<256x128xf32>
    %8 = vector.extract_strided_slice %7 {offsets = [0, 0], sizes = [256, 64], strides = [1, 1]} : vector<256x128xf32> to vector<256x64xf32>
    %9 = vector.extract_strided_slice %7 {offsets = [0, 64], sizes = [256, 64], strides = [1, 1]} : vector<256x128xf32> to vector<256x64xf32>
    %cst_7 = arith.constant dense<0.000000e+00> : vector<256x256xf32>
    %10 = tpu.matmul %9, %8, %cst_7 {dimension_numbers = #tpu.dot_dimension_numbers<[1], [1], [0], [0], [0, 0, 1, 0], [], []>} : vector<256x64xf32>, vector<256x64xf32>, vector<256x256xf32> -> vector<256x256xf32>
    %cst_8 = arith.constant dense<0.000000e+00> : vector<256x256xf32>
    %11 = tpu.matmul %8, %9, %cst_8 {dimension_numbers = #tpu.dot_dimension_numbers<[1], [1], [0], [0], [0, 0, 1, 0], [], []>} : vector<256x64xf32>, vector<256x64xf32>, vector<256x256xf32> -> vector<256x256xf32>
    %12 = tpu.iota {dimensions = array<i32: 1>} : vector<1x128xi32>
    %c64_i32 = arith.constant 64 : i32
    %13 = vector.broadcast %c64_i32 : i32 to vector<1x128xi32>
    %14 = arith.cmpi slt, %12, %13 : vector<1x128xi32>
    %cst_9 = arith.constant dense<0xFF800000> : vector<256xf32>
    %15 = vector.multi_reduction <maximumf>, %10, %cst_9 [1] : vector<256x256xf32> to vector<256xf32>
    %16 = vector.shape_cast %15 : vector<256xf32> to vector<256x1xf32>
    %17 = vector.broadcast %16 : vector<256x1xf32> to vector<256x256xf32>
    %18 = arith.subf %10, %17 : vector<256x256xf32>
    %19 = math.exp %18 : vector<256x256xf32>
    %cst_10 = arith.constant dense<0.000000e+00> : vector<256xf32>
    %20 = vector.multi_reduction <add>, %19, %cst_10 [1] : vector<256x256xf32> to vector<256xf32>
    %21 = vector.shape_cast %20 : vector<256xf32> to vector<256x1xf32>
    %cst_11 = arith.constant 0.000000e+00 : f32
    %22 = vector.shape_cast %14 : vector<1x128xi1> to vector<1x128xi1>
    %23 = vector.broadcast %22 : vector<1x128xi1> to vector<256x128xi1>
    %24 = vector.broadcast %cst_11 : f32 to vector<256x128xf32>
    %25 = arith.select %23, %7, %24 : vector<256x128xi1>, vector<256x128xf32>
    %26 = arith.truncf %25 : vector<256x128xf32> to vector<256x128xbf16>
    %27 = arith.truncf %19 : vector<256x256xf32> to vector<256x256xbf16>
    %cst_12 = arith.constant dense<0.000000e+00> : vector<256x128xf32>
    %28 = tpu.matmul %27, %26, %cst_12 {dimension_numbers = #tpu.dot_dimension_numbers<[1], [0], [0], [1], [0, 0, 1, 1], [], []>} : vector<256x256xbf16>, vector<256x128xbf16>, vector<256x128xf32> -> vector<256x128xf32>
    %29 = tpu.reciprocal %21 {approx = true} : vector<256x1xf32> -> vector<256x1xf32>
    %30 = vector.broadcast %29 : vector<256x1xf32> to vector<256x128xf32>
    %31 = arith.mulf %28, %30 : vector<256x128xf32>
    %32 = vector.extract_strided_slice %31 {offsets = [0, 32], sizes = [256, 1], strides = [1, 1]} : vector<256x128xf32> to vector<256x1xf32>
    %c0_13 = arith.constant 0 : index
    %33 = memref.load %arg1[%c0_13] : memref<2xf32, #tpu.memory_space<smem>>
    %34 = vector.broadcast %33 : f32 to vector<256x1xf32>
    %35 = arith.addf %32, %34 : vector<256x1xf32>
    %36 = arith.negf %35 : vector<256x1xf32>
    %37 = math.exp %36 : vector<256x1xf32>
    %cst_14 = arith.constant 1.000000e+00 : f32
    %38 = vector.broadcast %cst_14 : f32 to vector<256x1xf32>
    %39 = arith.addf %38, %37 : vector<256x1xf32>
    %40 = arith.divf %38, %39 : vector<256x1xf32>
    %41 = vector.broadcast %40 : vector<256x1xf32> to vector<256x128xf32>
    %42 = arith.mulf %31, %41 : vector<256x128xf32>
    %cst_15 = arith.constant dense<0xFF800000> : vector<256xf32>
    %43 = vector.multi_reduction <maximumf>, %11, %cst_15 [1] : vector<256x256xf32> to vector<256xf32>
    %44 = vector.shape_cast %43 : vector<256xf32> to vector<256x1xf32>
    %45 = vector.broadcast %44 : vector<256x1xf32> to vector<256x256xf32>
    %46 = arith.subf %11, %45 : vector<256x256xf32>
    %47 = math.exp %46 : vector<256x256xf32>
    %cst_16 = arith.constant dense<0.000000e+00> : vector<256xf32>
    %48 = vector.multi_reduction <add>, %47, %cst_16 [1] : vector<256x256xf32> to vector<256xf32>
    %49 = vector.shape_cast %48 : vector<256xf32> to vector<256x1xf32>
    %50 = tpu.reciprocal %49 {approx = true} : vector<256x1xf32> -> vector<256x1xf32>
    %51 = vector.broadcast %50 : vector<256x1xf32> to vector<256x128xf32>
    %52 = arith.mulf %7, %51 : vector<256x128xf32>
    %cst_17 = arith.constant 0.000000e+00 : f32
    %53 = vector.shape_cast %14 : vector<1x128xi1> to vector<1x128xi1>
    %54 = vector.broadcast %53 : vector<1x128xi1> to vector<256x128xi1>
    %55 = vector.broadcast %cst_17 : f32 to vector<256x128xf32>
    %56 = arith.select %54, %55, %52 : vector<256x128xi1>, vector<256x128xf32>
    %57 = arith.truncf %56 : vector<256x128xf32> to vector<256x128xbf16>
    %58 = arith.truncf %47 : vector<256x256xf32> to vector<256x256xbf16>
    %cst_18 = arith.constant dense<0.000000e+00> : vector<256x128xf32>
    %59 = tpu.matmul %58, %57, %cst_18 {dimension_numbers = #tpu.dot_dimension_numbers<[0], [0], [1], [1], [0, 1, 1, 1], [], []>} : vector<256x256xbf16>, vector<256x128xbf16>, vector<256x128xf32> -> vector<256x128xf32>
    %60 = vector.extract_strided_slice %59 {offsets = [0, 97], sizes = [256, 1], strides = [1, 1]} : vector<256x128xf32> to vector<256x1xf32>
    %c1_19 = arith.constant 1 : index
    %61 = memref.load %arg1[%c1_19] : memref<2xf32, #tpu.memory_space<smem>>
    %62 = vector.broadcast %61 : f32 to vector<256x1xf32>
    %63 = arith.addf %60, %62 : vector<256x1xf32>
    %64 = arith.negf %63 : vector<256x1xf32>
    %65 = math.exp %64 : vector<256x1xf32>
    %cst_20 = arith.constant 1.000000e+00 : f32
    %66 = vector.broadcast %cst_20 : f32 to vector<256x1xf32>
    %67 = arith.addf %66, %65 : vector<256x1xf32>
    %68 = arith.divf %66, %67 : vector<256x1xf32>
    %69 = vector.broadcast %68 : vector<256x1xf32> to vector<256x128xf32>
    %70 = arith.mulf %59, %69 : vector<256x128xf32>
    %71 = arith.addf %42, %70 : vector<256x128xf32>
    %c0_21 = arith.constant 0 : index
    %c0_22 = arith.constant 0 : index
    %72 = vector.load %arg4[%c0_21, %c0_22] : memref<128x128xf32, #tpu.memory_space<vmem>>, vector<128x128xf32>
    %cst_23 = arith.constant dense<0.000000e+00> : vector<256x128xf32>
    %73 = tpu.matmul %7, %72, %cst_23 {dimension_numbers = #tpu.dot_dimension_numbers<[1], [0], [0], [1], [0, 0, 1, 1], [], []>} : vector<256x128xf32>, vector<128x128xf32>, vector<256x128xf32> -> vector<256x128xf32>
    %c0_24 = arith.constant 0 : index
    %c0_25 = arith.constant 0 : index
    %74 = vector.load %arg5[%c0_24, %c0_25] : memref<128x128xf32, #tpu.memory_space<vmem>>, vector<128x128xf32>
    %cst_26 = arith.constant dense<0.000000e+00> : vector<256x128xf32>
    %75 = tpu.matmul %71, %74, %cst_26 {dimension_numbers = #tpu.dot_dimension_numbers<[1], [0], [0], [1], [0, 0, 1, 1], [], []>} : vector<256x128xf32>, vector<128x128xf32>, vector<256x128xf32> -> vector<256x128xf32>
    %76 = arith.addf %73, %75 : vector<256x128xf32>
    %77 = vector.broadcast %3 : vector<1x128xf32> to vector<256x128xf32>
    %78 = arith.addf %76, %77 : vector<256x128xf32>
    %c0_27 = arith.constant 0 : index
    %c0_28 = arith.constant 0 : index
    %c0_29 = arith.constant 0 : index
    %79 = vector.load %arg7[%c0_27, %c0_28, %c0_29] : memref<1x256x128xf32, #tpu.memory_space<vmem>>, vector<1x256x128xf32>
    %80 = vector.shape_cast %79 : vector<1x256x128xf32> to vector<256x128xf32>
    %81 = vector.shape_cast %78 : vector<256x128xf32> to vector<1x256x128xf32>
    tpu.vector_store %arg7[%c0_27, %c0_28, %c0_29], %81 {strides = array<i32>} : memref<1x256x128xf32, #tpu.memory_space<vmem>>, vector<1x256x128xf32>,
    return
  }
  func.func @transform_0(%arg0: i32) -> i32 {
    %c0_i32 = arith.constant 0 : i32
    %c0_i32_0 = arith.constant 0 : i32
    return %c0_i32 : i32
  }
  func.func @transform_1(%arg0: i32) -> (i32, i32, i32) {
    %c0_i32 = arith.constant 0 : i32
    %c0_i32_0 = arith.constant 0 : i32
    %c0_i32_1 = arith.constant 0 : i32
    return %arg0, %c0_i32, %c0_i32_0 : i32, i32, i32
  }
  func.func @transform_2(%arg0: i32) -> (i32, i32) {
    %c0_i32 = arith.constant 0 : i32
    %c0_i32_0 = arith.constant 0 : i32
    %c0_i32_1 = arith.constant 0 : i32
    return %c0_i32, %c0_i32_0 : i32, i32
  }
  func.func @transform_3(%arg0: i32) -> (i32, i32) {
    %c0_i32 = arith.constant 0 : i32
    %c0_i32_0 = arith.constant 0 : i32
    %c0_i32_1 = arith.constant 0 : i32
    return %c0_i32, %c0_i32_0 : i32, i32
  }
  func.func @transform_4(%arg0: i32) -> (i32, i32) {
    %c0_i32 = arith.constant 0 : i32
    %c0_i32_0 = arith.constant 0 : i32
    %c0_i32_1 = arith.constant 0 : i32
    return %c0_i32, %c0_i32_0 : i32, i32
  }
  func.func @transform_5(%arg0: i32) -> (i32, i32) {
    %c0_i32 = arith.constant 0 : i32
    %c0_i32_0 = arith.constant 0 : i32
    %c0_i32_1 = arith.constant 0 : i32
    return %c0_i32, %c0_i32_0 : i32, i32
  }
  func.func @transform_6(%arg0: i32) -> (i32, i32, i32) {
    %c0_i32 = arith.constant 0 : i32
    %c0_i32_0 = arith.constant 0 : i32
    %c0_i32_1 = arith.constant 0 : i32
    return %arg0, %c0_i32, %c0_i32_0 : i32, i32, i32
  }
}

</mosaic_0001>

<llo_original>
// kernel: coatten_block.1
$region0: #{coatten_block.1}
  #allocation0 [shape = 'u32[]', space=smem, size = 0x4, offset = 0x4, fixed_abs, tag = 'smem constant byte address 0x4 - core index']
  #allocation1 [shape = 'u32[144,128]{1,0:T(1,128)}', space=vmem, size = 0x12000, scoped, tag = 'internal scratch']
  %s0 = inlined_call_operand.vmem [shape: f32[2], index: 0, kind: input, shape index: {}]
  %s1 = inlined_call_operand.vmem [shape: f32[2,256,128], index: 1, kind: input, shape index: {}]
  %s2 = inlined_call_operand.vmem [shape: f32[128,128], index: 2, kind: input, shape index: {}]
  %s3 = inlined_call_operand.vmem [shape: f32[128,128], index: 3, kind: input, shape index: {}]
  %s4 = inlined_call_operand.vmem [shape: f32[128,128], index: 4, kind: input, shape index: {}]
  %s5 = inlined_call_operand.vmem [shape: f32[2,128], index: 5, kind: input, shape index: {}]
  %s6 = inlined_call_operand.vmem [shape: f32[2,256,128], index: 6, kind: output, shape index: {}]
  %s7 = sld [smem:[#allocation0]]
  $region61: #{coatten_block.1} parent=0
    _
  %s9 = ssub.s32 1, %s7
  %s10 = scalar_select 0, %s9, %s7
  $region1: #{coatten_block.1} parent=0
    #allocation2 [shape = 'u8[512]{0}', space=smem, size = 0x200, scoped, tag = 'input window, operand 0, single buffered']
    #allocation3 [shape = 's32[2]{0}', space=sflag, size = 0x8, scoped, tag = 'scoped memory for coatten_block.1']
    %11 = vsyncpa [#allocation3], 0
    loop: start=0, step=1, limit=4
    $region2: #{coatten_block.1} parent=1 // loop_pre_header
      _
    $region3: #{coatten_block.1} parent=1 // loop_header
      %s13 = sphi 0, %s17
      %p14 = scmp.ge.s32.totalorder %s13, 4
      %s21 = sphi 0, %s21
      %s23 = sphi 0, %s21
      %s24 = sphi 0, %s23
      %s38 = sphi 0, %s24
      %s44 = sphi 0, %s46
      %s47 = sphi 0, %s44
      %s48 = sphi 0, %s47
      %s64 = sphi 0, %s48
      %s68 = sphi 0, %s68
      %s70 = sphi 0, %s68
      %s71 = sphi 0, %s70
      %s85 = sphi 0, %s71
      %s89 = sphi 0, %s89
      %s91 = sphi 0, %s89
      %s92 = sphi 0, %s91
      %s106 = sphi 0, %s92
      %s110 = sphi 0, %s110
      %s112 = sphi 0, %s110
      %s113 = sphi 0, %s112
      %s127 = sphi 0, %s113
      %s131 = sphi 0, %s131
      %s133 = sphi 0, %s131
      %s134 = sphi 0, %s133
      %s148 = sphi 0, %s134
      %s154 = sphi 0, %s156
      %s157 = sphi 0, %s154
      %s158 = sphi 0, %s157
      %s174 = sphi 0, %s158
    $region4: #{coatten_block.1} parent=1 // loop_header_branch
      %16 = sbr.rel (%p14) target = $region8
    $region5: #{coatten_block.1} parent=1 // loop_body
      %s18 = ssub.s32 %s13, 1
      %s19 = ssub.s32 %s13, 2
      %s20 = sadd.s32 %s13, 1
      %s22 = sadd.s32 %s21, 1
      %p25 = scmp.eq.s32.totalorder %s13, 1
      %p26 = scmp.ne.s32.totalorder %s21, %s23
      %p27 = scmp.eq.s32.totalorder %s13, 0
      %p28 = por %p26, %p27
      %p29 = scmp.ne.s32.totalorder %s21, %s23
      %p30 = scmp.eq.s32.totalorder %s18, 1
      %p31 = por %p29, %p30
      %p32 = scmp.ne.s32.totalorder %s23, %s24
      %p33 = scmp.eq.s32.totalorder %s18, 0
      %p34 = por %p32, %p33
      %p35 = scmp.ne.s32.totalorder %s23, %s24
      %p36 = scmp.eq.s32.totalorder %s19, 1
      %p37 = por %p35, %p36
      %p39 = scmp.ne.s32.totalorder %s24, %s38
      %p40 = scmp.eq.s32.totalorder %s19, 0
      %p41 = por %p39, %p40
      %s42 = ssub.s32 %s13, %s20
      %p43 = scmp.eq.s32.totalorder %s42, 0
      %s45 = sadd.s32 %s44, 1
      %s46 = scalar_select %p43, %s44, %s45
      %p49 = pneg %p43
      %p50 = scmp.eq.s32.totalorder %s13, 1
      %p51 = por %p49, %p50
      %p52 = scmp.ne.s32.totalorder %s44, %s47
      %p53 = scmp.eq.s32.totalorder %s13, 0
      %p54 = por %p52, %p53
      %p55 = scmp.ne.s32.totalorder %s44, %s47
      %p56 = scmp.eq.s32.totalorder %s18, 1
      %p57 = por %p55, %p56
      %p58 = scmp.ne.s32.totalorder %s47, %s48
      %p59 = scmp.eq.s32.totalorder %s18, 0
      %p60 = por %p58, %p59
      %p61 = scmp.ne.s32.totalorder %s47, %s48
      %p62 = scmp.eq.s32.totalorder %s19, 1
      %p63 = por %p61, %p62
      %p65 = scmp.ne.s32.totalorder %s48, %s64
      %p66 = scmp.eq.s32.totalorder %s19, 0
      %p67 = por %p65, %p66
      %s69 = sadd.s32 %s68, 1
      %p72 = scmp.eq.s32.totalorder %s13, 1
      %p73 = scmp.ne.s32.totalorder %s68, %s70
      %p74 = scmp.eq.s32.totalorder %s13, 0
      %p75 = por %p73, %p74
      %p76 = scmp.ne.s32.totalorder %s68, %s70
      %p77 = scmp.eq.s32.totalorder %s18, 1
      %p78 = por %p76, %p77
      %p79 = scmp.ne.s32.totalorder %s70, %s71
      %p80 = scmp.eq.s32.totalorder %s18, 0
      %p81 = por %p79, %p80
      %p82 = scmp.ne.s32.totalorder %s70, %s71
      %p83 = scmp.eq.s32.totalorder %s19, 1
      %p84 = por %p82, %p83
      %p86 = scmp.ne.s32.totalorder %s71, %s85
      %p87 = scmp.eq.s32.totalorder %s19, 0
      %p88 = por %p86, %p87
      %s90 = sadd.s32 %s89, 1
      %p93 = scmp.eq.s32.totalorder %s13, 1
      %p94 = scmp.ne.s32.totalorder %s89, %s91
      %p95 = scmp.eq.s32.totalorder %s13, 0
      %p96 = por %p94, %p95
      %p97 = scmp.ne.s32.totalorder %s89, %s91
      %p98 = scmp.eq.s32.totalorder %s18, 1
      %p99 = por %p97, %p98
      %p100 = scmp.ne.s32.totalorder %s91, %s92
      %p101 = scmp.eq.s32.totalorder %s18, 0
      %p102 = por %p100, %p101
      %p103 = scmp.ne.s32.totalorder %s91, %s92
      %p104 = scmp.eq.s32.totalorder %s19, 1
      %p105 = por %p103, %p104
      %p107 = scmp.ne.s32.totalorder %s92, %s106
      %p108 = scmp.eq.s32.totalorder %s19, 0
      %p109 = por %p107, %p108
      %s111 = sadd.s32 %s110, 1
      %p114 = scmp.eq.s32.totalorder %s13, 1
      %p115 = scmp.ne.s32.totalorder %s110, %s112
      %p116 = scmp.eq.s32.totalorder %s13, 0
      %p117 = por %p115, %p116
      %p118 = scmp.ne.s32.totalorder %s110, %s112
      %p119 = scmp.eq.s32.totalorder %s18, 1
      %p120 = por %p118, %p119
      %p121 = scmp.ne.s32.totalorder %s112, %s113
      %p122 = scmp.eq.s32.totalorder %s18, 0
      %p123 = por %p121, %p122
      %p124 = scmp.ne.s32.totalorder %s112, %s113
      %p125 = scmp.eq.s32.totalorder %s19, 1
      %p126 = por %p124, %p125
      %p128 = scmp.ne.s32.totalorder %s113, %s127
      %p129 = scmp.eq.s32.totalorder %s19, 0
      %p130 = por %p128, %p129
      %s132 = sadd.s32 %s131, 1
      %p135 = scmp.eq.s32.totalorder %s13, 1
      %p136 = scmp.ne.s32.totalorder %s131, %s133
      %p137 = scmp.eq.s32.totalorder %s13, 0
      %p138 = por %p136, %p137
      %p139 = scmp.ne.s32.totalorder %s131, %s133
      %p140 = scmp.eq.s32.totalorder %s18, 1
      %p141 = por %p139, %p140
      %p142 = scmp.ne.s32.totalorder %s133, %s134
      %p143 = scmp.eq.s32.totalorder %s18, 0
      %p144 = por %p142, %p143
      %p145 = scmp.ne.s32.totalorder %s133, %s134
      %p146 = scmp.eq.s32.totalorder %s19, 1
      %p147 = por %p145, %p146
      %p149 = scmp.ne.s32.totalorder %s134, %s148
      %p150 = scmp.eq.s32.totalorder %s19, 0
      %p151 = por %p149, %p150
      %s152 = ssub.s32 %s13, %s20
      %p153 = scmp.eq.s32.totalorder %s152, 0
      %s155 = sadd.s32 %s154, 1
      %s156 = scalar_select %p153, %s154, %s155
      %p159 = pneg %p153
      %p160 = scmp.eq.s32.totalorder %s13, 1
      %p161 = por %p159, %p160
      %p162 = scmp.ne.s32.totalorder %s154, %s157
      %p163 = scmp.eq.s32.totalorder %s13, 0
      %p164 = por %p162, %p163
      %p165 = scmp.ne.s32.totalorder %s154, %s157
      %p166 = scmp.eq.s32.totalorder %s18, 1
      %p167 = por %p165, %p166
      %p168 = scmp.ne.s32.totalorder %s157, %s158
      %p169 = scmp.eq.s32.totalorder %s18, 0
      %p170 = por %p168, %p169
      %p171 = scmp.ne.s32.totalorder %s157, %s158
      %p172 = scmp.eq.s32.totalorder %s19, 1
      %p173 = por %p171, %p172
      %p175 = scmp.ne.s32.totalorder %s158, %s174
      %p176 = scmp.eq.s32.totalorder %s19, 0
      %p177 = por %p175, %p176
      %p178 = scmp.le.s32.totalorder 1, %s13
      %p179 = scmp.lt.s32.totalorder %s13, 3
      %p180 = pnand %p178, %p179
      %p181 = pneg %p180
      // Predicated region
      $region9: #{coatten_block.1} parent=5 // pred_check
        _
      $region10: #{coatten_block.1} parent=5 // pred_check_branch
        %183 = sbr.rel (%p180) target = $region12
      $region11: #{coatten_block.1} parent=5 // pred_region
        %s184 = ssub.s32 %s13, 1
        // Predicated region
        $region13: #{coatten_block.1} parent=11 // pred_check
          %p185 = pneg %p34
        $region14: #{coatten_block.1} parent=11 // pred_check_branch
          %187 = sbr.rel (%p185) target = $region16
        $region15: #{coatten_block.1} parent=11 // pred_region
          %s189 = ssub.s32 16, 16
          %190 = vsyncadd [#allocation3], %s189
          %s192 = sshll.u32 %s0, 4
          %s193 = int_to_ptr.vmem [resolvable:$true] %s192
          %195 = dma.vmem_to_smem %s193, 16, [#allocation2], [#allocation3]
        $region16: #{coatten_block.1} parent=11 // pred_fallthru
          _
        // Predicated region
        $region17: #{coatten_block.1} parent=11 // pred_check
          %p196 = pneg %p81
        $region18: #{coatten_block.1} parent=11 // pred_check_branch
          %198 = sbr.rel (%p196) target = $region20
        $region19: #{coatten_block.1} parent=11 // pred_region
          _
        $region20: #{coatten_block.1} parent=11 // pred_fallthru
          _
        // Predicated region
        $region21: #{coatten_block.1} parent=11 // pred_check
          %p199 = pneg %p102
        $region22: #{coatten_block.1} parent=11 // pred_check_branch
          %201 = sbr.rel (%p199) target = $region24
        $region23: #{coatten_block.1} parent=11 // pred_region
          _
        $region24: #{coatten_block.1} parent=11 // pred_fallthru
          _
        // Predicated region
        $region25: #{coatten_block.1} parent=11 // pred_check
          %p202 = pneg %p123
        $region26: #{coatten_block.1} parent=11 // pred_check_branch
          %204 = sbr.rel (%p202) target = $region28
        $region27: #{coatten_block.1} parent=11 // pred_region
          _
        $region28: #{coatten_block.1} parent=11 // pred_fallthru
          _
        // Predicated region
        $region29: #{coatten_block.1} parent=11 // pred_check
          %p205 = pneg %p144
        $region30: #{coatten_block.1} parent=11 // pred_check_branch
          %207 = sbr.rel (%p205) target = $region32
        $region31: #{coatten_block.1} parent=11 // pred_region
          _
        $region32: #{coatten_block.1} parent=11 // pred_fallthru
          _
      $region12: #{coatten_block.1} parent=5 // pred_fallthru
        _
      %p208 = scmp.lt.s32.totalorder %s13, 2
      // Predicated region
      $region33: #{coatten_block.1} parent=5 // pred_check
        %p209 = pneg %p208
      $region34: #{coatten_block.1} parent=5 // pred_check_branch
        %211 = sbr.rel (%p209) target = $region36
      $region35: #{coatten_block.1} parent=5 // pred_region
        // Predicated region
        $region37: #{coatten_block.1} parent=35 // pred_check
          %p212 = pneg %p54
        $region38: #{coatten_block.1} parent=35 // pred_check_branch
          %214 = sbr.rel (%p212) target = $region40
        $region39: #{coatten_block.1} parent=35 // pred_region
          %p215 = scmp.lt.s32.totalorder %s13, 1
          %s216 = scalar_select %p215, %s13, 1
          %s217 = smul.addr %s216, 32
          %s218 = smul.addr %s217, 8
          %s219 = scalar_lea.vmem %s1, %s218
        $region40: #{coatten_block.1} parent=35 // pred_fallthru
          _
      $region36: #{coatten_block.1} parent=5 // pred_fallthru
        _
      %p220 = scmp.le.s32.totalorder 1, %s13
      %p221 = scmp.lt.s32.totalorder %s13, 3
      %p222 = pnand %p220, %p221
      %p223 = pneg %p222
      // Predicated region
      $region41: #{coatten_block.1} parent=5 // pred_check
        _
      $region42: #{coatten_block.1} parent=5 // pred_check_branch
        %225 = sbr.rel (%p222) target = $region44
      $region43: #{coatten_block.1} parent=5 // pred_region
        %s226 = ssub.s32 %s13, 1
        // Predicated region
        $region45: #{coatten_block.1} parent=43 // pred_check
          %p227 = pneg %p34
        $region46: #{coatten_block.1} parent=43 // pred_check_branch
          %229 = sbr.rel (%p227) target = $region48
        $region47: #{coatten_block.1} parent=43 // pred_region
          %230 = dma.done [#allocation3], 16
        $region48: #{coatten_block.1} parent=43 // pred_fallthru
          _
        %231 = sfence
        %p232 = pneg %p34
        %p233 = pneg %p31
        %p234 = scmp.lt.s32.totalorder %s18, 1
        %s235 = scalar_select %p234, %s18, 1
        %s236 = smul.addr %s235, 32
        %s237 = smul.addr %s236, 8
        %s238 = scalar_lea.vmem %s1, %s237
        %p239 = pneg %p60
        %p240 = pneg %p57
        %p241 = pneg %p81
        %p242 = pneg %p78
        %p243 = pneg %p102
        %p244 = pneg %p99
        %p245 = pneg %p123
        %p246 = pneg %p120
        %p247 = pneg %p144
        %p248 = pneg %p141
        %p249 = pneg %p170
        %p250 = pneg %p167
        %p251 = scmp.lt.s32.totalorder %s18, 1
        %s252 = scalar_select %p251, %s18, 1
        %s253 = smul.addr %s252, 32
        %s254 = smul.addr %s253, 8
        %s255 = scalar_lea.vmem %s6, %s254
        %p256 = scmp.lt.s32.totalorder %s18, 1
        %s257 = scalar_select %p256, %s18, 1
        %s258 = smul.addr %s257, 32
        %s259 = smul.addr %s258, 8
        %s260 = scalar_lea.vmem %s1, %s259
        %p261 = scmp.lt.s32.totalorder %s18, 1
        %s262 = scalar_select %p261, %s18, 1
        %s263 = smul.addr %s262, 32
        %s264 = smul.addr %s263, 8
        %s265 = scalar_lea.vmem %s6, %s264
        %v267 = vld [vmem:[%s260] sm:$0xff]
        %v268 = vld [vmem:[%s260 + $0x8] sm:$0xff]
        %v269 = vld [vmem:[%s260 + $0x10] sm:$0xff]
        %v270 = vld [vmem:[%s260 + $0x18] sm:$0xff]
        %v271 = vld [vmem:[%s260 + $0x20] sm:$0xff]
        %v272 = vld [vmem:[%s260 + $0x28] sm:$0xff]
        %v273 = vld [vmem:[%s260 + $0x30] sm:$0xff]
        %v274 = vld [vmem:[%s260 + $0x38] sm:$0xff]
        %v275 = vld [vmem:[%s260 + $0x40] sm:$0xff]
        %v276 = vld [vmem:[%s260 + $0x48] sm:$0xff]
        %v277 = vld [vmem:[%s260 + $0x50] sm:$0xff]
        %v278 = vld [vmem:[%s260 + $0x58] sm:$0xff]
        %v279 = vld [vmem:[%s260 + $0x60] sm:$0xff]
        %v280 = vld [vmem:[%s260 + $0x68] sm:$0xff]
        %v281 = vld [vmem:[%s260 + $0x70] sm:$0xff]
        %v282 = vld [vmem:[%s260 + $0x78] sm:$0xff]
        %v283 = vld [vmem:[%s260 + $0x80] sm:$0xff]
        %v284 = vld [vmem:[%s260 + $0x88] sm:$0xff]
        %v285 = vld [vmem:[%s260 + $0x90] sm:$0xff]
        %v286 = vld [vmem:[%s260 + $0x98] sm:$0xff]
        %v287 = vld [vmem:[%s260 + $0xa0] sm:$0xff]
        %v288 = vld [vmem:[%s260 + $0xa8] sm:$0xff]
        %v289 = vld [vmem:[%s260 + $0xb0] sm:$0xff]
        %v290 = vld [vmem:[%s260 + $0xb8] sm:$0xff]
        %v291 = vld [vmem:[%s260 + $0xc0] sm:$0xff]
        %v292 = vld [vmem:[%s260 + $0xc8] sm:$0xff]
        %v293 = vld [vmem:[%s260 + $0xd0] sm:$0xff]
        %v294 = vld [vmem:[%s260 + $0xd8] sm:$0xff]
        %v295 = vld [vmem:[%s260 + $0xe0] sm:$0xff]
        %v296 = vld [vmem:[%s260 + $0xe8] sm:$0xff]
        %v297 = vld [vmem:[%s260 + $0xf0] sm:$0xff]
        %v298 = vld [vmem:[%s260 + $0xf8] sm:$0xff]
        %v299 = vld [vmem:[%s5] sm:$0x1]
        %v300 = vld [vmem:[%s5 + $0x1] sm:$0x1]
        %v301 = vld [vmem:[%s2] sm:$0xff]
        %v302 = vld [vmem:[%s2 + $0x8] sm:$0xff]
        %v303 = vld [vmem:[%s2 + $0x10] sm:$0xff]
        %v304 = vld [vmem:[%s2 + $0x18] sm:$0xff]
        %v305 = vld [vmem:[%s2 + $0x20] sm:$0xff]
        %v306 = vld [vmem:[%s2 + $0x28] sm:$0xff]
        %v307 = vld [vmem:[%s2 + $0x30] sm:$0xff]
        %v308 = vld [vmem:[%s2 + $0x38] sm:$0xff]
        %v309 = vld [vmem:[%s2 + $0x40] sm:$0xff]
        %v310 = vld [vmem:[%s2 + $0x48] sm:$0xff]
        %v311 = vld [vmem:[%s2 + $0x50] sm:$0xff]
        %v312 = vld [vmem:[%s2 + $0x58] sm:$0xff]
        %v313 = vld [vmem:[%s2 + $0x60] sm:$0xff]
        %v314 = vld [vmem:[%s2 + $0x68] sm:$0xff]
        %v315 = vld [vmem:[%s2 + $0x70] sm:$0xff]
        %v316 = vld [vmem:[%s2 + $0x78] sm:$0xff]
        %v317 = vlaneseq
        %v318 = vshrl.u32 %v317, 7
        %v319 = vsub.s32 0, %v318
        %v320 = vrot.slane %v299, %v319
        %321 = vmatprep.subr.mxu0 0.0
        %322 = vmatpush1.msra.mxu0 %v301
        %323 = vmatprep.subr.mxu0 0.0
        %324 = vmatpush1.msra.mxu0 %v302
        %325 = vmatprep.subr.mxu0 0.0
        %326 = vmatpush1.msra.mxu0 %v303
        %327 = vmatprep.subr.mxu0 0.0
        %328 = vmatpush1.msra.mxu0 %v304
        %329 = vmatprep.subr.mxu0 0.0
        %330 = vmatpush1.msra.mxu0 %v305
        %331 = vmatprep.subr.mxu0 0.0
        %332 = vmatpush1.msra.mxu0 %v306
        %333 = vmatprep.subr.mxu0 0.0
        %334 = vmatpush1.msra.mxu0 %v307
        %335 = vmatprep.subr.mxu0 0.0
        %336 = vmatpush1.msra.mxu0 %v308
        %337 = vmatprep.subr.mxu0 0.0
        %338 = vmatpush1.msra.mxu0 %v309
        %339 = vmatprep.subr.mxu0 0.0
        %340 = vmatpush1.msra.mxu0 %v310
        %341 = vmatprep.subr.mxu0 0.0
        %342 = vmatpush1.msra.mxu0 %v311
        %343 = vmatprep.subr.mxu0 0.0
        %344 = vmatpush1.msra.mxu0 %v312
        %345 = vmatprep.subr.mxu0 0.0
        %346 = vmatpush1.msra.mxu0 %v313
        %347 = vmatprep.subr.mxu0 0.0
        %348 = vmatpush1.msra.mxu0 %v314
        %349 = vmatprep.subr.mxu0 0.0
        %350 = vmatpush1.msra.mxu0 %v315
        %351 = vmatprep.subr.mxu0 0.0
        %352 = vmatpush1.msra.mxu0 %v316
        %353 = vmatprep.subr.mxu0 0.0
        %354 = vmatpush1.msra.mxu0 0.0
        %355 = vmatprep.subr.mxu0 0.0
        %356 = vmatpush1.msra.mxu0 0.0
        %357 = vmatprep.subr.mxu0 0.0
        %358 = vmatpush1.msra.mxu0 0.0
        %359 = vmatprep.subr.mxu0 0.0
        %360 = vmatpush1.msra.mxu0 0.0
        %361 = vmatprep.subr.mxu0 0.0
        %362 = vmatpush1.msra.mxu0 0.0
        %363 = vmatprep.subr.mxu0 0.0
        %364 = vmatpush1.msra.mxu0 0.0
        %365 = vmatprep.subr.mxu0 0.0
        %366 = vmatpush1.msra.mxu0 0.0
        %367 = vmatprep.subr.mxu0 0.0
        %368 = vmatpush1.msra.mxu0 0.0
        %369 = vmatprep.subr.mxu0 0.0
        %370 = vmatpush1.msra.mxu0 0.0
        %371 = vmatprep.subr.mxu0 0.0
        %372 = vmatpush1.msra.mxu0 0.0
        %373 = vmatprep.subr.mxu0 0.0
        %374 = vmatpush1.msra.mxu0 0.0
        %375 = vmatprep.subr.mxu0 0.0
        %376 = vmatpush1.msra.mxu0 0.0
        %377 = vmatprep.subr.mxu0 0.0
        %378 = vmatpush1.msra.mxu0 0.0
        %379 = vmatprep.subr.mxu0 0.0
        %380 = vmatpush1.msra.mxu0 0.0
        %381 = vmatprep.subr.mxu0 0.0
        %382 = vmatpush1.msra.mxu0 0.0
        %383 = vmatprep.subr.mxu0 0.0
        %384 = vmatpush1.msra.mxu0 0.0
        %385 = vmatprep.mubr.f32.mxu0 0.0
        %386 = vmatmul.mubr.f32.gmra.mrb[0].mxu0 %v267
        %v387 = vpop.f32.mrb[0].mxu0
        %v388 = vadd.f32 %v320, %v387
        %v389 = vpop.f32.mrb[0].mxu0
        %390 = vmatprep.mubr.f32.mxu0 0.0
        %391 = vmatmul.mubr.f32.gmra.mrb[0].mxu0 %v268
        %v392 = vpop.f32.mrb[0].mxu0
        %v393 = vadd.f32 %v320, %v392
        %v394 = vpop.f32.mrb[0].mxu0
        %395 = vmatprep.mubr.f32.mxu0 0.0
        %396 = vmatmul.mubr.f32.gmra.mrb[0].mxu0 %v269
        %v397 = vpop.f32.mrb[0].mxu0
        %v398 = vadd.f32 %v320, %v397
        %v399 = vpop.f32.mrb[0].mxu0
        %400 = vmatprep.mubr.f32.mxu0 0.0
        %401 = vmatmul.mubr.f32.gmra.mrb[0].mxu0 %v270
        %v402 = vpop.f32.mrb[0].mxu0
        %v403 = vadd.f32 %v320, %v402
        %v404 = vpop.f32.mrb[0].mxu0
        %405 = vmatprep.mubr.f32.mxu0 0.0
        %406 = vmatmul.mubr.f32.gmra.mrb[0].mxu0 %v271
        %v407 = vpop.f32.mrb[0].mxu0
        %v408 = vadd.f32 %v320, %v407
        %v409 = vpop.f32.mrb[0].mxu0
        %410 = vmatprep.mubr.f32.mxu0 0.0
        %411 = vmatmul.mubr.f32.gmra.mrb[0].mxu0 %v272
        %v412 = vpop.f32.mrb[0].mxu0
        %v413 = vadd.f32 %v320, %v412
        %v414 = vpop.f32.mrb[0].mxu0
        %415 = vmatprep.mubr.f32.mxu0 0.0
        %416 = vmatmul.mubr.f32.gmra.mrb[0].mxu0 %v273
        %v417 = vpop.f32.mrb[0].mxu0
        %v418 = vadd.f32 %v320, %v417
        %v419 = vpop.f32.mrb[0].mxu0
        %420 = vmatprep.mubr.f32.mxu0 0.0
        %421 = vmatmul.mubr.f32.gmra.mrb[0].mxu0 %v274
        %v422 = vpop.f32.mrb[0].mxu0
        %v423 = vadd.f32 %v320, %v422
        %v424 = vpop.f32.mrb[0].mxu0
        %425 = vmatprep.mubr.f32.mxu0 0.0
        %426 = vmatmul.mubr.f32.gmra.mrb[0].mxu0 %v275
        %v427 = vpop.f32.mrb[0].mxu0
        %v428 = vadd.f32 %v320, %v427
        %v429 = vpop.f32.mrb[0].mxu0
        %430 = vmatprep.mubr.f32.mxu0 0.0
        %431 = vmatmul.mubr.f32.gmra.mrb[0].mxu0 %v276
        %v432 = vpop.f32.mrb[0].mxu0
        %v433 = vadd.f32 %v320, %v432
        %v434 = vpop.f32.mrb[0].mxu0
        %435 = vmatprep.mubr.f32.mxu0 0.0
        %436 = vmatmul.mubr.f32.gmra.mrb[0].mxu0 %v277
        %v437 = vpop.f32.mrb[0].mxu0
        %v438 = vadd.f32 %v320, %v437
        %v439 = vpop.f32.mrb[0].mxu0
        %440 = vmatprep.mubr.f32.mxu0 0.0
        %441 = vmatmul.mubr.f32.gmra.mrb[0].mxu0 %v278
        %v442 = vpop.f32.mrb[0].mxu0
        %v443 = vadd.f32 %v320, %v442
        %v444 = vpop.f32.mrb[0].mxu0
        %445 = vmatprep.mubr.f32.mxu0 0.0
        %446 = vmatmul.mubr.f32.gmra.mrb[0].mxu0 %v279
        %v447 = vpop.f32.mrb[0].mxu0
        %v448 = vadd.f32 %v320, %v447
        %v449 = vpop.f32.mrb[0].mxu0
        %450 = vmatprep.mubr.f32.mxu0 0.0
        %451 = vmatmul.mubr.f32.gmra.mrb[0].mxu0 %v280
        %v452 = vpop.f32.mrb[0].mxu0
        %v453 = vadd.f32 %v320, %v452
        %v454 = vpop.f32.mrb[0].mxu0
        %455 = vmatprep.mubr.f32.mxu0 0.0
        %456 = vmatmul.mubr.f32.gmra.mrb[0].mxu0 %v281
        %v457 = vpop.f32.mrb[0].mxu0
        %v458 = vadd.f32 %v320, %v457
        %v459 = vpop.f32.mrb[0].mxu0
        %460 = vmatprep.mubr.f32.mxu0 0.0
        %461 = vmatmul.mubr.f32.gmra.mrb[0].mxu0 %v282
        %v462 = vpop.f32.mrb[0].mxu0
        %v463 = vadd.f32 %v320, %v462
        %v464 = vpop.f32.mrb[0].mxu0
        %465 = vmatprep.mubr.f32.mxu0 0.0
        %466 = vmatmul.mubr.f32.gmra.mrb[0].mxu0 %v283
        %v467 = vpop.f32.mrb[0].mxu0
        %v468 = vadd.f32 %v320, %v467
        %v469 = vpop.f32.mrb[0].mxu0
        %470 = vmatprep.mubr.f32.mxu0 0.0
        %471 = vmatmul.mubr.f32.gmra.mrb[0].mxu0 %v284
        %v472 = vpop.f32.mrb[0].mxu0
        %v473 = vadd.f32 %v320, %v472
        %v474 = vpop.f32.mrb[0].mxu0
        %475 = vmatprep.mubr.f32.mxu0 0.0
        %476 = vmatmul.mubr.f32.gmra.mrb[0].mxu0 %v285
        %v477 = vpop.f32.mrb[0].mxu0
        %v478 = vadd.f32 %v320, %v477
        %v479 = vpop.f32.mrb[0].mxu0
        %480 = vmatprep.mubr.f32.mxu0 0.0
        %481 = vmatmul.mubr.f32.gmra.mrb[0].mxu0 %v286
        %v482 = vpop.f32.mrb[0].mxu0
        %v483 = vadd.f32 %v320, %v482
        %v484 = vpop.f32.mrb[0].mxu0
        %485 = vmatprep.mubr.f32.mxu0 0.0
        %486 = vmatmul.mubr.f32.gmra.mrb[0].mxu0 %v287
        %v487 = vpop.f32.mrb[0].mxu0
        %v488 = vadd.f32 %v320, %v487
        %v489 = vpop.f32.mrb[0].mxu0
        %490 = vmatprep.mubr.f32.mxu0 0.0
        %491 = vmatmul.mubr.f32.gmra.mrb[0].mxu0 %v288
        %v492 = vpop.f32.mrb[0].mxu0
        %v493 = vadd.f32 %v320, %v492
        %v494 = vpop.f32.mrb[0].mxu0
        %495 = vmatprep.mubr.f32.mxu0 0.0
        %496 = vmatmul.mubr.f32.gmra.mrb[0].mxu0 %v289
        %v497 = vpop.f32.mrb[0].mxu0
        %v498 = vadd.f32 %v320, %v497
        %v499 = vpop.f32.mrb[0].mxu0
        %500 = vmatprep.mubr.f32.mxu0 0.0
        %501 = vmatmul.mubr.f32.gmra.mrb[0].mxu0 %v290
        %v502 = vpop.f32.mrb[0].mxu0
        %v503 = vadd.f32 %v320, %v502
        %v504 = vpop.f32.mrb[0].mxu0
        %505 = vmatprep.mubr.f32.mxu0 0.0
        %506 = vmatmul.mubr.f32.gmra.mrb[0].mxu0 %v291
        %v507 = vpop.f32.mrb[0].mxu0
        %v508 = vadd.f32 %v320, %v507
        %v509 = vpop.f32.mrb[0].mxu0
        %510 = vmatprep.mubr.f32.mxu0 0.0
        %511 = vmatmul.mubr.f32.gmra.mrb[0].mxu0 %v292
        %v512 = vpop.f32.mrb[0].mxu0
        %v513 = vadd.f32 %v320, %v512
        %v514 = vpop.f32.mrb[0].mxu0
        %515 = vmatprep.mubr.f32.mxu0 0.0
        %516 = vmatmul.mubr.f32.gmra.mrb[0].mxu0 %v293
        %v517 = vpop.f32.mrb[0].mxu0
        %v518 = vadd.f32 %v320, %v517
        %v519 = vpop.f32.mrb[0].mxu0
        %520 = vmatprep.mubr.f32.mxu0 0.0
        %521 = vmatmul.mubr.f32.gmra.mrb[0].mxu0 %v294
        %v522 = vpop.f32.mrb[0].mxu0
        %v523 = vadd.f32 %v320, %v522
        %v524 = vpop.f32.mrb[0].mxu0
        %525 = vmatprep.mubr.f32.mxu0 0.0
        %526 = vmatmul.mubr.f32.gmra.mrb[0].mxu0 %v295
        %v527 = vpop.f32.mrb[0].mxu0
        %v528 = vadd.f32 %v320, %v527
        %v529 = vpop.f32.mrb[0].mxu0
        %530 = vmatprep.mubr.f32.mxu0 0.0
        %531 = vmatmul.mubr.f32.gmra.mrb[0].mxu0 %v296
        %v532 = vpop.f32.mrb[0].mxu0
        %v533 = vadd.f32 %v320, %v532
        %v534 = vpop.f32.mrb[0].mxu0
        %535 = vmatprep.mubr.f32.mxu0 0.0
        %536 = vmatmul.mubr.f32.gmra.mrb[0].mxu0 %v297
        %v537 = vpop.f32.mrb[0].mxu0
        %v538 = vadd.f32 %v320, %v537
        %v539 = vpop.f32.mrb[0].mxu0
        %540 = vmatprep.mubr.f32.mxu0 0.0
        %541 = vmatmul.mubr.f32.gmra.mrb[0].mxu0 %v298
        %v542 = vpop.f32.mrb[0].mxu0
        %v543 = vadd.f32 %v320, %v542
        %v544 = vpop.f32.mrb[0].mxu0
        %545 = vdwg.mxu0
        %578 = vrot.lane.b32.xlu0 %v388, 64
        %v579 = vpop.permute.xlu0 %578
        %580 = vrot.lane.b32.xlu0 %v393, 64
        %v581 = vpop.permute.xlu0 %580
        %582 = vrot.lane.b32.xlu0 %v398, 64
        %v583 = vpop.permute.xlu0 %582
        %584 = vrot.lane.b32.xlu0 %v403, 64
        %v585 = vpop.permute.xlu0 %584
        %586 = vrot.lane.b32.xlu0 %v408, 64
        %v587 = vpop.permute.xlu0 %586
        %588 = vrot.lane.b32.xlu0 %v413, 64
        %v589 = vpop.permute.xlu0 %588
        %590 = vrot.lane.b32.xlu0 %v418, 64
        %v591 = vpop.permute.xlu0 %590
        %592 = vrot.lane.b32.xlu0 %v423, 64
        %v593 = vpop.permute.xlu0 %592
        %594 = vrot.lane.b32.xlu0 %v428, 64
        %v595 = vpop.permute.xlu0 %594
        %596 = vrot.lane.b32.xlu0 %v433, 64
        %v597 = vpop.permute.xlu0 %596
        %598 = vrot.lane.b32.xlu0 %v438, 64
        %v599 = vpop.permute.xlu0 %598
        %600 = vrot.lane.b32.xlu0 %v443, 64
        %v601 = vpop.permute.xlu0 %600
        %602 = vrot.lane.b32.xlu0 %v448, 64
        %v603 = vpop.permute.xlu0 %602
        %604 = vrot.lane.b32.xlu0 %v453, 64
        %v605 = vpop.permute.xlu0 %604
        %606 = vrot.lane.b32.xlu0 %v458, 64
        %v607 = vpop.permute.xlu0 %606
        %608 = vrot.lane.b32.xlu0 %v463, 64
        %v609 = vpop.permute.xlu0 %608
        %610 = vrot.lane.b32.xlu0 %v468, 64
        %v611 = vpop.permute.xlu0 %610
        %612 = vrot.lane.b32.xlu0 %v473, 64
        %v613 = vpop.permute.xlu0 %612
        %614 = vrot.lane.b32.xlu0 %v478, 64
        %v615 = vpop.permute.xlu0 %614
        %616 = vrot.lane.b32.xlu0 %v483, 64
        %v617 = vpop.permute.xlu0 %616
        %618 = vrot.lane.b32.xlu0 %v488, 64
        %v619 = vpop.permute.xlu0 %618
        %620 = vrot.lane.b32.xlu0 %v493, 64
        %v621 = vpop.permute.xlu0 %620
        %622 = vrot.lane.b32.xlu0 %v498, 64
        %v623 = vpop.permute.xlu0 %622
        %624 = vrot.lane.b32.xlu0 %v503, 64
        %v625 = vpop.permute.xlu0 %624
        %626 = vrot.lane.b32.xlu0 %v508, 64
        %v627 = vpop.permute.xlu0 %626
        %628 = vrot.lane.b32.xlu0 %v513, 64
        %v629 = vpop.permute.xlu0 %628
        %630 = vrot.lane.b32.xlu0 %v518, 64
        %v631 = vpop.permute.xlu0 %630
        %632 = vrot.lane.b32.xlu0 %v523, 64
        %v633 = vpop.permute.xlu0 %632
        %634 = vrot.lane.b32.xlu0 %v528, 64
        %v635 = vpop.permute.xlu0 %634
        %636 = vrot.lane.b32.xlu0 %v533, 64
        %v637 = vpop.permute.xlu0 %636
        %638 = vrot.lane.b32.xlu0 %v538, 64
        %v639 = vpop.permute.xlu0 %638
        %640 = vrot.lane.b32.xlu0 %v543, 64
        %v641 = vpop.permute.xlu0 %640
        %vm642 = vcmask 523264
        %v643 = vsel %vm642, %v579, 0
        %v645 = vsel %vm642, %v581, 0
        %v647 = vsel %vm642, %v583, 0
        %v649 = vsel %vm642, %v585, 0
        %v651 = vsel %vm642, %v587, 0
        %v653 = vsel %vm642, %v589, 0
        %v655 = vsel %vm642, %v591, 0
        %v657 = vsel %vm642, %v593, 0
        %v659 = vsel %vm642, %v595, 0
        %v661 = vsel %vm642, %v597, 0
        %v663 = vsel %vm642, %v599, 0
        %v665 = vsel %vm642, %v601, 0
        %v667 = vsel %vm642, %v603, 0
        %v669 = vsel %vm642, %v605, 0
        %v671 = vsel %vm642, %v607, 0
        %v673 = vsel %vm642, %v609, 0
        %v675 = vsel %vm642, %v611, 0
        %v677 = vsel %vm642, %v613, 0
        %v679 = vsel %vm642, %v615, 0
        %v681 = vsel %vm642, %v617, 0
        %v683 = vsel %vm642, %v619, 0
        %v685 = vsel %vm642, %v621, 0
        %v687 = vsel %vm642, %v623, 0
        %v689 = vsel %vm642, %v625, 0
        %v691 = vsel %vm642, %v627, 0
        %v693 = vsel %vm642, %v629, 0
        %v695 = vsel %vm642, %v631, 0
        %v697 = vsel %vm642, %v633, 0
        %v699 = vsel %vm642, %v635, 0
        %v701 = vsel %vm642, %v637, 0
        %v703 = vsel %vm642, %v639, 0
        %v705 = vsel %vm642, %v641, 0
        %v707 = vsel %vm642, %v388, 0
        %v709 = vsel %vm642, %v393, 0
        %v711 = vsel %vm642, %v398, 0
        %v713 = vsel %vm642, %v403, 0
        %v715 = vsel %vm642, %v408, 0
        %v717 = vsel %vm642, %v413, 0
        %v719 = vsel %vm642, %v418, 0
        %v721 = vsel %vm642, %v423, 0
        %v723 = vsel %vm642, %v428, 0
        %v725 = vsel %vm642, %v433, 0
        %v727 = vsel %vm642, %v438, 0
        %v729 = vsel %vm642, %v443, 0
        %v731 = vsel %vm642, %v448, 0
        %v733 = vsel %vm642, %v453, 0
        %v735 = vsel %vm642, %v458, 0
        %v737 = vsel %vm642, %v463, 0
        %v739 = vsel %vm642, %v468, 0
        %v741 = vsel %vm642, %v473, 0
        %v743 = vsel %vm642, %v478, 0
        %v745 = vsel %vm642, %v483, 0
        %v747 = vsel %vm642, %v488, 0
        %v749 = vsel %vm642, %v493, 0
        %v751 = vsel %vm642, %v498, 0
        %v753 = vsel %vm642, %v503, 0
        %v755 = vsel %vm642, %v508, 0
        %v757 = vsel %vm642, %v513, 0
        %v759 = vsel %vm642, %v518, 0
        %v761 = vsel %vm642, %v523, 0
        %v763 = vsel %vm642, %v528, 0
        %v765 = vsel %vm642, %v533, 0
        %v767 = vsel %vm642, %v538, 0
        %v769 = vsel %vm642, %v543, 0
        %771 = vmatprep.subr.mxu0 0.0
        %772 = vmatpush1.xpose.msra.mxu0 %v707
        %773 = vmatprep.subr.mxu0 0.0
        %774 = vmatpush1.xpose.msra.mxu0 %v709
        %775 = vmatprep.subr.mxu0 0.0
        %776 = vmatpush1.xpose.msra.mxu0 %v711
        %777 = vmatprep.subr.mxu0 0.0
        %778 = vmatpush1.xpose.msra.mxu0 %v713
        %779 = vmatprep.subr.mxu0 0.0
        %780 = vmatpush1.xpose.msra.mxu0 %v715
        %781 = vmatprep.subr.mxu0 0.0
        %782 = vmatpush1.xpose.msra.mxu0 %v717
        %783 = vmatprep.subr.mxu0 0.0
        %784 = vmatpush1.xpose.msra.mxu0 %v719
        %785 = vmatprep.subr.mxu0 0.0
        %786 = vmatpush1.xpose.msra.mxu0 %v721
        %787 = vmatprep.subr.mxu0 0.0
        %788 = vmatpush1.xpose.msra.mxu0 %v723
        %789 = vmatprep.subr.mxu0 0.0
        %790 = vmatpush1.xpose.msra.mxu0 %v725
        %791 = vmatprep.subr.mxu0 0.0
        %792 = vmatpush1.xpose.msra.mxu0 %v727
        %793 = vmatprep.subr.mxu0 0.0
        %794 = vmatpush1.xpose.msra.mxu0 %v729
        %795 = vmatprep.subr.mxu0 0.0
        %796 = vmatpush1.xpose.msra.mxu0 %v731
        %797 = vmatprep.subr.mxu0 0.0
        %798 = vmatpush1.xpose.msra.mxu0 %v733
        %799 = vmatprep.subr.mxu0 0.0
        %800 = vmatpush1.xpose.msra.mxu0 %v735
        %801 = vmatprep.subr.mxu0 0.0
        %802 = vmatpush1.xpose.msra.mxu0 %v737
        %803 = vmatprep.subr.mxu0 0.0
        %804 = vmatpush1.xpose.msra.mxu0 %v739
        %805 = vmatprep.subr.mxu0 0.0
        %806 = vmatpush1.xpose.msra.mxu0 %v741
        %807 = vmatprep.subr.mxu0 0.0
        %808 = vmatpush1.xpose.msra.mxu0 %v743
        %809 = vmatprep.subr.mxu0 0.0
        %810 = vmatpush1.xpose.msra.mxu0 %v745
        %811 = vmatprep.subr.mxu0 0.0
        %812 = vmatpush1.xpose.msra.mxu0 %v747
        %813 = vmatprep.subr.mxu0 0.0
        %814 = vmatpush1.xpose.msra.mxu0 %v749
        %815 = vmatprep.subr.mxu0 0.0
        %816 = vmatpush1.xpose.msra.mxu0 %v751
        %817 = vmatprep.subr.mxu0 0.0
        %818 = vmatpush1.xpose.msra.mxu0 %v753
        %819 = vmatprep.subr.mxu0 0.0
        %820 = vmatpush1.xpose.msra.mxu0 %v755
        %821 = vmatprep.subr.mxu0 0.0
        %822 = vmatpush1.xpose.msra.mxu0 %v757
        %823 = vmatprep.subr.mxu0 0.0
        %824 = vmatpush1.xpose.msra.mxu0 %v759
        %825 = vmatprep.subr.mxu0 0.0
        %826 = vmatpush1.xpose.msra.mxu0 %v761
        %827 = vmatprep.subr.mxu0 0.0
        %828 = vmatpush1.xpose.msra.mxu0 %v763
        %829 = vmatprep.subr.mxu0 0.0
        %830 = vmatpush1.xpose.msra.mxu0 %v765
        %831 = vmatprep.subr.mxu0 0.0
        %832 = vmatpush1.xpose.msra.mxu0 %v767
        %833 = vmatprep.subr.mxu0 0.0
        %834 = vmatpush1.xpose.msra.mxu0 %v769
        %835 = vmatprep.mubr.f32.mxu0 0.0
        %836 = vmatmul.mubr.f32.gmra.mrb[0].mxu0 %v643
        %v837 = vpop.f32.mrb[0].mxu0
        %v838 = vadd.f32 0.0, %v837
        %v839 = vpop.f32.mrb[0].mxu0
        %v840 = vadd.f32 0.0, %v839
        %841 = vmatprep.mubr.f32.mxu0 0.0
        %842 = vmatmul.mubr.f32.gmra.mrb[0].mxu0 %v645
        %v843 = vpop.f32.mrb[0].mxu0
        %v844 = vadd.f32 0.0, %v843
        %v845 = vpop.f32.mrb[0].mxu0
        %v846 = vadd.f32 0.0, %v845
        %847 = vmatprep.mubr.f32.mxu0 0.0
        %848 = vmatmul.mubr.f32.gmra.mrb[0].mxu0 %v647
        %v849 = vpop.f32.mrb[0].mxu0
        %v850 = vadd.f32 0.0, %v849
        %v851 = vpop.f32.mrb[0].mxu0
        %v852 = vadd.f32 0.0, %v851
        %853 = vmatprep.mubr.f32.mxu0 0.0
        %854 = vmatmul.mubr.f32.gmra.mrb[0].mxu0 %v649
        %v855 = vpop.f32.mrb[0].mxu0
        %v856 = vadd.f32 0.0, %v855
        %v857 = vpop.f32.mrb[0].mxu0
        %v858 = vadd.f32 0.0, %v857
        %859 = vmatprep.mubr.f32.mxu0 0.0
        %860 = vmatmul.mubr.f32.gmra.mrb[0].mxu0 %v651
        %v861 = vpop.f32.mrb[0].mxu0
        %v862 = vadd.f32 0.0, %v861
        %v863 = vpop.f32.mrb[0].mxu0
        %v864 = vadd.f32 0.0, %v863
        %865 = vmatprep.mubr.f32.mxu0 0.0
        %866 = vmatmul.mubr.f32.gmra.mrb[0].mxu0 %v653
        %v867 = vpop.f32.mrb[0].mxu0
        %v868 = vadd.f32 0.0, %v867
        %v869 = vpop.f32.mrb[0].mxu0
        %v870 = vadd.f32 0.0, %v869
        %871 = vmatprep.mubr.f32.mxu0 0.0
        %872 = vmatmul.mubr.f32.gmra.mrb[0].mxu0 %v655
        %v873 = vpop.f32.mrb[0].mxu0
        %v874 = vadd.f32 0.0, %v873
        %v875 = vpop.f32.mrb[0].mxu0
        %v876 = vadd.f32 0.0, %v875
        %877 = vmatprep.mubr.f32.mxu0 0.0
        %878 = vmatmul.mubr.f32.gmra.mrb[0].mxu0 %v657
        %v879 = vpop.f32.mrb[0].mxu0
        %v880 = vadd.f32 0.0, %v879
        %v881 = vpop.f32.mrb[0].mxu0
        %v882 = vadd.f32 0.0, %v881
        %883 = vmatprep.mubr.f32.mxu0 0.0
        %884 = vmatmul.mubr.f32.gmra.mrb[0].mxu0 %v659
        %v885 = vpop.f32.mrb[0].mxu0
        %v886 = vadd.f32 0.0, %v885
        %v887 = vpop.f32.mrb[0].mxu0
        %v888 = vadd.f32 0.0, %v887
        %889 = vmatprep.mubr.f32.mxu0 0.0
        %890 = vmatmul.mubr.f32.gmra.mrb[0].mxu0 %v661
        %v891 = vpop.f32.mrb[0].mxu0
        %v892 = vadd.f32 0.0, %v891
        %v893 = vpop.f32.mrb[0].mxu0
        %v894 = vadd.f32 0.0, %v893
        %895 = vmatprep.mubr.f32.mxu0 0.0
        %896 = vmatmul.mubr.f32.gmra.mrb[0].mxu0 %v663
        %v897 = vpop.f32.mrb[0].mxu0
        %v898 = vadd.f32 0.0, %v897
        %v899 = vpop.f32.mrb[0].mxu0
        %v900 = vadd.f32 0.0, %v899
        %901 = vmatprep.mubr.f32.mxu0 0.0
        %902 = vmatmul.mubr.f32.gmra.mrb[0].mxu0 %v665
        %v903 = vpop.f32.mrb[0].mxu0
        %v904 = vadd.f32 0.0, %v903
        %v905 = vpop.f32.mrb[0].mxu0
        %v906 = vadd.f32 0.0, %v905
        %907 = vmatprep.mubr.f32.mxu0 0.0
        %908 = vmatmul.mubr.f32.gmra.mrb[0].mxu0 %v667
        %v909 = vpop.f32.mrb[0].mxu0
        %v910 = vadd.f32 0.0, %v909
        %v911 = vpop.f32.mrb[0].mxu0
        %v912 = vadd.f32 0.0, %v911
        %913 = vmatprep.mubr.f32.mxu0 0.0
        %914 = vmatmul.mubr.f32.gmra.mrb[0].mxu0 %v669
        %v915 = vpop.f32.mrb[0].mxu0
        %v916 = vadd.f32 0.0, %v915
        %v917 = vpop.f32.mrb[0].mxu0
        %v918 = vadd.f32 0.0, %v917
        %919 = vmatprep.mubr.f32.mxu0 0.0
        %920 = vmatmul.mubr.f32.gmra.mrb[0].mxu0 %v671
        %v921 = vpop.f32.mrb[0].mxu0
        %v922 = vadd.f32 0.0, %v921
        %v923 = vpop.f32.mrb[0].mxu0
        %v924 = vadd.f32 0.0, %v923
        %925 = vmatprep.mubr.f32.mxu0 0.0
        %926 = vmatmul.mubr.f32.gmra.mrb[0].mxu0 %v673
        %v927 = vpop.f32.mrb[0].mxu0
        %v928 = vadd.f32 0.0, %v927
        %v929 = vpop.f32.mrb[0].mxu0
        %v930 = vadd.f32 0.0, %v929
        %931 = vmatprep.mubr.f32.mxu0 0.0
        %932 = vmatmul.mubr.f32.gmra.mrb[0].mxu0 %v675
        %v933 = vpop.f32.mrb[0].mxu0
        %v934 = vadd.f32 0.0, %v933
        %v935 = vpop.f32.mrb[0].mxu0
        %v936 = vadd.f32 0.0, %v935
        %937 = vmatprep.mubr.f32.mxu0 0.0
        %938 = vmatmul.mubr.f32.gmra.mrb[0].mxu0 %v677
        %v939 = vpop.f32.mrb[0].mxu0
        %v940 = vadd.f32 0.0, %v939
        %v941 = vpop.f32.mrb[0].mxu0
        %v942 = vadd.f32 0.0, %v941
        %943 = vmatprep.mubr.f32.mxu0 0.0
        %944 = vmatmul.mubr.f32.gmra.mrb[0].mxu0 %v679
        %v945 = vpop.f32.mrb[0].mxu0
        %v946 = vadd.f32 0.0, %v945
        %v947 = vpop.f32.mrb[0].mxu0
        %v948 = vadd.f32 0.0, %v947
        %949 = vmatprep.mubr.f32.mxu0 0.0
        %950 = vmatmul.mubr.f32.gmra.mrb[0].mxu0 %v681
        %v951 = vpop.f32.mrb[0].mxu0
        %v952 = vadd.f32 0.0, %v951
        %v953 = vpop.f32.mrb[0].mxu0
        %v954 = vadd.f32 0.0, %v953
        %955 = vmatprep.mubr.f32.mxu0 0.0
        %956 = vmatmul.mubr.f32.gmra.mrb[0].mxu0 %v683
        %v957 = vpop.f32.mrb[0].mxu0
        %v958 = vadd.f32 0.0, %v957
        %v959 = vpop.f32.mrb[0].mxu0
        %v960 = vadd.f32 0.0, %v959
        %961 = vmatprep.mubr.f32.mxu0 0.0
        %962 = vmatmul.mubr.f32.gmra.mrb[0].mxu0 %v685
        %v963 = vpop.f32.mrb[0].mxu0
        %v964 = vadd.f32 0.0, %v963
        %v965 = vpop.f32.mrb[0].mxu0
        %v966 = vadd.f32 0.0, %v965
        %967 = vmatprep.mubr.f32.mxu0 0.0
        %968 = vmatmul.mubr.f32.gmra.mrb[0].mxu0 %v687
        %v969 = vpop.f32.mrb[0].mxu0
        %v970 = vadd.f32 0.0, %v969
        %v971 = vpop.f32.mrb[0].mxu0
        %v972 = vadd.f32 0.0, %v971
        %973 = vmatprep.mubr.f32.mxu0 0.0
        %974 = vmatmul.mubr.f32.gmra.mrb[0].mxu0 %v689
        %v975 = vpop.f32.mrb[0].mxu0
        %v976 = vadd.f32 0.0, %v975
        %v977 = vpop.f32.mrb[0].mxu0
        %v978 = vadd.f32 0.0, %v977
        %979 = vmatprep.mubr.f32.mxu0 0.0
        %980 = vmatmul.mubr.f32.gmra.mrb[0].mxu0 %v691
        %v981 = vpop.f32.mrb[0].mxu0
        %v982 = vadd.f32 0.0, %v981
        %v983 = vpop.f32.mrb[0].mxu0
        %v984 = vadd.f32 0.0, %v983
        %985 = vmatprep.mubr.f32.mxu0 0.0
        %986 = vmatmul.mubr.f32.gmra.mrb[0].mxu0 %v693
        %v987 = vpop.f32.mrb[0].mxu0
        %v988 = vadd.f32 0.0, %v987
        %v989 = vpop.f32.mrb[0].mxu0
        %v990 = vadd.f32 0.0, %v989
        %991 = vmatprep.mubr.f32.mxu0 0.0
        %992 = vmatmul.mubr.f32.gmra.mrb[0].mxu0 %v695
        %v993 = vpop.f32.mrb[0].mxu0
        %v994 = vadd.f32 0.0, %v993
        %v995 = vpop.f32.mrb[0].mxu0
        %v996 = vadd.f32 0.0, %v995
        %997 = vmatprep.mubr.f32.mxu0 0.0
        %998 = vmatmul.mubr.f32.gmra.mrb[0].mxu0 %v697
        %v999 = vpop.f32.mrb[0].mxu0
        %v1000 = vadd.f32 0.0, %v999
        %v1001 = vpop.f32.mrb[0].mxu0
        %v1002 = vadd.f32 0.0, %v1001
        %1003 = vmatprep.mubr.f32.mxu0 0.0
        %1004 = vmatmul.mubr.f32.gmra.mrb[0].mxu0 %v699
        %v1005 = vpop.f32.mrb[0].mxu0
        %v1006 = vadd.f32 0.0, %v1005
        %v1007 = vpop.f32.mrb[0].mxu0
        %v1008 = vadd.f32 0.0, %v1007
        %1009 = vmatprep.mubr.f32.mxu0 0.0
        %1010 = vmatmul.mubr.f32.gmra.mrb[0].mxu0 %v701
        %v1011 = vpop.f32.mrb[0].mxu0
        %v1012 = vadd.f32 0.0, %v1011
        %v1013 = vpop.f32.mrb[0].mxu0
        %v1014 = vadd.f32 0.0, %v1013
        %1015 = vmatprep.mubr.f32.mxu0 0.0
        %1016 = vmatmul.mubr.f32.gmra.mrb[0].mxu0 %v703
        %v1017 = vpop.f32.mrb[0].mxu0
        %v1018 = vadd.f32 0.0, %v1017
        %v1019 = vpop.f32.mrb[0].mxu0
        %v1020 = vadd.f32 0.0, %v1019
        %1021 = vmatprep.mubr.f32.mxu0 0.0
        %1022 = vmatmul.mubr.f32.gmra.mrb[0].mxu0 %v705
        %v1023 = vpop.f32.mrb[0].mxu0
        %v1024 = vadd.f32 0.0, %v1023
        %v1025 = vpop.f32.mrb[0].mxu0
        %v1026 = vadd.f32 0.0, %v1025
        %1027 = vdwg.mxu0
        %1028 = vmatprep.subr.mxu0 0.0
        %1029 = vmatpush1.xpose.msra.mxu0 %v643
        %1030 = vmatprep.subr.mxu0 0.0
        %1031 = vmatpush1.xpose.msra.mxu0 %v645
        %1032 = vmatprep.subr.mxu0 0.0
        %1033 = vmatpush1.xpose.msra.mxu0 %v647
        %1034 = vmatprep.subr.mxu0 0.0
        %1035 = vmatpush1.xpose.msra.mxu0 %v649
        %1036 = vmatprep.subr.mxu0 0.0
        %1037 = vmatpush1.xpose.msra.mxu0 %v651
        %1038 = vmatprep.subr.mxu0 0.0
        %1039 = vmatpush1.xpose.msra.mxu0 %v653
        %1040 = vmatprep.subr.mxu0 0.0
        %1041 = vmatpush1.xpose.msra.mxu0 %v655
        %1042 = vmatprep.subr.mxu0 0.0
        %1043 = vmatpush1.xpose.msra.mxu0 %v657
        %1044 = vmatprep.subr.mxu0 0.0
        %1045 = vmatpush1.xpose.msra.mxu0 %v659
        %1046 = vmatprep.subr.mxu0 0.0
        %1047 = vmatpush1.xpose.msra.mxu0 %v661
        %1048 = vmatprep.subr.mxu0 0.0
        %1049 = vmatpush1.xpose.msra.mxu0 %v663
        %1050 = vmatprep.subr.mxu0 0.0
        %1051 = vmatpush1.xpose.msra.mxu0 %v665
        %1052 = vmatprep.subr.mxu0 0.0
        %1053 = vmatpush1.xpose.msra.mxu0 %v667
        %1054 = vmatprep.subr.mxu0 0.0
        %1055 = vmatpush1.xpose.msra.mxu0 %v669
        %1056 = vmatprep.subr.mxu0 0.0
        %1057 = vmatpush1.xpose.msra.mxu0 %v671
        %1058 = vmatprep.subr.mxu0 0.0
        %1059 = vmatpush1.xpose.msra.mxu0 %v673
        %1060 = vmatprep.subr.mxu0 0.0
        %1061 = vmatpush1.xpose.msra.mxu0 %v675
        %1062 = vmatprep.subr.mxu0 0.0
        %1063 = vmatpush1.xpose.msra.mxu0 %v677
        %1064 = vmatprep.subr.mxu0 0.0
        %1065 = vmatpush1.xpose.msra.mxu0 %v679
        %1066 = vmatprep.subr.mxu0 0.0
        %1067 = vmatpush1.xpose.msra.mxu0 %v681
        %1068 = vmatprep.subr.mxu0 0.0
        %1069 = vmatpush1.xpose.msra.mxu0 %v683
        %1070 = vmatprep.subr.mxu0 0.0
        %1071 = vmatpush1.xpose.msra.mxu0 %v685
        %1072 = vmatprep.subr.mxu0 0.0
        %1073 = vmatpush1.xpose.msra.mxu0 %v687
        %1074 = vmatprep.subr.mxu0 0.0
        %1075 = vmatpush1.xpose.msra.mxu0 %v689
        %1076 = vmatprep.subr.mxu0 0.0
        %1077 = vmatpush1.xpose.msra.mxu0 %v691
        %1078 = vmatprep.subr.mxu0 0.0
        %1079 = vmatpush1.xpose.msra.mxu0 %v693
        %1080 = vmatprep.subr.mxu0 0.0
        %1081 = vmatpush1.xpose.msra.mxu0 %v695
        %1082 = vmatprep.subr.mxu0 0.0
        %1083 = vmatpush1.xpose.msra.mxu0 %v697
        %1084 = vmatprep.subr.mxu0 0.0
        %1085 = vmatpush1.xpose.msra.mxu0 %v699
        %1086 = vmatprep.subr.mxu0 0.0
        %1087 = vmatpush1.xpose.msra.mxu0 %v701
        %1088 = vmatprep.subr.mxu0 0.0
        %1089 = vmatpush1.xpose.msra.mxu0 %v703
        %1090 = vmatprep.subr.mxu0 0.0
        %1091 = vmatpush1.xpose.msra.mxu0 %v705
        %1092 = vmatprep.mubr.f32.mxu0 0.0
        %1093 = vmatmul.mubr.f32.gmra.mrb[0].mxu0 %v707
        %v1094 = vpop.f32.mrb[0].mxu0
        %v1095 = vadd.f32 0.0, %v1094
        %v1096 = vpop.f32.mrb[0].mxu0
        %v1097 = vadd.f32 0.0, %v1096
        %1098 = vmatprep.mubr.f32.mxu0 0.0
        %1099 = vmatmul.mubr.f32.gmra.mrb[0].mxu0 %v709
        %v1100 = vpop.f32.mrb[0].mxu0
        %v1101 = vadd.f32 0.0, %v1100
        %v1102 = vpop.f32.mrb[0].mxu0
        %v1103 = vadd.f32 0.0, %v1102
        %1104 = vmatprep.mubr.f32.mxu0 0.0
        %1105 = vmatmul.mubr.f32.gmra.mrb[0].mxu0 %v711
        %v1106 = vpop.f32.mrb[0].mxu0
        %v1107 = vadd.f32 0.0, %v1106
        %v1108 = vpop.f32.mrb[0].mxu0
        %v1109 = vadd.f32 0.0, %v1108
        %1110 = vmatprep.mubr.f32.mxu0 0.0
        %1111 = vmatmul.mubr.f32.gmra.mrb[0].mxu0 %v713
        %v1112 = vpop.f32.mrb[0].mxu0
        %v1113 = vadd.f32 0.0, %v1112
        %v1114 = vpop.f32.mrb[0].mxu0
        %v1115 = vadd.f32 0.0, %v1114
        %1116 = vmatprep.mubr.f32.mxu0 0.0
        %1117 = vmatmul.mubr.f32.gmra.mrb[0].mxu0 %v715
        %v1118 = vpop.f32.mrb[0].mxu0
        %v1119 = vadd.f32 0.0, %v1118
        %v1120 = vpop.f32.mrb[0].mxu0
        %v1121 = vadd.f32 0.0, %v1120
        %1122 = vmatprep.mubr.f32.mxu0 0.0
        %1123 = vmatmul.mubr.f32.gmra.mrb[0].mxu0 %v717
        %v1124 = vpop.f32.mrb[0].mxu0
        %v1125 = vadd.f32 0.0, %v1124
        %v1126 = vpop.f32.mrb[0].mxu0
        %v1127 = vadd.f32 0.0, %v1126
        %1128 = vmatprep.mubr.f32.mxu0 0.0
        %1129 = vmatmul.mubr.f32.gmra.mrb[0].mxu0 %v719
        %v1130 = vpop.f32.mrb[0].mxu0
        %v1131 = vadd.f32 0.0, %v1130
        %v1132 = vpop.f32.mrb[0].mxu0
        %v1133 = vadd.f32 0.0, %v1132
        %1134 = vmatprep.mubr.f32.mxu0 0.0
        %1135 = vmatmul.mubr.f32.gmra.mrb[0].mxu0 %v721
        %v1136 = vpop.f32.mrb[0].mxu0
        %v1137 = vadd.f32 0.0, %v1136
        %v1138 = vpop.f32.mrb[0].mxu0
        %v1139 = vadd.f32 0.0, %v1138
        %1140 = vmatprep.mubr.f32.mxu0 0.0
        %1141 = vmatmul.mubr.f32.gmra.mrb[0].mxu0 %v723
        %v1142 = vpop.f32.mrb[0].mxu0
        %v1143 = vadd.f32 0.0, %v1142
        %v1144 = vpop.f32.mrb[0].mxu0
        %v1145 = vadd.f32 0.0, %v1144
        %1146 = vmatprep.mubr.f32.mxu0 0.0
        %1147 = vmatmul.mubr.f32.gmra.mrb[0].mxu0 %v725
        %v1148 = vpop.f32.mrb[0].mxu0
        %v1149 = vadd.f32 0.0, %v1148
        %v1150 = vpop.f32.mrb[0].mxu0
        %v1151 = vadd.f32 0.0, %v1150
        %1152 = vmatprep.mubr.f32.mxu0 0.0
        %1153 = vmatmul.mubr.f32.gmra.mrb[0].mxu0 %v727
        %v1154 = vpop.f32.mrb[0].mxu0
        %v1155 = vadd.f32 0.0, %v1154
        %v1156 = vpop.f32.mrb[0].mxu0
        %v1157 = vadd.f32 0.0, %v1156
        %1158 = vmatprep.mubr.f32.mxu0 0.0
        %1159 = vmatmul.mubr.f32.gmra.mrb[0].mxu0 %v729
        %v1160 = vpop.f32.mrb[0].mxu0
        %v1161 = vadd.f32 0.0, %v1160
        %v1162 = vpop.f32.mrb[0].mxu0
        %v1163 = vadd.f32 0.0, %v1162
        %1164 = vmatprep.mubr.f32.mxu0 0.0
        %1165 = vmatmul.mubr.f32.gmra.mrb[0].mxu0 %v731
        %v1166 = vpop.f32.mrb[0].mxu0
        %v1167 = vadd.f32 0.0, %v1166
        %v1168 = vpop.f32.mrb[0].mxu0
        %v1169 = vadd.f32 0.0, %v1168
        %1170 = vmatprep.mubr.f32.mxu0 0.0
        %1171 = vmatmul.mubr.f32.gmra.mrb[0].mxu0 %v733
        %v1172 = vpop.f32.mrb[0].mxu0
        %v1173 = vadd.f32 0.0, %v1172
        %v1174 = vpop.f32.mrb[0].mxu0
        %v1175 = vadd.f32 0.0, %v1174
        %1176 = vmatprep.mubr.f32.mxu0 0.0
        %1177 = vmatmul.mubr.f32.gmra.mrb[0].mxu0 %v735
        %v1178 = vpop.f32.mrb[0].mxu0
        %v1179 = vadd.f32 0.0, %v1178
        %v1180 = vpop.f32.mrb[0].mxu0
        %v1181 = vadd.f32 0.0, %v1180
        %1182 = vmatprep.mubr.f32.mxu0 0.0
        %1183 = vmatmul.mubr.f32.gmra.mrb[0].mxu0 %v737
        %v1184 = vpop.f32.mrb[0].mxu0
        %v1185 = vadd.f32 0.0, %v1184
        %v1186 = vpop.f32.mrb[0].mxu0
        %v1187 = vadd.f32 0.0, %v1186
        %1188 = vmatprep.mubr.f32.mxu0 0.0
        %1189 = vmatmul.mubr.f32.gmra.mrb[0].mxu0 %v739
        %v1190 = vpop.f32.mrb[0].mxu0
        %v1191 = vadd.f32 0.0, %v1190
        %v1192 = vpop.f32.mrb[0].mxu0
        %v1193 = vadd.f32 0.0, %v1192
        %1194 = vmatprep.mubr.f32.mxu0 0.0
        %1195 = vmatmul.mubr.f32.gmra.mrb[0].mxu0 %v741
        %v1196 = vpop.f32.mrb[0].mxu0
        %v1197 = vadd.f32 0.0, %v1196
        %v1198 = vpop.f32.mrb[0].mxu0
        %v1199 = vadd.f32 0.0, %v1198
        %1200 = vmatprep.mubr.f32.mxu0 0.0
        %1201 = vmatmul.mubr.f32.gmra.mrb[0].mxu0 %v743
        %v1202 = vpop.f32.mrb[0].mxu0
        %v1203 = vadd.f32 0.0, %v1202
        %v1204 = vpop.f32.mrb[0].mxu0
        %v1205 = vadd.f32 0.0, %v1204
        %1206 = vmatprep.mubr.f32.mxu0 0.0
        %1207 = vmatmul.mubr.f32.gmra.mrb[0].mxu0 %v745
        %v1208 = vpop.f32.mrb[0].mxu0
        %v1209 = vadd.f32 0.0, %v1208
        %v1210 = vpop.f32.mrb[0].mxu0
        %v1211 = vadd.f32 0.0, %v1210
        %1212 = vmatprep.mubr.f32.mxu0 0.0
        %1213 = vmatmul.mubr.f32.gmra.mrb[0].mxu0 %v747
        %v1214 = vpop.f32.mrb[0].mxu0
        %v1215 = vadd.f32 0.0, %v1214
        %v1216 = vpop.f32.mrb[0].mxu0
        %v1217 = vadd.f32 0.0, %v1216
        %1218 = vmatprep.mubr.f32.mxu0 0.0
        %1219 = vmatmul.mubr.f32.gmra.mrb[0].mxu0 %v749
        %v1220 = vpop.f32.mrb[0].mxu0
        %v1221 = vadd.f32 0.0, %v1220
        %v1222 = vpop.f32.mrb[0].mxu0
        %v1223 = vadd.f32 0.0, %v1222
        %1224 = vmatprep.mubr.f32.mxu0 0.0
        %1225 = vmatmul.mubr.f32.gmra.mrb[0].mxu0 %v751
        %v1226 = vpop.f32.mrb[0].mxu0
        %v1227 = vadd.f32 0.0, %v1226
        %v1228 = vpop.f32.mrb[0].mxu0
        %v1229 = vadd.f32 0.0, %v1228
        %1230 = vmatprep.mubr.f32.mxu0 0.0
        %1231 = vmatmul.mubr.f32.gmra.mrb[0].mxu0 %v753
        %v1232 = vpop.f32.mrb[0].mxu0
        %v1233 = vadd.f32 0.0, %v1232
        %v1234 = vpop.f32.mrb[0].mxu0
        %v1235 = vadd.f32 0.0, %v1234
        %1236 = vmatprep.mubr.f32.mxu0 0.0
        %1237 = vmatmul.mubr.f32.gmra.mrb[0].mxu0 %v755
        %v1238 = vpop.f32.mrb[0].mxu0
        %v1239 = vadd.f32 0.0, %v1238
        %v1240 = vpop.f32.mrb[0].mxu0
        %v1241 = vadd.f32 0.0, %v1240
        %1242 = vmatprep.mubr.f32.mxu0 0.0
        %1243 = vmatmul.mubr.f32.gmra.mrb[0].mxu0 %v757
        %v1244 = vpop.f32.mrb[0].mxu0
        %v1245 = vadd.f32 0.0, %v1244
        %v1246 = vpop.f32.mrb[0].mxu0
        %v1247 = vadd.f32 0.0, %v1246
        %1248 = vmatprep.mubr.f32.mxu0 0.0
        %1249 = vmatmul.mubr.f32.gmra.mrb[0].mxu0 %v759
        %v1250 = vpop.f32.mrb[0].mxu0
        %v1251 = vadd.f32 0.0, %v1250
        %v1252 = vpop.f32.mrb[0].mxu0
        %v1253 = vadd.f32 0.0, %v1252
        %1254 = vmatprep.mubr.f32.mxu0 0.0
        %1255 = vmatmul.mubr.f32.gmra.mrb[0].mxu0 %v761
        %v1256 = vpop.f32.mrb[0].mxu0
        %v1257 = vadd.f32 0.0, %v1256
        %v1258 = vpop.f32.mrb[0].mxu0
        %v1259 = vadd.f32 0.0, %v1258
        %1260 = vmatprep.mubr.f32.mxu0 0.0
        %1261 = vmatmul.mubr.f32.gmra.mrb[0].mxu0 %v763
        %v1262 = vpop.f32.mrb[0].mxu0
        %v1263 = vadd.f32 0.0, %v1262
        %v1264 = vpop.f32.mrb[0].mxu0
        %v1265 = vadd.f32 0.0, %v1264
        %1266 = vmatprep.mubr.f32.mxu0 0.0
        %1267 = vmatmul.mubr.f32.gmra.mrb[0].mxu0 %v765
        %v1268 = vpop.f32.mrb[0].mxu0
        %v1269 = vadd.f32 0.0, %v1268
        %v1270 = vpop.f32.mrb[0].mxu0
        %v1271 = vadd.f32 0.0, %v1270
        %1272 = vmatprep.mubr.f32.mxu0 0.0
        %1273 = vmatmul.mubr.f32.gmra.mrb[0].mxu0 %v767
        %v1274 = vpop.f32.mrb[0].mxu0
        %v1275 = vadd.f32 0.0, %v1274
        %v1276 = vpop.f32.mrb[0].mxu0
        %v1277 = vadd.f32 0.0, %v1276
        %1278 = vmatprep.mubr.f32.mxu0 0.0
        %1279 = vmatmul.mubr.f32.gmra.mrb[0].mxu0 %v769
        %v1280 = vpop.f32.mrb[0].mxu0
        %v1281 = vadd.f32 0.0, %v1280
        %v1282 = vpop.f32.mrb[0].mxu0
        %v1283 = vadd.f32 0.0, %v1282
        %1284 = vdwg.mxu0
        %v1285 = vlaneseq
        %v1286 = vand.u32 %v1285, 127
        %vm1287 = vcmp.lt.s32.totalorder %v1286, 64
        %v1288 = vmax.f32 %v838, %v840
        %1289 = vmax.xlane.f32.xlu0 %v1288
        %v1290 = vpop.xlane.xlu0 %1289
        %v1291 = vmax.f32 %v844, %v846
        %1292 = vmax.xlane.f32.xlu0 %v1291
        %v1293 = vpop.xlane.xlu0 %1292
        %v1294 = vmax.f32 %v850, %v852
        %1295 = vmax.xlane.f32.xlu0 %v1294
        %v1296 = vpop.xlane.xlu0 %1295
        %v1297 = vmax.f32 %v856, %v858
        %1298 = vmax.xlane.f32.xlu0 %v1297
        %v1299 = vpop.xlane.xlu0 %1298
        %v1300 = vmax.f32 %v862, %v864
        %1301 = vmax.xlane.f32.xlu0 %v1300
        %v1302 = vpop.xlane.xlu0 %1301
        %v1303 = vmax.f32 %v868, %v870
        %1304 = vmax.xlane.f32.xlu0 %v1303
        %v1305 = vpop.xlane.xlu0 %1304
        %v1306 = vmax.f32 %v874, %v876
        %1307 = vmax.xlane.f32.xlu0 %v1306
        %v1308 = vpop.xlane.xlu0 %1307
        %v1309 = vmax.f32 %v880, %v882
        %1310 = vmax.xlane.f32.xlu0 %v1309
        %v1311 = vpop.xlane.xlu0 %1310
        %v1312 = vmax.f32 %v886, %v888
        %1313 = vmax.xlane.f32.xlu0 %v1312
        %v1314 = vpop.xlane.xlu0 %1313
        %v1315 = vmax.f32 %v892, %v894
        %1316 = vmax.xlane.f32.xlu0 %v1315
        %v1317 = vpop.xlane.xlu0 %1316
        %v1318 = vmax.f32 %v898, %v900
        %1319 = vmax.xlane.f32.xlu0 %v1318
        %v1320 = vpop.xlane.xlu0 %1319
        %v1321 = vmax.f32 %v904, %v906
        %1322 = vmax.xlane.f32.xlu0 %v1321
        %v1323 = vpop.xlane.xlu0 %1322
        %v1324 = vmax.f32 %v910, %v912
        %1325 = vmax.xlane.f32.xlu0 %v1324
        %v1326 = vpop.xlane.xlu0 %1325
        %v1327 = vmax.f32 %v916, %v918
        %1328 = vmax.xlane.f32.xlu0 %v1327
        %v1329 = vpop.xlane.xlu0 %1328
        %v1330 = vmax.f32 %v922, %v924
        %1331 = vmax.xlane.f32.xlu0 %v1330
        %v1332 = vpop.xlane.xlu0 %1331
        %v1333 = vmax.f32 %v928, %v930
        %1334 = vmax.xlane.f32.xlu0 %v1333
        %v1335 = vpop.xlane.xlu0 %1334
        %v1336 = vmax.f32 %v934, %v936
        %1337 = vmax.xlane.f32.xlu0 %v1336
        %v1338 = vpop.xlane.xlu0 %1337
        %v1339 = vmax.f32 %v940, %v942
        %1340 = vmax.xlane.f32.xlu0 %v1339
        %v1341 = vpop.xlane.xlu0 %1340
        %v1342 = vmax.f32 %v946, %v948
        %1343 = vmax.xlane.f32.xlu0 %v1342
        %v1344 = vpop.xlane.xlu0 %1343
        %v1345 = vmax.f32 %v952, %v954
        %1346 = vmax.xlane.f32.xlu0 %v1345
        %v1347 = vpop.xlane.xlu0 %1346
        %v1348 = vmax.f32 %v958, %v960
        %1349 = vmax.xlane.f32.xlu0 %v1348
        %v1350 = vpop.xlane.xlu0 %1349
        %v1351 = vmax.f32 %v964, %v966
        %1352 = vmax.xlane.f32.xlu0 %v1351
        %v1353 = vpop.xlane.xlu0 %1352
        %v1354 = vmax.f32 %v970, %v972
        %1355 = vmax.xlane.f32.xlu0 %v1354
        %v1356 = vpop.xlane.xlu0 %1355
        %v1357 = vmax.f32 %v976, %v978
        %1358 = vmax.xlane.f32.xlu0 %v1357
        %v1359 = vpop.xlane.xlu0 %1358
        %v1360 = vmax.f32 %v982, %v984
        %1361 = vmax.xlane.f32.xlu0 %v1360
        %v1362 = vpop.xlane.xlu0 %1361
        %v1363 = vmax.f32 %v988, %v990
        %1364 = vmax.xlane.f32.xlu0 %v1363
        %v1365 = vpop.xlane.xlu0 %1364
        %v1366 = vmax.f32 %v994, %v996
        %1367 = vmax.xlane.f32.xlu0 %v1366
        %v1368 = vpop.xlane.xlu0 %1367
        %v1369 = vmax.f32 %v1000, %v1002
        %1370 = vmax.xlane.f32.xlu0 %v1369
        %v1371 = vpop.xlane.xlu0 %1370
        %v1372 = vmax.f32 %v1006, %v1008
        %1373 = vmax.xlane.f32.xlu0 %v1372
        %v1374 = vpop.xlane.xlu0 %1373
        %v1375 = vmax.f32 %v1012, %v1014
        %1376 = vmax.xlane.f32.xlu0 %v1375
        %v1377 = vpop.xlane.xlu0 %1376
        %v1378 = vmax.f32 %v1018, %v1020
        %1379 = vmax.xlane.f32.xlu0 %v1378
        %v1380 = vpop.xlane.xlu0 %1379
        %v1381 = vmax.f32 %v1024, %v1026
        %1382 = vmax.xlane.f32.xlu0 %v1381
        %v1383 = vpop.xlane.xlu0 %1382
        %v1384 = vsub.f32 %v838, %v1290
        %v1385 = vsub.f32 %v840, %v1290
        %v1386 = vsub.f32 %v844, %v1293
        %v1387 = vsub.f32 %v846, %v1293
        %v1388 = vsub.f32 %v850, %v1296
        %v1389 = vsub.f32 %v852, %v1296
        %v1390 = vsub.f32 %v856, %v1299
        %v1391 = vsub.f32 %v858, %v1299
        %v1392 = vsub.f32 %v862, %v1302
        %v1393 = vsub.f32 %v864, %v1302
        %v1394 = vsub.f32 %v868, %v1305
        %v1395 = vsub.f32 %v870, %v1305
        %v1396 = vsub.f32 %v874, %v1308
        %v1397 = vsub.f32 %v876, %v1308
        %v1398 = vsub.f32 %v880, %v1311
        %v1399 = vsub.f32 %v882, %v1311
        %v1400 = vsub.f32 %v886, %v1314
        %v1401 = vsub.f32 %v888, %v1314
        %v1402 = vsub.f32 %v892, %v1317
        %v1403 = vsub.f32 %v894, %v1317
        %v1404 = vsub.f32 %v898, %v1320
        %v1405 = vsub.f32 %v900, %v1320
        %v1406 = vsub.f32 %v904, %v1323
        %v1407 = vsub.f32 %v906, %v1323
        %v1408 = vsub.f32 %v910, %v1326
        %v1409 = vsub.f32 %v912, %v1326
        %v1410 = vsub.f32 %v916, %v1329
        %v1411 = vsub.f32 %v918, %v1329
        %v1412 = vsub.f32 %v922, %v1332
        %v1413 = vsub.f32 %v924, %v1332
        %v1414 = vsub.f32 %v928, %v1335
        %v1415 = vsub.f32 %v930, %v1335
        %v1416 = vsub.f32 %v934, %v1338
        %v1417 = vsub.f32 %v936, %v1338
        %v1418 = vsub.f32 %v940, %v1341
        %v1419 = vsub.f32 %v942, %v1341
        %v1420 = vsub.f32 %v946, %v1344
        %v1421 = vsub.f32 %v948, %v1344
        %v1422 = vsub.f32 %v952, %v1347
        %v1423 = vsub.f32 %v954, %v1347
        %v1424 = vsub.f32 %v958, %v1350
        %v1425 = vsub.f32 %v960, %v1350
        %v1426 = vsub.f32 %v964, %v1353
        %v1427 = vsub.f32 %v966, %v1353
        %v1428 = vsub.f32 %v970, %v1356
        %v1429 = vsub.f32 %v972, %v1356
        %v1430 = vsub.f32 %v976, %v1359
        %v1431 = vsub.f32 %v978, %v1359
        %v1432 = vsub.f32 %v982, %v1362
        %v1433 = vsub.f32 %v984, %v1362
        %v1434 = vsub.f32 %v988, %v1365
        %v1435 = vsub.f32 %v990, %v1365
        %v1436 = vsub.f32 %v994, %v1368
        %v1437 = vsub.f32 %v996, %v1368
        %v1438 = vsub.f32 %v1000, %v1371
        %v1439 = vsub.f32 %v1002, %v1371
        %v1440 = vsub.f32 %v1006, %v1374
        %v1441 = vsub.f32 %v1008, %v1374
        %v1442 = vsub.f32 %v1012, %v1377
        %v1443 = vsub.f32 %v1014, %v1377
        %v1444 = vsub.f32 %v1018, %v1380
        %v1445 = vsub.f32 %v1020, %v1380
        %v1446 = vsub.f32 %v1024, %v1383
        %v1447 = vsub.f32 %v1026, %v1383
        %v1448 = vmul.f32 %v1384, 1.442695
        %v1449 = vpow.pop %v1448
        %v1450 = vmul.f32 %v1385, 1.442695
        %v1451 = vpow.pop %v1450
        %v1452 = vmul.f32 %v1386, 1.442695
        %v1453 = vpow.pop %v1452
        %v1454 = vmul.f32 %v1387, 1.442695
        %v1455 = vpow.pop %v1454
        %v1456 = vmul.f32 %v1388, 1.442695
        %v1457 = vpow.pop %v1456
        %v1458 = vmul.f32 %v1389, 1.442695
        %v1459 = vpow.pop %v1458
        %v1460 = vmul.f32 %v1390, 1.442695
        %v1461 = vpow.pop %v1460
        %v1462 = vmul.f32 %v1391, 1.442695
        %v1463 = vpow.pop %v1462
        %v1464 = vmul.f32 %v1392, 1.442695
        %v1465 = vpow.pop %v1464
        %v1466 = vmul.f32 %v1393, 1.442695
        %v1467 = vpow.pop %v1466
        %v1468 = vmul.f32 %v1394, 1.442695
        %v1469 = vpow.pop %v1468
        %v1470 = vmul.f32 %v1395, 1.442695
        %v1471 = vpow.pop %v1470
        %v1472 = vmul.f32 %v1396, 1.442695
        %v1473 = vpow.pop %v1472
        %v1474 = vmul.f32 %v1397, 1.442695
        %v1475 = vpow.pop %v1474
        %v1476 = vmul.f32 %v1398, 1.442695
        %v1477 = vpow.pop %v1476
        %v1478 = vmul.f32 %v1399, 1.442695
        %v1479 = vpow.pop %v1478
        %v1480 = vmul.f32 %v1400, 1.442695
        %v1481 = vpow.pop %v1480
        %v1482 = vmul.f32 %v1401, 1.442695
        %v1483 = vpow.pop %v1482
        %v1484 = vmul.f32 %v1402, 1.442695
        %v1485 = vpow.pop %v1484
        %v1486 = vmul.f32 %v1403, 1.442695
        %v1487 = vpow.pop %v1486
        %v1488 = vmul.f32 %v1404, 1.442695
        %v1489 = vpow.pop %v1488
        %v1490 = vmul.f32 %v1405, 1.442695
        %v1491 = vpow.pop %v1490
        %v1492 = vmul.f32 %v1406, 1.442695
        %v1493 = vpow.pop %v1492
        %v1494 = vmul.f32 %v1407, 1.442695
        %v1495 = vpow.pop %v1494
        %v1496 = vmul.f32 %v1408, 1.442695
        %v1497 = vpow.pop %v1496
        %v1498 = vmul.f32 %v1409, 1.442695
        %v1499 = vpow.pop %v1498
        %v1500 = vmul.f32 %v1410, 1.442695
        %v1501 = vpow.pop %v1500
        %v1502 = vmul.f32 %v1411, 1.442695
        %v1503 = vpow.pop %v1502
        %v1504 = vmul.f32 %v1412, 1.442695
        %v1505 = vpow.pop %v1504
        %v1506 = vmul.f32 %v1413, 1.442695
        %v1507 = vpow.pop %v1506
        %v1508 = vmul.f32 %v1414, 1.442695
        %v1509 = vpow.pop %v1508
        %v1510 = vmul.f32 %v1415, 1.442695
        %v1511 = vpow.pop %v1510
        %v1512 = vmul.f32 %v1416, 1.442695
        %v1513 = vpow.pop %v1512
        %v1514 = vmul.f32 %v1417, 1.442695
        %v1515 = vpow.pop %v1514
        %v1516 = vmul.f32 %v1418, 1.442695
        %v1517 = vpow.pop %v1516
        %v1518 = vmul.f32 %v1419, 1.442695
        %v1519 = vpow.pop %v1518
        %v1520 = vmul.f32 %v1420, 1.442695
        %v1521 = vpow.pop %v1520
        %v1522 = vmul.f32 %v1421, 1.442695
        %v1523 = vpow.pop %v1522
        %v1524 = vmul.f32 %v1422, 1.442695
        %v1525 = vpow.pop %v1524
        %v1526 = vmul.f32 %v1423, 1.442695
        %v1527 = vpow.pop %v1526
        %v1528 = vmul.f32 %v1424, 1.442695
        %v1529 = vpow.pop %v1528
        %v1530 = vmul.f32 %v1425, 1.442695
        %v1531 = vpow.pop %v1530
        %v1532 = vmul.f32 %v1426, 1.442695
        %v1533 = vpow.pop %v1532
        %v1534 = vmul.f32 %v1427, 1.442695
        %v1535 = vpow.pop %v1534
        %v1536 = vmul.f32 %v1428, 1.442695
        %v1537 = vpow.pop %v1536
        %v1538 = vmul.f32 %v1429, 1.442695
        %v1539 = vpow.pop %v1538
        %v1540 = vmul.f32 %v1430, 1.442695
        %v1541 = vpow.pop %v1540
        %v1542 = vmul.f32 %v1431, 1.442695
        %v1543 = vpow.pop %v1542
        %v1544 = vmul.f32 %v1432, 1.442695
        %v1545 = vpow.pop %v1544
        %v1546 = vmul.f32 %v1433, 1.442695
        %v1547 = vpow.pop %v1546
        %v1548 = vmul.f32 %v1434, 1.442695
        %v1549 = vpow.pop %v1548
        %v1550 = vmul.f32 %v1435, 1.442695
        %v1551 = vpow.pop %v1550
        %v1552 = vmul.f32 %v1436, 1.442695
        %v1553 = vpow.pop %v1552
        %v1554 = vmul.f32 %v1437, 1.442695
        %v1555 = vpow.pop %v1554
        %v1556 = vmul.f32 %v1438, 1.442695
        %v1557 = vpow.pop %v1556
        %v1558 = vmul.f32 %v1439, 1.442695
        %v1559 = vpow.pop %v1558
        %v1560 = vmul.f32 %v1440, 1.442695
        %v1561 = vpow.pop %v1560
        %v1562 = vmul.f32 %v1441, 1.442695
        %v1563 = vpow.pop %v1562
        %v1564 = vmul.f32 %v1442, 1.442695
        %v1565 = vpow.pop %v1564
        %v1566 = vmul.f32 %v1443, 1.442695
        %v1567 = vpow.pop %v1566
        %v1568 = vmul.f32 %v1444, 1.442695
        %v1569 = vpow.pop %v1568
        %v1570 = vmul.f32 %v1445, 1.442695
        %v1571 = vpow.pop %v1570
        %v1572 = vmul.f32 %v1446, 1.442695
        %v1573 = vpow.pop %v1572
        %v1574 = vmul.f32 %v1447, 1.442695
        %v1575 = vpow.pop %v1574
        %v1576 = vadd.f32 %v1449, %v1451
        %1577 = vadd.xlane.f32.xlu0 %v1576
        %v1578 = vpop.xlane.xlu0 %1577
        %v1579 = vadd.f32 %v1453, %v1455
        %1580 = vadd.xlane.f32.xlu0 %v1579
        %v1581 = vpop.xlane.xlu0 %1580
        %v1582 = vadd.f32 %v1457, %v1459
        %1583 = vadd.xlane.f32.xlu0 %v1582
        %v1584 = vpop.xlane.xlu0 %1583
        %v1585 = vadd.f32 %v1461, %v1463
        %1586 = vadd.xlane.f32.xlu0 %v1585
        %v1587 = vpop.xlane.xlu0 %1586
        %v1588 = vadd.f32 %v1465, %v1467
        %1589 = vadd.xlane.f32.xlu0 %v1588
        %v1590 = vpop.xlane.xlu0 %1589
        %v1591 = vadd.f32 %v1469, %v1471
        %1592 = vadd.xlane.f32.xlu0 %v1591
        %v1593 = vpop.xlane.xlu0 %1592
        %v1594 = vadd.f32 %v1473, %v1475
        %1595 = vadd.xlane.f32.xlu0 %v1594
        %v1596 = vpop.xlane.xlu0 %1595
        %v1597 = vadd.f32 %v1477, %v1479
        %1598 = vadd.xlane.f32.xlu0 %v1597
        %v1599 = vpop.xlane.xlu0 %1598
        %v1600 = vadd.f32 %v1481, %v1483
        %1601 = vadd.xlane.f32.xlu0 %v1600
        %v1602 = vpop.xlane.xlu0 %1601
        %v1603 = vadd.f32 %v1485, %v1487
        %1604 = vadd.xlane.f32.xlu0 %v1603
        %v1605 = vpop.xlane.xlu0 %1604
        %v1606 = vadd.f32 %v1489, %v1491
        %1607 = vadd.xlane.f32.xlu0 %v1606
        %v1608 = vpop.xlane.xlu0 %1607
        %v1609 = vadd.f32 %v1493, %v1495
        %1610 = vadd.xlane.f32.xlu0 %v1609
        %v1611 = vpop.xlane.xlu0 %1610
        %v1612 = vadd.f32 %v1497, %v1499
        %1613 = vadd.xlane.f32.xlu0 %v1612
        %v1614 = vpop.xlane.xlu0 %1613
        %v1615 = vadd.f32 %v1501, %v1503
        %1616 = vadd.xlane.f32.xlu0 %v1615
        %v1617 = vpop.xlane.xlu0 %1616
        %v1618 = vadd.f32 %v1505, %v1507
        %1619 = vadd.xlane.f32.xlu0 %v1618
        %v1620 = vpop.xlane.xlu0 %1619
        %v1621 = vadd.f32 %v1509, %v1511
        %1622 = vadd.xlane.f32.xlu0 %v1621
        %v1623 = vpop.xlane.xlu0 %1622
        %v1624 = vadd.f32 %v1513, %v1515
        %1625 = vadd.xlane.f32.xlu0 %v1624
        %v1626 = vpop.xlane.xlu0 %1625
        %v1627 = vadd.f32 %v1517, %v1519
        %1628 = vadd.xlane.f32.xlu0 %v1627
        %v1629 = vpop.xlane.xlu0 %1628
        %v1630 = vadd.f32 %v1521, %v1523
        %1631 = vadd.xlane.f32.xlu0 %v1630
        %v1632 = vpop.xlane.xlu0 %1631
        %v1633 = vadd.f32 %v1525, %v1527
        %1634 = vadd.xlane.f32.xlu0 %v1633
        %v1635 = vpop.xlane.xlu0 %1634
        %v1636 = vadd.f32 %v1529, %v1531
        %1637 = vadd.xlane.f32.xlu0 %v1636
        %v1638 = vpop.xlane.xlu0 %1637
        %v1639 = vadd.f32 %v1533, %v1535
        %1640 = vadd.xlane.f32.xlu0 %v1639
        %v1641 = vpop.xlane.xlu0 %1640
        %v1642 = vadd.f32 %v1537, %v1539
        %1643 = vadd.xlane.f32.xlu0 %v1642
        %v1644 = vpop.xlane.xlu0 %1643
        %v1645 = vadd.f32 %v1541, %v1543
        %1646 = vadd.xlane.f32.xlu0 %v1645
        %v1647 = vpop.xlane.xlu0 %1646
        %v1648 = vadd.f32 %v1545, %v1547
        %1649 = vadd.xlane.f32.xlu0 %v1648
        %v1650 = vpop.xlane.xlu0 %1649
        %v1651 = vadd.f32 %v1549, %v1551
        %1652 = vadd.xlane.f32.xlu0 %v1651
        %v1653 = vpop.xlane.xlu0 %1652
        %v1654 = vadd.f32 %v1553, %v1555
        %1655 = vadd.xlane.f32.xlu0 %v1654
        %v1656 = vpop.xlane.xlu0 %1655
        %v1657 = vadd.f32 %v1557, %v1559
        %1658 = vadd.xlane.f32.xlu0 %v1657
        %v1659 = vpop.xlane.xlu0 %1658
        %v1660 = vadd.f32 %v1561, %v1563
        %1661 = vadd.xlane.f32.xlu0 %v1660
        %v1662 = vpop.xlane.xlu0 %1661
        %v1663 = vadd.f32 %v1565, %v1567
        %1664 = vadd.xlane.f32.xlu0 %v1663
        %v1665 = vpop.xlane.xlu0 %1664
        %v1666 = vadd.f32 %v1569, %v1571
        %1667 = vadd.xlane.f32.xlu0 %v1666
        %v1668 = vpop.xlane.xlu0 %1667
        %v1669 = vadd.f32 %v1573, %v1575
        %1670 = vadd.xlane.f32.xlu0 %v1669
        %v1671 = vpop.xlane.xlu0 %1670
        %v1672 = vsel %vm1287, 1, 0
        %vm1673 = vcmp.eq.s32.totalorder %v1672, 1
        %v1674 = vsel %vm1673, %v388, 0.0
        %v1675 = vsel %vm1673, %v393, 0.0
        %v1676 = vsel %vm1673, %v398, 0.0
        %v1677 = vsel %vm1673, %v403, 0.0
        %v1678 = vsel %vm1673, %v408, 0.0
        %v1679 = vsel %vm1673, %v413, 0.0
        %v1680 = vsel %vm1673, %v418, 0.0
        %v1681 = vsel %vm1673, %v423, 0.0
        %v1682 = vsel %vm1673, %v428, 0.0
        %v1683 = vsel %vm1673, %v433, 0.0
        %v1684 = vsel %vm1673, %v438, 0.0
        %v1685 = vsel %vm1673, %v443, 0.0
        %v1686 = vsel %vm1673, %v448, 0.0
        %v1687 = vsel %vm1673, %v453, 0.0
        %v1688 = vsel %vm1673, %v458, 0.0
        %v1689 = vsel %vm1673, %v463, 0.0
        %v1690 = vsel %vm1673, %v468, 0.0
        %v1691 = vsel %vm1673, %v473, 0.0
        %v1692 = vsel %vm1673, %v478, 0.0
        %v1693 = vsel %vm1673, %v483, 0.0
        %v1694 = vsel %vm1673, %v488, 0.0
        %v1695 = vsel %vm1673, %v493, 0.0
        %v1696 = vsel %vm1673, %v498, 0.0
        %v1697 = vsel %vm1673, %v503, 0.0
        %v1698 = vsel %vm1673, %v508, 0.0
        %v1699 = vsel %vm1673, %v513, 0.0
        %v1700 = vsel %vm1673, %v518, 0.0
        %v1701 = vsel %vm1673, %v523, 0.0
        %v1702 = vsel %vm1673, %v528, 0.0
        %v1703 = vsel %vm1673, %v533, 0.0
        %v1704 = vsel %vm1673, %v538, 0.0
        %v1705 = vsel %vm1673, %v543, 0.0
        %v1706 = vpack.c.bf16 %v1675, %v1674
        %v1707 = vpack.c.bf16 %v1677, %v1676
        %v1708 = vpack.c.bf16 %v1679, %v1678
        %v1709 = vpack.c.bf16 %v1681, %v1680
        %v1710 = vpack.c.bf16 %v1683, %v1682
        %v1711 = vpack.c.bf16 %v1685, %v1684
        %v1712 = vpack.c.bf16 %v1687, %v1686
        %v1713 = vpack.c.bf16 %v1689, %v1688
        %v1714 = vpack.c.bf16 %v1691, %v1690
        %v1715 = vpack.c.bf16 %v1693, %v1692
        %v1716 = vpack.c.bf16 %v1695, %v1694
        %v1717 = vpack.c.bf16 %v1697, %v1696
        %v1718 = vpack.c.bf16 %v1699, %v1698
        %v1719 = vpack.c.bf16 %v1701, %v1700
        %v1720 = vpack.c.bf16 %v1703, %v1702
        %v1721 = vpack.c.bf16 %v1705, %v1704
        %v1722 = vpack.c.bf16 %v1453, %v1449
        %v1723 = vpack.c.bf16 %v1455, %v1451
        %v1724 = vpack.c.bf16 %v1461, %v1457
        %v1725 = vpack.c.bf16 %v1463, %v1459
        %v1726 = vpack.c.bf16 %v1469, %v1465
        %v1727 = vpack.c.bf16 %v1471, %v1467
        %v1728 = vpack.c.bf16 %v1477, %v1473
        %v1729 = vpack.c.bf16 %v1479, %v1475
        %v1730 = vpack.c.bf16 %v1485, %v1481
        %v1731 = vpack.c.bf16 %v1487, %v1483
        %v1732 = vpack.c.bf16 %v1493, %v1489
        %v1733 = vpack.c.bf16 %v1495, %v1491
        %v1734 = vpack.c.bf16 %v1501, %v1497
        %v1735 = vpack.c.bf16 %v1503, %v1499
        %v1736 = vpack.c.bf16 %v1509, %v1505
        %v1737 = vpack.c.bf16 %v1511, %v1507
        %v1738 = vpack.c.bf16 %v1517, %v1513
        %v1739 = vpack.c.bf16 %v1519, %v1515
        %v1740 = vpack.c.bf16 %v1525, %v1521
        %v1741 = vpack.c.bf16 %v1527, %v1523
        %v1742 = vpack.c.bf16 %v1533, %v1529
        %v1743 = vpack.c.bf16 %v1535, %v1531
        %v1744 = vpack.c.bf16 %v1541, %v1537
        %v1745 = vpack.c.bf16 %v1543, %v1539
        %v1746 = vpack.c.bf16 %v1549, %v1545
        %v1747 = vpack.c.bf16 %v1551, %v1547
        %v1748 = vpack.c.bf16 %v1557, %v1553
        %v1749 = vpack.c.bf16 %v1559, %v1555
        %v1750 = vpack.c.bf16 %v1565, %v1561
        %v1751 = vpack.c.bf16 %v1567, %v1563
        %v1752 = vpack.c.bf16 %v1573, %v1569
        %v1753 = vpack.c.bf16 %v1575, %v1571
        %1754 = vmatprep.subr.bf16.mxu0 0
        %1755 = vmatpush1.bf16.msra.mxu0 %v1706
        %1756 = vmatprep.subr.bf16.mxu0 0
        %1757 = vmatpush1.bf16.msra.mxu0 %v1707
        %1758 = vmatprep.subr.bf16.mxu0 0
        %1759 = vmatpush1.bf16.msra.mxu0 %v1708
        %1760 = vmatprep.subr.bf16.mxu0 0
        %1761 = vmatpush1.bf16.msra.mxu0 %v1709
        %1762 = vmatprep.subr.bf16.mxu0 0
        %1763 = vmatpush1.bf16.msra.mxu0 %v1710
        %1764 = vmatprep.subr.bf16.mxu0 0
        %1765 = vmatpush1.bf16.msra.mxu0 %v1711
        %1766 = vmatprep.subr.bf16.mxu0 0
        %1767 = vmatpush1.bf16.msra.mxu0 %v1712
        %1768 = vmatprep.subr.bf16.mxu0 0
        %1769 = vmatpush1.bf16.msra.mxu0 %v1713
        %1770 = vmatprep.subr.bf16.mxu0 0
        %1771 = vmatpush1.bf16.msra.mxu0 %v1714
        %1772 = vmatprep.subr.bf16.mxu0 0
        %1773 = vmatpush1.bf16.msra.mxu0 %v1715
        %1774 = vmatprep.subr.bf16.mxu0 0
        %1775 = vmatpush1.bf16.msra.mxu0 %v1716
        %1776 = vmatprep.subr.bf16.mxu0 0
        %1777 = vmatpush1.bf16.msra.mxu0 %v1717
        %1778 = vmatprep.subr.bf16.mxu0 0
        %1779 = vmatpush1.bf16.msra.mxu0 %v1718
        %1780 = vmatprep.subr.bf16.mxu0 0
        %1781 = vmatpush1.bf16.msra.mxu0 %v1719
        %1782 = vmatprep.subr.bf16.mxu0 0
        %1783 = vmatpush1.bf16.msra.mxu0 %v1720
        %1784 = vmatprep.subr.bf16.mxu0 0
        %1785 = vmatpush1.bf16.msra.mxu0 %v1721
        %1786 = vmatprep.mubr.bf16.mxu0 %v1723
        %1787 = vmatmul.mubr.bf16.gmra.mrb[0].mxu0 %v1722
        %v1788 = vpop.f32.mrb[0].mxu0
        %v1789 = vadd.f32 0.0, %v1788
        %v1790 = vpop.f32.mrb[0].mxu0
        %v1791 = vpop.f32.mrb[0].mxu0
        %v1792 = vadd.f32 0.0, %v1791
        %v1793 = vpop.f32.mrb[0].mxu0
        %1794 = vmatprep.mubr.bf16.mxu0 %v1725
        %1795 = vmatmul.mubr.bf16.gmra.mrb[0].mxu0 %v1724
        %v1796 = vpop.f32.mrb[0].mxu0
        %v1797 = vadd.f32 0.0, %v1796
        %v1798 = vpop.f32.mrb[0].mxu0
        %v1799 = vpop.f32.mrb[0].mxu0
        %v1800 = vadd.f32 0.0, %v1799
        %v1801 = vpop.f32.mrb[0].mxu0
        %1802 = vmatprep.mubr.bf16.mxu0 %v1727
        %1803 = vmatmul.mubr.bf16.gmra.mrb[0].mxu0 %v1726
        %v1804 = vpop.f32.mrb[0].mxu0
        %v1805 = vadd.f32 0.0, %v1804
        %v1806 = vpop.f32.mrb[0].mxu0
        %v1807 = vpop.f32.mrb[0].mxu0
        %v1808 = vadd.f32 0.0, %v1807
        %v1809 = vpop.f32.mrb[0].mxu0
        %1810 = vmatprep.mubr.bf16.mxu0 %v1729
        %1811 = vmatmul.mubr.bf16.gmra.mrb[0].mxu0 %v1728
        %v1812 = vpop.f32.mrb[0].mxu0
        %v1813 = vadd.f32 0.0, %v1812
        %v1814 = vpop.f32.mrb[0].mxu0
        %v1815 = vpop.f32.mrb[0].mxu0
        %v1816 = vadd.f32 0.0, %v1815
        %v1817 = vpop.f32.mrb[0].mxu0
        %1818 = vmatprep.mubr.bf16.mxu0 %v1731
        %1819 = vmatmul.mubr.bf16.gmra.mrb[0].mxu0 %v1730
        %v1820 = vpop.f32.mrb[0].mxu0
        %v1821 = vadd.f32 0.0, %v1820
        %v1822 = vpop.f32.mrb[0].mxu0
        %v1823 = vpop.f32.mrb[0].mxu0
        %v1824 = vadd.f32 0.0, %v1823
        %v1825 = vpop.f32.mrb[0].mxu0
        %1826 = vmatprep.mubr.bf16.mxu0 %v1733
        %1827 = vmatmul.mubr.bf16.gmra.mrb[0].mxu0 %v1732
        %v1828 = vpop.f32.mrb[0].mxu0
        %v1829 = vadd.f32 0.0, %v1828
        %v1830 = vpop.f32.mrb[0].mxu0
        %v1831 = vpop.f32.mrb[0].mxu0
        %v1832 = vadd.f32 0.0, %v1831
        %v1833 = vpop.f32.mrb[0].mxu0
        %1834 = vmatprep.mubr.bf16.mxu0 %v1735
        %1835 = vmatmul.mubr.bf16.gmra.mrb[0].mxu0 %v1734
        %v1836 = vpop.f32.mrb[0].mxu0
        %v1837 = vadd.f32 0.0, %v1836
        %v1838 = vpop.f32.mrb[0].mxu0
        %v1839 = vpop.f32.mrb[0].mxu0
        %v1840 = vadd.f32 0.0, %v1839
        %v1841 = vpop.f32.mrb[0].mxu0
        %1842 = vmatprep.mubr.bf16.mxu0 %v1737
        %1843 = vmatmul.mubr.bf16.gmra.mrb[0].mxu0 %v1736
        %v1844 = vpop.f32.mrb[0].mxu0
        %v1845 = vadd.f32 0.0, %v1844
        %v1846 = vpop.f32.mrb[0].mxu0
        %v1847 = vpop.f32.mrb[0].mxu0
        %v1848 = vadd.f32 0.0, %v1847
        %v1849 = vpop.f32.mrb[0].mxu0
        %1850 = vmatprep.mubr.bf16.mxu0 %v1739
        %1851 = vmatmul.mubr.bf16.gmra.mrb[0].mxu0 %v1738
        %v1852 = vpop.f32.mrb[0].mxu0
        %v1853 = vadd.f32 0.0, %v1852
        %v1854 = vpop.f32.mrb[0].mxu0
        %v1855 = vpop.f32.mrb[0].mxu0
        %v1856 = vadd.f32 0.0, %v1855
        %v1857 = vpop.f32.mrb[0].mxu0
        %1858 = vmatprep.mubr.bf16.mxu0 %v1741
        %1859 = vmatmul.mubr.bf16.gmra.mrb[0].mxu0 %v1740
        %v1860 = vpop.f32.mrb[0].mxu0
        %v1861 = vadd.f32 0.0, %v1860
        %v1862 = vpop.f32.mrb[0].mxu0
        %v1863 = vpop.f32.mrb[0].mxu0
        %v1864 = vadd.f32 0.0, %v1863
        %v1865 = vpop.f32.mrb[0].mxu0
        %1866 = vmatprep.mubr.bf16.mxu0 %v1743
        %1867 = vmatmul.mubr.bf16.gmra.mrb[0].mxu0 %v1742
        %v1868 = vpop.f32.mrb[0].mxu0
        %v1869 = vadd.f32 0.0, %v1868
        %v1870 = vpop.f32.mrb[0].mxu0
        %v1871 = vpop.f32.mrb[0].mxu0
        %v1872 = vadd.f32 0.0, %v1871
        %v1873 = vpop.f32.mrb[0].mxu0
        %1874 = vmatprep.mubr.bf16.mxu0 %v1745
        %1875 = vmatmul.mubr.bf16.gmra.mrb[0].mxu0 %v1744
        %v1876 = vpop.f32.mrb[0].mxu0
        %v1877 = vadd.f32 0.0, %v1876
        %v1878 = vpop.f32.mrb[0].mxu0
        %v1879 = vpop.f32.mrb[0].mxu0
        %v1880 = vadd.f32 0.0, %v1879
        %v1881 = vpop.f32.mrb[0].mxu0
        %1882 = vmatprep.mubr.bf16.mxu0 %v1747
        %1883 = vmatmul.mubr.bf16.gmra.mrb[0].mxu0 %v1746
        %v1884 = vpop.f32.mrb[0].mxu0
        %v1885 = vadd.f32 0.0, %v1884
        %v1886 = vpop.f32.mrb[0].mxu0
        %v1887 = vpop.f32.mrb[0].mxu0
        %v1888 = vadd.f32 0.0, %v1887
        %v1889 = vpop.f32.mrb[0].mxu0
        %1890 = vmatprep.mubr.bf16.mxu0 %v1749
        %1891 = vmatmul.mubr.bf16.gmra.mrb[0].mxu0 %v1748
        %v1892 = vpop.f32.mrb[0].mxu0
        %v1893 = vadd.f32 0.0, %v1892
        %v1894 = vpop.f32.mrb[0].mxu0
        %v1895 = vpop.f32.mrb[0].mxu0
        %v1896 = vadd.f32 0.0, %v1895
        %v1897 = vpop.f32.mrb[0].mxu0
        %1898 = vmatprep.mubr.bf16.mxu0 %v1751
        %1899 = vmatmul.mubr.bf16.gmra.mrb[0].mxu0 %v1750
        %v1900 = vpop.f32.mrb[0].mxu0
        %v1901 = vadd.f32 0.0, %v1900
        %v1902 = vpop.f32.mrb[0].mxu0
        %v1903 = vpop.f32.mrb[0].mxu0
        %v1904 = vadd.f32 0.0, %v1903
        %v1905 = vpop.f32.mrb[0].mxu0
        %1906 = vmatprep.mubr.bf16.mxu0 %v1753
        %1907 = vmatmul.mubr.bf16.gmra.mrb[0].mxu0 %v1752
        %v1908 = vpop.f32.mrb[0].mxu0
        %v1909 = vadd.f32 0.0, %v1908
        %v1910 = vpop.f32.mrb[0].mxu0
        %v1911 = vpop.f32.mrb[0].mxu0
        %v1912 = vadd.f32 0.0, %v1911
        %v1913 = vpop.f32.mrb[0].mxu0
        %1914 = vdwg.mxu0
        %v1915 = vrcp.pop %v1578
        %v1916 = vrcp.pop %v1581
        %v1917 = vrcp.pop %v1584
        %v1918 = vrcp.pop %v1587
        %v1919 = vrcp.pop %v1590
        %v1920 = vrcp.pop %v1593
        %v1921 = vrcp.pop %v1596
        %v1922 = vrcp.pop %v1599
        %v1923 = vrcp.pop %v1602
        %v1924 = vrcp.pop %v1605
        %v1925 = vrcp.pop %v1608
        %v1926 = vrcp.pop %v1611
        %v1927 = vrcp.pop %v1614
        %v1928 = vrcp.pop %v1617
        %v1929 = vrcp.pop %v1620
        %v1930 = vrcp.pop %v1623
        %v1931 = vrcp.pop %v1626
        %v1932 = vrcp.pop %v1629
        %v1933 = vrcp.pop %v1632
        %v1934 = vrcp.pop %v1635
        %v1935 = vrcp.pop %v1638
        %v1936 = vrcp.pop %v1641
        %v1937 = vrcp.pop %v1644
        %v1938 = vrcp.pop %v1647
        %v1939 = vrcp.pop %v1650
        %v1940 = vrcp.pop %v1653
        %v1941 = vrcp.pop %v1656
        %v1942 = vrcp.pop %v1659
        %v1943 = vrcp.pop %v1662
        %v1944 = vrcp.pop %v1665
        %v1945 = vrcp.pop %v1668
        %v1946 = vrcp.pop %v1671
        %v1947 = vmul.f32 %v1789, %v1915
        %v1948 = vmul.f32 %v1792, %v1916
        %v1949 = vmul.f32 %v1797, %v1917
        %v1950 = vmul.f32 %v1800, %v1918
        %v1951 = vmul.f32 %v1805, %v1919
        %v1952 = vmul.f32 %v1808, %v1920
        %v1953 = vmul.f32 %v1813, %v1921
        %v1954 = vmul.f32 %v1816, %v1922
        %v1955 = vmul.f32 %v1821, %v1923
        %v1956 = vmul.f32 %v1824, %v1924
        %v1957 = vmul.f32 %v1829, %v1925
        %v1958 = vmul.f32 %v1832, %v1926
        %v1959 = vmul.f32 %v1837, %v1927
        %v1960 = vmul.f32 %v1840, %v1928
        %v1961 = vmul.f32 %v1845, %v1929
        %v1962 = vmul.f32 %v1848, %v1930
        %v1963 = vmul.f32 %v1853, %v1931
        %v1964 = vmul.f32 %v1856, %v1932
        %v1965 = vmul.f32 %v1861, %v1933
        %v1966 = vmul.f32 %v1864, %v1934
        %v1967 = vmul.f32 %v1869, %v1935
        %v1968 = vmul.f32 %v1872, %v1936
        %v1969 = vmul.f32 %v1877, %v1937
        %v1970 = vmul.f32 %v1880, %v1938
        %v1971 = vmul.f32 %v1885, %v1939
        %v1972 = vmul.f32 %v1888, %v1940
        %v1973 = vmul.f32 %v1893, %v1941
        %v1974 = vmul.f32 %v1896, %v1942
        %v1975 = vmul.f32 %v1901, %v1943
        %v1976 = vmul.f32 %v1904, %v1944
        %v1977 = vmul.f32 %v1909, %v1945
        %v1978 = vmul.f32 %v1912, %v1946
        %s1979 = sld [smem:[#allocation2]]
        %v1980 = vstv %s1979
        %v1981 = vadd.f32 %v1947, %v1980
        %v1982 = vadd.f32 %v1948, %v1980
        %v1983 = vadd.f32 %v1949, %v1980
        %v1984 = vadd.f32 %v1950, %v1980
        %v1985 = vadd.f32 %v1951, %v1980
        %v1986 = vadd.f32 %v1952, %v1980
        %v1987 = vadd.f32 %v1953, %v1980
        %v1988 = vadd.f32 %v1954, %v1980
        %v1989 = vadd.f32 %v1955, %v1980
        %v1990 = vadd.f32 %v1956, %v1980
        %v1991 = vadd.f32 %v1957, %v1980
        %v1992 = vadd.f32 %v1958, %v1980
        %v1993 = vadd.f32 %v1959, %v1980
        %v1994 = vadd.f32 %v1960, %v1980
        %v1995 = vadd.f32 %v1961, %v1980
        %v1996 = vadd.f32 %v1962, %v1980
        %v1997 = vadd.f32 %v1963, %v1980
        %v1998 = vadd.f32 %v1964, %v1980
        %v1999 = vadd.f32 %v1965, %v1980
        %v2000 = vadd.f32 %v1966, %v1980
        %v2001 = vadd.f32 %v1967, %v1980
        %v2002 = vadd.f32 %v1968, %v1980
        %v2003 = vadd.f32 %v1969, %v1980
        %v2004 = vadd.f32 %v1970, %v1980
        %v2005 = vadd.f32 %v1971, %v1980
        %v2006 = vadd.f32 %v1972, %v1980
        %v2007 = vadd.f32 %v1973, %v1980
        %v2008 = vadd.f32 %v1974, %v1980
        %v2009 = vadd.f32 %v1975, %v1980
        %v2010 = vadd.f32 %v1976, %v1980
        %v2011 = vadd.f32 %v1977, %v1980
        %v2012 = vadd.f32 %v1978, %v1980
        %v2013 = vxor.u32 %v1981, 2147483648
        %v2014 = vxor.u32 %v1982, 2147483648
        %v2015 = vxor.u32 %v1983, 2147483648
        %v2016 = vxor.u32 %v1984, 2147483648
        %v2017 = vxor.u32 %v1985, 2147483648
        %v2018 = vxor.u32 %v1986, 2147483648
        %v2019 = vxor.u32 %v1987, 2147483648
        %v2020 = vxor.u32 %v1988, 2147483648
        %v2021 = vxor.u32 %v1989, 2147483648
        %v2022 = vxor.u32 %v1990, 2147483648
        %v2023 = vxor.u32 %v1991, 2147483648
        %v2024 = vxor.u32 %v1992, 2147483648
        %v2025 = vxor.u32 %v1993, 2147483648
        %v2026 = vxor.u32 %v1994, 2147483648
        %v2027 = vxor.u32 %v1995, 2147483648
        %v2028 = vxor.u32 %v1996, 2147483648
        %v2029 = vxor.u32 %v1997, 2147483648
        %v2030 = vxor.u32 %v1998, 2147483648
        %v2031 = vxor.u32 %v1999, 2147483648
        %v2032 = vxor.u32 %v2000, 2147483648
        %v2033 = vxor.u32 %v2001, 2147483648
        %v2034 = vxor.u32 %v2002, 2147483648
        %v2035 = vxor.u32 %v2003, 2147483648
        %v2036 = vxor.u32 %v2004, 2147483648
        %v2037 = vxor.u32 %v2005, 2147483648
        %v2038 = vxor.u32 %v2006, 2147483648
        %v2039 = vxor.u32 %v2007, 2147483648
        %v2040 = vxor.u32 %v2008, 2147483648
        %v2041 = vxor.u32 %v2009, 2147483648
        %v2042 = vxor.u32 %v2010, 2147483648
        %v2043 = vxor.u32 %v2011, 2147483648
        %v2044 = vxor.u32 %v2012, 2147483648
        %v2045 = vmul.f32 %v2013, 1.442695
        %v2046 = vpow.pop %v2045
        %v2047 = vmul.f32 %v2014, 1.442695
        %v2048 = vpow.pop %v2047
        %v2049 = vmul.f32 %v2015, 1.442695
        %v2050 = vpow.pop %v2049
        %v2051 = vmul.f32 %v2016, 1.442695
        %v2052 = vpow.pop %v2051
        %v2053 = vmul.f32 %v2017, 1.442695
        %v2054 = vpow.pop %v2053
        %v2055 = vmul.f32 %v2018, 1.442695
        %v2056 = vpow.pop %v2055
        %v2057 = vmul.f32 %v2019, 1.442695
        %v2058 = vpow.pop %v2057
        %v2059 = vmul.f32 %v2020, 1.442695
        %v2060 = vpow.pop %v2059
        %v2061 = vmul.f32 %v2021, 1.442695
        %v2062 = vpow.pop %v2061
        %v2063 = vmul.f32 %v2022, 1.442695
        %v2064 = vpow.pop %v2063
        %v2065 = vmul.f32 %v2023, 1.442695
        %v2066 = vpow.pop %v2065
        %v2067 = vmul.f32 %v2024, 1.442695
        %v2068 = vpow.pop %v2067
        %v2069 = vmul.f32 %v2025, 1.442695
        %v2070 = vpow.pop %v2069
        %v2071 = vmul.f32 %v2026, 1.442695
        %v2072 = vpow.pop %v2071
        %v2073 = vmul.f32 %v2027, 1.442695
        %v2074 = vpow.pop %v2073
        %v2075 = vmul.f32 %v2028, 1.442695
        %v2076 = vpow.pop %v2075
        %v2077 = vmul.f32 %v2029, 1.442695
        %v2078 = vpow.pop %v2077
        %v2079 = vmul.f32 %v2030, 1.442695
        %v2080 = vpow.pop %v2079
        %v2081 = vmul.f32 %v2031, 1.442695
        %v2082 = vpow.pop %v2081
        %v2083 = vmul.f32 %v2032, 1.442695
        %v2084 = vpow.pop %v2083
        %v2085 = vmul.f32 %v2033, 1.442695
        %v2086 = vpow.pop %v2085
        %v2087 = vmul.f32 %v2034, 1.442695
        %v2088 = vpow.pop %v2087
        %v2089 = vmul.f32 %v2035, 1.442695
        %v2090 = vpow.pop %v2089
        %v2091 = vmul.f32 %v2036, 1.442695
        %v2092 = vpow.pop %v2091
        %v2093 = vmul.f32 %v2037, 1.442695
        %v2094 = vpow.pop %v2093
        %v2095 = vmul.f32 %v2038, 1.442695
        %v2096 = vpow.pop %v2095
        %v2097 = vmul.f32 %v2039, 1.442695
        %v2098 = vpow.pop %v2097
        %v2099 = vmul.f32 %v2040, 1.442695
        %v2100 = vpow.pop %v2099
        %v2101 = vmul.f32 %v2041, 1.442695
        %v2102 = vpow.pop %v2101
        %v2103 = vmul.f32 %v2042, 1.442695
        %v2104 = vpow.pop %v2103
        %v2105 = vmul.f32 %v2043, 1.442695
        %v2106 = vpow.pop %v2105
        %v2107 = vmul.f32 %v2044, 1.442695
        %v2108 = vpow.pop %v2107
        %v2109 = vadd.f32 %v2046, 1.0
        %v2110 = vadd.f32 %v2048, 1.0
        %v2111 = vadd.f32 %v2050, 1.0
        %v2112 = vadd.f32 %v2052, 1.0
        %v2113 = vadd.f32 %v2054, 1.0
        %v2114 = vadd.f32 %v2056, 1.0
        %v2115 = vadd.f32 %v2058, 1.0
        %v2116 = vadd.f32 %v2060, 1.0
        %v2117 = vadd.f32 %v2062, 1.0
        %v2118 = vadd.f32 %v2064, 1.0
        %v2119 = vadd.f32 %v2066, 1.0
        %v2120 = vadd.f32 %v2068, 1.0
        %v2121 = vadd.f32 %v2070, 1.0
        %v2122 = vadd.f32 %v2072, 1.0
        %v2123 = vadd.f32 %v2074, 1.0
        %v2124 = vadd.f32 %v2076, 1.0
        %v2125 = vadd.f32 %v2078, 1.0
        %v2126 = vadd.f32 %v2080, 1.0
        %v2127 = vadd.f32 %v2082, 1.0
        %v2128 = vadd.f32 %v2084, 1.0
        %v2129 = vadd.f32 %v2086, 1.0
        %v2130 = vadd.f32 %v2088, 1.0
        %v2131 = vadd.f32 %v2090, 1.0
        %v2132 = vadd.f32 %v2092, 1.0
        %v2133 = vadd.f32 %v2094, 1.0
        %v2134 = vadd.f32 %v2096, 1.0
        %v2135 = vadd.f32 %v2098, 1.0
        %v2136 = vadd.f32 %v2100, 1.0
        %v2137 = vadd.f32 %v2102, 1.0
        %v2138 = vadd.f32 %v2104, 1.0
        %v2139 = vadd.f32 %v2106, 1.0
        %v2140 = vadd.f32 %v2108, 1.0
        %v2141 = vrcp.pop %v2109
        %v2142 = vmul.f32 1.0, %v2141
        %v2143 = vrcp.pop %v2110
        %v2144 = vmul.f32 1.0, %v2143
        %v2145 = vrcp.pop %v2111
        %v2146 = vmul.f32 1.0, %v2145
        %v2147 = vrcp.pop %v2112
        %v2148 = vmul.f32 1.0, %v2147
        %v2149 = vrcp.pop %v2113
        %v2150 = vmul.f32 1.0, %v2149
        %v2151 = vrcp.pop %v2114
        %v2152 = vmul.f32 1.0, %v2151
        %v2153 = vrcp.pop %v2115
        %v2154 = vmul.f32 1.0, %v2153
        %v2155 = vrcp.pop %v2116
        %v2156 = vmul.f32 1.0, %v2155
        %v2157 = vrcp.pop %v2117
        %v2158 = vmul.f32 1.0, %v2157
        %v2159 = vrcp.pop %v2118
        %v2160 = vmul.f32 1.0, %v2159
        %v2161 = vrcp.pop %v2119
        %v2162 = vmul.f32 1.0, %v2161
        %v2163 = vrcp.pop %v2120
        %v2164 = vmul.f32 1.0, %v2163
        %v2165 = vrcp.pop %v2121
        %v2166 = vmul.f32 1.0, %v2165
        %v2167 = vrcp.pop %v2122
        %v2168 = vmul.f32 1.0, %v2167
        %v2169 = vrcp.pop %v2123
        %v2170 = vmul.f32 1.0, %v2169
        %v2171 = vrcp.pop %v2124
        %v2172 = vmul.f32 1.0, %v2171
        %v2173 = vrcp.pop %v2125
        %v2174 = vmul.f32 1.0, %v2173
        %v2175 = vrcp.pop %v2126
        %v2176 = vmul.f32 1.0, %v2175
        %v2177 = vrcp.pop %v2127
        %v2178 = vmul.f32 1.0, %v2177
        %v2179 = vrcp.pop %v2128
        %v2180 = vmul.f32 1.0, %v2179
        %v2181 = vrcp.pop %v2129
        %v2182 = vmul.f32 1.0, %v2181
        %v2183 = vrcp.pop %v2130
        %v2184 = vmul.f32 1.0, %v2183
        %v2185 = vrcp.pop %v2131
        %v2186 = vmul.f32 1.0, %v2185
        %v2187 = vrcp.pop %v2132
        %v2188 = vmul.f32 1.0, %v2187
        %v2189 = vrcp.pop %v2133
        %v2190 = vmul.f32 1.0, %v2189
        %v2191 = vrcp.pop %v2134
        %v2192 = vmul.f32 1.0, %v2191
        %v2193 = vrcp.pop %v2135
        %v2194 = vmul.f32 1.0, %v2193
        %v2195 = vrcp.pop %v2136
        %v2196 = vmul.f32 1.0, %v2195
        %v2197 = vrcp.pop %v2137
        %v2198 = vmul.f32 1.0, %v2197
        %v2199 = vrcp.pop %v2138
        %v2200 = vmul.f32 1.0, %v2199
        %v2201 = vrcp.pop %v2139
        %v2202 = vmul.f32 1.0, %v2201
        %v2203 = vrcp.pop %v2140
        %v2204 = vmul.f32 1.0, %v2203
        %2206 = vset.pattern.permute.xlu0 32
        %2207 = vperm.xlu0 %2206, %v2142
        %v2208 = vpop.permute.xlu0 %2207
        %2211 = vset.pattern.permute.xlu0 32
        %2212 = vperm.xlu0 %2211, %v2144
        %v2213 = vpop.permute.xlu0 %2212
        %2216 = vset.pattern.permute.xlu0 32
        %2217 = vperm.xlu0 %2216, %v2146
        %v2218 = vpop.permute.xlu0 %2217
        %2221 = vset.pattern.permute.xlu0 32
        %2222 = vperm.xlu0 %2221, %v2148
        %v2223 = vpop.permute.xlu0 %2222
        %2226 = vset.pattern.permute.xlu0 32
        %2227 = vperm.xlu0 %2226, %v2150
        %v2228 = vpop.permute.xlu0 %2227
        %2231 = vset.pattern.permute.xlu0 32
        %2232 = vperm.xlu0 %2231, %v2152
        %v2233 = vpop.permute.xlu0 %2232
        %2236 = vset.pattern.permute.xlu0 32
        %2237 = vperm.xlu0 %2236, %v2154
        %v2238 = vpop.permute.xlu0 %2237
        %2241 = vset.pattern.permute.xlu0 32
        %2242 = vperm.xlu0 %2241, %v2156
        %v2243 = vpop.permute.xlu0 %2242
        %2246 = vset.pattern.permute.xlu0 32
        %2247 = vperm.xlu0 %2246, %v2158
        %v2248 = vpop.permute.xlu0 %2247
        %2251 = vset.pattern.permute.xlu0 32
        %2252 = vperm.xlu0 %2251, %v2160
        %v2253 = vpop.permute.xlu0 %2252
        %2256 = vset.pattern.permute.xlu0 32
        %2257 = vperm.xlu0 %2256, %v2162
        %v2258 = vpop.permute.xlu0 %2257
        %2261 = vset.pattern.permute.xlu0 32
        %2262 = vperm.xlu0 %2261, %v2164
        %v2263 = vpop.permute.xlu0 %2262
        %2266 = vset.pattern.permute.xlu0 32
        %2267 = vperm.xlu0 %2266, %v2166
        %v2268 = vpop.permute.xlu0 %2267
        %2271 = vset.pattern.permute.xlu0 32
        %2272 = vperm.xlu0 %2271, %v2168
        %v2273 = vpop.permute.xlu0 %2272
        %2276 = vset.pattern.permute.xlu0 32
        %2277 = vperm.xlu0 %2276, %v2170
        %v2278 = vpop.permute.xlu0 %2277
        %2281 = vset.pattern.permute.xlu0 32
        %2282 = vperm.xlu0 %2281, %v2172
        %v2283 = vpop.permute.xlu0 %2282
        %2286 = vset.pattern.permute.xlu0 32
        %2287 = vperm.xlu0 %2286, %v2174
        %v2288 = vpop.permute.xlu0 %2287
        %2291 = vset.pattern.permute.xlu0 32
        %2292 = vperm.xlu0 %2291, %v2176
        %v2293 = vpop.permute.xlu0 %2292
        %2296 = vset.pattern.permute.xlu0 32
        %2297 = vperm.xlu0 %2296, %v2178
        %v2298 = vpop.permute.xlu0 %2297
        %2301 = vset.pattern.permute.xlu0 32
        %2302 = vperm.xlu0 %2301, %v2180
        %v2303 = vpop.permute.xlu0 %2302
        %2306 = vset.pattern.permute.xlu0 32
        %2307 = vperm.xlu0 %2306, %v2182
        %v2308 = vpop.permute.xlu0 %2307
        %2311 = vset.pattern.permute.xlu0 32
        %2312 = vperm.xlu0 %2311, %v2184
        %v2313 = vpop.permute.xlu0 %2312
        %2316 = vset.pattern.permute.xlu0 32
        %2317 = vperm.xlu0 %2316, %v2186
        %v2318 = vpop.permute.xlu0 %2317
        %2321 = vset.pattern.permute.xlu0 32
        %2322 = vperm.xlu0 %2321, %v2188
        %v2323 = vpop.permute.xlu0 %2322
        %2326 = vset.pattern.permute.xlu0 32
        %2327 = vperm.xlu0 %2326, %v2190
        %v2328 = vpop.permute.xlu0 %2327
        %2331 = vset.pattern.permute.xlu0 32
        %2332 = vperm.xlu0 %2331, %v2192
        %v2333 = vpop.permute.xlu0 %2332
        %2336 = vset.pattern.permute.xlu0 32
        %2337 = vperm.xlu0 %2336, %v2194
        %v2338 = vpop.permute.xlu0 %2337
        %2341 = vset.pattern.permute.xlu0 32
        %2342 = vperm.xlu0 %2341, %v2196
        %v2343 = vpop.permute.xlu0 %2342
        %2346 = vset.pattern.permute.xlu0 32
        %2347 = vperm.xlu0 %2346, %v2198
        %v2348 = vpop.permute.xlu0 %2347
        %2351 = vset.pattern.permute.xlu0 32
        %2352 = vperm.xlu0 %2351, %v2200
        %v2353 = vpop.permute.xlu0 %2352
        %2356 = vset.pattern.permute.xlu0 32
        %2357 = vperm.xlu0 %2356, %v2202
        %v2358 = vpop.permute.xlu0 %2357
        %2361 = vset.pattern.permute.xlu0 32
        %2362 = vperm.xlu0 %2361, %v2204
        %v2363 = vpop.permute.xlu0 %2362
        %v2365 = vmul.f32 %v1947, %v2208
        %v2366 = vmul.f32 %v1948, %v2213
        %v2367 = vmul.f32 %v1949, %v2218
        %v2368 = vmul.f32 %v1950, %v2223
        %v2369 = vmul.f32 %v1951, %v2228
        %v2370 = vmul.f32 %v1952, %v2233
        %v2371 = vmul.f32 %v1953, %v2238
        %v2372 = vmul.f32 %v1954, %v2243
        %v2373 = vmul.f32 %v1955, %v2248
        %v2374 = vmul.f32 %v1956, %v2253
        %v2375 = vmul.f32 %v1957, %v2258
        %v2376 = vmul.f32 %v1958, %v2263
        %v2377 = vmul.f32 %v1959, %v2268
        %v2378 = vmul.f32 %v1960, %v2273
        %v2379 = vmul.f32 %v1961, %v2278
        %v2380 = vmul.f32 %v1962, %v2283
        %v2381 = vmul.f32 %v1963, %v2288
        %v2382 = vmul.f32 %v1964, %v2293
        %v2383 = vmul.f32 %v1965, %v2298
        %v2384 = vmul.f32 %v1966, %v2303
        %v2385 = vmul.f32 %v1967, %v2308
        %v2386 = vmul.f32 %v1968, %v2313
        %v2387 = vmul.f32 %v1969, %v2318
        %v2388 = vmul.f32 %v1970, %v2323
        %v2389 = vmul.f32 %v1971, %v2328
        %v2390 = vmul.f32 %v1972, %v2333
        %v2391 = vmul.f32 %v1973, %v2338
        %v2392 = vmul.f32 %v1974, %v2343
        %v2393 = vmul.f32 %v1975, %v2348
        %v2394 = vmul.f32 %v1976, %v2353
        %v2395 = vmul.f32 %v1977, %v2358
        %v2396 = vmul.f32 %v1978, %v2363
        %v2397 = vmax.f32 %v1095, %v1097
        %2398 = vmax.xlane.f32.xlu0 %v2397
        %v2399 = vpop.xlane.xlu0 %2398
        %v2400 = vmax.f32 %v1101, %v1103
        %2401 = vmax.xlane.f32.xlu0 %v2400
        %v2402 = vpop.xlane.xlu0 %2401
        %v2403 = vmax.f32 %v1107, %v1109
        %2404 = vmax.xlane.f32.xlu0 %v2403
        %v2405 = vpop.xlane.xlu0 %2404
        %v2406 = vmax.f32 %v1113, %v1115
        %2407 = vmax.xlane.f32.xlu0 %v2406
        %v2408 = vpop.xlane.xlu0 %2407
        %v2409 = vmax.f32 %v1119, %v1121
        %2410 = vmax.xlane.f32.xlu0 %v2409
        %v2411 = vpop.xlane.xlu0 %2410
        %v2412 = vmax.f32 %v1125, %v1127
        %2413 = vmax.xlane.f32.xlu0 %v2412
        %v2414 = vpop.xlane.xlu0 %2413
        %v2415 = vmax.f32 %v1131, %v1133
        %2416 = vmax.xlane.f32.xlu0 %v2415
        %v2417 = vpop.xlane.xlu0 %2416
        %v2418 = vmax.f32 %v1137, %v1139
        %2419 = vmax.xlane.f32.xlu0 %v2418
        %v2420 = vpop.xlane.xlu0 %2419
        %v2421 = vmax.f32 %v1143, %v1145
        %2422 = vmax.xlane.f32.xlu0 %v2421
        %v2423 = vpop.xlane.xlu0 %2422
        %v2424 = vmax.f32 %v1149, %v1151
        %2425 = vmax.xlane.f32.xlu0 %v2424
        %v2426 = vpop.xlane.xlu0 %2425
        %v2427 = vmax.f32 %v1155, %v1157
        %2428 = vmax.xlane.f32.xlu0 %v2427
        %v2429 = vpop.xlane.xlu0 %2428
        %v2430 = vmax.f32 %v1161, %v1163
        %2431 = vmax.xlane.f32.xlu0 %v2430
        %v2432 = vpop.xlane.xlu0 %2431
        %v2433 = vmax.f32 %v1167, %v1169
        %2434 = vmax.xlane.f32.xlu0 %v2433
        %v2435 = vpop.xlane.xlu0 %2434
        %v2436 = vmax.f32 %v1173, %v1175
        %2437 = vmax.xlane.f32.xlu0 %v2436
        %v2438 = vpop.xlane.xlu0 %2437
        %v2439 = vmax.f32 %v1179, %v1181
        %2440 = vmax.xlane.f32.xlu0 %v2439
        %v2441 = vpop.xlane.xlu0 %2440
        %v2442 = vmax.f32 %v1185, %v1187
        %2443 = vmax.xlane.f32.xlu0 %v2442
        %v2444 = vpop.xlane.xlu0 %2443
        %v2445 = vmax.f32 %v1191, %v1193
        %2446 = vmax.xlane.f32.xlu0 %v2445
        %v2447 = vpop.xlane.xlu0 %2446
        %v2448 = vmax.f32 %v1197, %v1199
        %2449 = vmax.xlane.f32.xlu0 %v2448
        %v2450 = vpop.xlane.xlu0 %2449
        %v2451 = vmax.f32 %v1203, %v1205
        %2452 = vmax.xlane.f32.xlu0 %v2451
        %v2453 = vpop.xlane.xlu0 %2452
        %v2454 = vmax.f32 %v1209, %v1211
        %2455 = vmax.xlane.f32.xlu0 %v2454
        %v2456 = vpop.xlane.xlu0 %2455
        %v2457 = vmax.f32 %v1215, %v1217
        %2458 = vmax.xlane.f32.xlu0 %v2457
        %v2459 = vpop.xlane.xlu0 %2458
        %v2460 = vmax.f32 %v1221, %v1223
        %2461 = vmax.xlane.f32.xlu0 %v2460
        %v2462 = vpop.xlane.xlu0 %2461
        %v2463 = vmax.f32 %v1227, %v1229
        %2464 = vmax.xlane.f32.xlu0 %v2463
        %v2465 = vpop.xlane.xlu0 %2464
        %v2466 = vmax.f32 %v1233, %v1235
        %2467 = vmax.xlane.f32.xlu0 %v2466
        %v2468 = vpop.xlane.xlu0 %2467
        %v2469 = vmax.f32 %v1239, %v1241
        %2470 = vmax.xlane.f32.xlu0 %v2469
        %v2471 = vpop.xlane.xlu0 %2470
        %v2472 = vmax.f32 %v1245, %v1247
        %2473 = vmax.xlane.f32.xlu0 %v2472
        %v2474 = vpop.xlane.xlu0 %2473
        %v2475 = vmax.f32 %v1251, %v1253
        %2476 = vmax.xlane.f32.xlu0 %v2475
        %v2477 = vpop.xlane.xlu0 %2476
        %v2478 = vmax.f32 %v1257, %v1259
        %2479 = vmax.xlane.f32.xlu0 %v2478
        %v2480 = vpop.xlane.xlu0 %2479
        %v2481 = vmax.f32 %v1263, %v1265
        %2482 = vmax.xlane.f32.xlu0 %v2481
        %v2483 = vpop.xlane.xlu0 %2482
        %v2484 = vmax.f32 %v1269, %v1271
        %2485 = vmax.xlane.f32.xlu0 %v2484
        %v2486 = vpop.xlane.xlu0 %2485
        %v2487 = vmax.f32 %v1275, %v1277
        %2488 = vmax.xlane.f32.xlu0 %v2487
        %v2489 = vpop.xlane.xlu0 %2488
        %v2490 = vmax.f32 %v1281, %v1283
        %2491 = vmax.xlane.f32.xlu0 %v2490
        %v2492 = vpop.xlane.xlu0 %2491
        %v2493 = vsub.f32 %v1095, %v2399
        %v2494 = vsub.f32 %v1097, %v2399
        %v2495 = vsub.f32 %v1101, %v2402
        %v2496 = vsub.f32 %v1103, %v2402
        %v2497 = vsub.f32 %v1107, %v2405
        %v2498 = vsub.f32 %v1109, %v2405
        %v2499 = vsub.f32 %v1113, %v2408
        %v2500 = vsub.f32 %v1115, %v2408
        %v2501 = vsub.f32 %v1119, %v2411
        %v2502 = vsub.f32 %v1121, %v2411
        %v2503 = vsub.f32 %v1125, %v2414
        %v2504 = vsub.f32 %v1127, %v2414
        %v2505 = vsub.f32 %v1131, %v2417
        %v2506 = vsub.f32 %v1133, %v2417
        %v2507 = vsub.f32 %v1137, %v2420
        %v2508 = vsub.f32 %v1139, %v2420
        %v2509 = vsub.f32 %v1143, %v2423
        %v2510 = vsub.f32 %v1145, %v2423
        %v2511 = vsub.f32 %v1149, %v2426
        %v2512 = vsub.f32 %v1151, %v2426
        %v2513 = vsub.f32 %v1155, %v2429
        %v2514 = vsub.f32 %v1157, %v2429
        %v2515 = vsub.f32 %v1161, %v2432
        %v2516 = vsub.f32 %v1163, %v2432
        %v2517 = vsub.f32 %v1167, %v2435
        %v2518 = vsub.f32 %v1169, %v2435
        %v2519 = vsub.f32 %v1173, %v2438
        %v2520 = vsub.f32 %v1175, %v2438
        %v2521 = vsub.f32 %v1179, %v2441
        %v2522 = vsub.f32 %v1181, %v2441
        %v2523 = vsub.f32 %v1185, %v2444
        %v2524 = vsub.f32 %v1187, %v2444
        %v2525 = vsub.f32 %v1191, %v2447
        %v2526 = vsub.f32 %v1193, %v2447
        %v2527 = vsub.f32 %v1197, %v2450
        %v2528 = vsub.f32 %v1199, %v2450
        %v2529 = vsub.f32 %v1203, %v2453
        %v2530 = vsub.f32 %v1205, %v2453
        %v2531 = vsub.f32 %v1209, %v2456
        %v2532 = vsub.f32 %v1211, %v2456
        %v2533 = vsub.f32 %v1215, %v2459
        %v2534 = vsub.f32 %v1217, %v2459
        %v2535 = vsub.f32 %v1221, %v2462
        %v2536 = vsub.f32 %v1223, %v2462
        %v2537 = vsub.f32 %v1227, %v2465
        %v2538 = vsub.f32 %v1229, %v2465
        %v2539 = vsub.f32 %v1233, %v2468
        %v2540 = vsub.f32 %v1235, %v2468
        %v2541 = vsub.f32 %v1239, %v2471
        %v2542 = vsub.f32 %v1241, %v2471
        %v2543 = vsub.f32 %v1245, %v2474
        %v2544 = vsub.f32 %v1247, %v2474
        %v2545 = vsub.f32 %v1251, %v2477
        %v2546 = vsub.f32 %v1253, %v2477
        %v2547 = vsub.f32 %v1257, %v2480
        %v2548 = vsub.f32 %v1259, %v2480
        %v2549 = vsub.f32 %v1263, %v2483
        %v2550 = vsub.f32 %v1265, %v2483
        %v2551 = vsub.f32 %v1269, %v2486
        %v2552 = vsub.f32 %v1271, %v2486
        %v2553 = vsub.f32 %v1275, %v2489
        %v2554 = vsub.f32 %v1277, %v2489
        %v2555 = vsub.f32 %v1281, %v2492
        %v2556 = vsub.f32 %v1283, %v2492
        %v2557 = vmul.f32 %v2493, 1.442695
        %v2558 = vpow.pop %v2557
        %v2559 = vmul.f32 %v2494, 1.442695
        %v2560 = vpow.pop %v2559
        %v2561 = vmul.f32 %v2495, 1.442695
        %v2562 = vpow.pop %v2561
        %v2563 = vmul.f32 %v2496, 1.442695
        %v2564 = vpow.pop %v2563
        %v2565 = vmul.f32 %v2497, 1.442695
        %v2566 = vpow.pop %v2565
        %v2567 = vmul.f32 %v2498, 1.442695
        %v2568 = vpow.pop %v2567
        %v2569 = vmul.f32 %v2499, 1.442695
        %v2570 = vpow.pop %v2569
        %v2571 = vmul.f32 %v2500, 1.442695
        %v2572 = vpow.pop %v2571
        %v2573 = vmul.f32 %v2501, 1.442695
        %v2574 = vpow.pop %v2573
        %v2575 = vmul.f32 %v2502, 1.442695
        %v2576 = vpow.pop %v2575
        %v2577 = vmul.f32 %v2503, 1.442695
        %v2578 = vpow.pop %v2577
        %v2579 = vmul.f32 %v2504, 1.442695
        %v2580 = vpow.pop %v2579
        %v2581 = vmul.f32 %v2505, 1.442695
        %v2582 = vpow.pop %v2581
        %v2583 = vmul.f32 %v2506, 1.442695
        %v2584 = vpow.pop %v2583
        %v2585 = vmul.f32 %v2507, 1.442695
        %v2586 = vpow.pop %v2585
        %v2587 = vmul.f32 %v2508, 1.442695
        %v2588 = vpow.pop %v2587
        %v2589 = vmul.f32 %v2509, 1.442695
        %v2590 = vpow.pop %v2589
        %v2591 = vmul.f32 %v2510, 1.442695
        %v2592 = vpow.pop %v2591
        %v2593 = vmul.f32 %v2511, 1.442695
        %v2594 = vpow.pop %v2593
        %v2595 = vmul.f32 %v2512, 1.442695
        %v2596 = vpow.pop %v2595
        %v2597 = vmul.f32 %v2513, 1.442695
        %v2598 = vpow.pop %v2597
        %v2599 = vmul.f32 %v2514, 1.442695
        %v2600 = vpow.pop %v2599
        %v2601 = vmul.f32 %v2515, 1.442695
        %v2602 = vpow.pop %v2601
        %v2603 = vmul.f32 %v2516, 1.442695
        %v2604 = vpow.pop %v2603
        %v2605 = vmul.f32 %v2517, 1.442695
        %v2606 = vpow.pop %v2605
        %v2607 = vmul.f32 %v2518, 1.442695
        %v2608 = vpow.pop %v2607
        %v2609 = vmul.f32 %v2519, 1.442695
        %v2610 = vpow.pop %v2609
        %v2611 = vmul.f32 %v2520, 1.442695
        %v2612 = vpow.pop %v2611
        %v2613 = vmul.f32 %v2521, 1.442695
        %v2614 = vpow.pop %v2613
        %v2615 = vmul.f32 %v2522, 1.442695
        %v2616 = vpow.pop %v2615
        %v2617 = vmul.f32 %v2523, 1.442695
        %v2618 = vpow.pop %v2617
        %v2619 = vmul.f32 %v2524, 1.442695
        %v2620 = vpow.pop %v2619
        %v2621 = vmul.f32 %v2525, 1.442695
        %v2622 = vpow.pop %v2621
        %v2623 = vmul.f32 %v2526, 1.442695
        %v2624 = vpow.pop %v2623
        %v2625 = vmul.f32 %v2527, 1.442695
        %v2626 = vpow.pop %v2625
        %v2627 = vmul.f32 %v2528, 1.442695
        %v2628 = vpow.pop %v2627
        %v2629 = vmul.f32 %v2529, 1.442695
        %v2630 = vpow.pop %v2629
        %v2631 = vmul.f32 %v2530, 1.442695
        %v2632 = vpow.pop %v2631
        %v2633 = vmul.f32 %v2531, 1.442695
        %v2634 = vpow.pop %v2633
        %v2635 = vmul.f32 %v2532, 1.442695
        %v2636 = vpow.pop %v2635
        %v2637 = vmul.f32 %v2533, 1.442695
        %v2638 = vpow.pop %v2637
        %v2639 = vmul.f32 %v2534, 1.442695
        %v2640 = vpow.pop %v2639
        %v2641 = vmul.f32 %v2535, 1.442695
        %v2642 = vpow.pop %v2641
        %v2643 = vmul.f32 %v2536, 1.442695
        %v2644 = vpow.pop %v2643
        %v2645 = vmul.f32 %v2537, 1.442695
        %v2646 = vpow.pop %v2645
        %v2647 = vmul.f32 %v2538, 1.442695
        %v2648 = vpow.pop %v2647
        %v2649 = vmul.f32 %v2539, 1.442695
        %v2650 = vpow.pop %v2649
        %v2651 = vmul.f32 %v2540, 1.442695
        %v2652 = vpow.pop %v2651
        %v2653 = vmul.f32 %v2541, 1.442695
        %v2654 = vpow.pop %v2653
        %v2655 = vmul.f32 %v2542, 1.442695
        %v2656 = vpow.pop %v2655
        %v2657 = vmul.f32 %v2543, 1.442695
        %v2658 = vpow.pop %v2657
        %v2659 = vmul.f32 %v2544, 1.442695
        %v2660 = vpow.pop %v2659
        %v2661 = vmul.f32 %v2545, 1.442695
        %v2662 = vpow.pop %v2661
        %v2663 = vmul.f32 %v2546, 1.442695
        %v2664 = vpow.pop %v2663
        %v2665 = vmul.f32 %v2547, 1.442695
        %v2666 = vpow.pop %v2665
        %v2667 = vmul.f32 %v2548, 1.442695
        %v2668 = vpow.pop %v2667
        %v2669 = vmul.f32 %v2549, 1.442695
        %v2670 = vpow.pop %v2669
        %v2671 = vmul.f32 %v2550, 1.442695
        %v2672 = vpow.pop %v2671
        %v2673 = vmul.f32 %v2551, 1.442695
        %v2674 = vpow.pop %v2673
        %v2675 = vmul.f32 %v2552, 1.442695
        %v2676 = vpow.pop %v2675
        %v2677 = vmul.f32 %v2553, 1.442695
        %v2678 = vpow.pop %v2677
        %v2679 = vmul.f32 %v2554, 1.442695
        %v2680 = vpow.pop %v2679
        %v2681 = vmul.f32 %v2555, 1.442695
        %v2682 = vpow.pop %v2681
        %v2683 = vmul.f32 %v2556, 1.442695
        %v2684 = vpow.pop %v2683
        %v2685 = vadd.f32 %v2558, %v2560
        %2686 = vadd.xlane.f32.xlu0 %v2685
        %v2687 = vpop.xlane.xlu0 %2686
        %v2688 = vadd.f32 %v2562, %v2564
        %2689 = vadd.xlane.f32.xlu0 %v2688
        %v2690 = vpop.xlane.xlu0 %2689
        %v2691 = vadd.f32 %v2566, %v2568
        %2692 = vadd.xlane.f32.xlu0 %v2691
        %v2693 = vpop.xlane.xlu0 %2692
        %v2694 = vadd.f32 %v2570, %v2572
        %2695 = vadd.xlane.f32.xlu0 %v2694
        %v2696 = vpop.xlane.xlu0 %2695
        %v2697 = vadd.f32 %v2574, %v2576
        %2698 = vadd.xlane.f32.xlu0 %v2697
        %v2699 = vpop.xlane.xlu0 %2698
        %v2700 = vadd.f32 %v2578, %v2580
        %2701 = vadd.xlane.f32.xlu0 %v2700
        %v2702 = vpop.xlane.xlu0 %2701
        %v2703 = vadd.f32 %v2582, %v2584
        %2704 = vadd.xlane.f32.xlu0 %v2703
        %v2705 = vpop.xlane.xlu0 %2704
        %v2706 = vadd.f32 %v2586, %v2588
        %2707 = vadd.xlane.f32.xlu0 %v2706
        %v2708 = vpop.xlane.xlu0 %2707
        %v2709 = vadd.f32 %v2590, %v2592
        %2710 = vadd.xlane.f32.xlu0 %v2709
        %v2711 = vpop.xlane.xlu0 %2710
        %v2712 = vadd.f32 %v2594, %v2596
        %2713 = vadd.xlane.f32.xlu0 %v2712
        %v2714 = vpop.xlane.xlu0 %2713
        %v2715 = vadd.f32 %v2598, %v2600
        %2716 = vadd.xlane.f32.xlu0 %v2715
        %v2717 = vpop.xlane.xlu0 %2716
        %v2718 = vadd.f32 %v2602, %v2604
        %2719 = vadd.xlane.f32.xlu0 %v2718
        %v2720 = vpop.xlane.xlu0 %2719
        %v2721 = vadd.f32 %v2606, %v2608
        %2722 = vadd.xlane.f32.xlu0 %v2721
        %v2723 = vpop.xlane.xlu0 %2722
        %v2724 = vadd.f32 %v2610, %v2612
        %2725 = vadd.xlane.f32.xlu0 %v2724
        %v2726 = vpop.xlane.xlu0 %2725
        %v2727 = vadd.f32 %v2614, %v2616
        %2728 = vadd.xlane.f32.xlu0 %v2727
        %v2729 = vpop.xlane.xlu0 %2728
        %v2730 = vadd.f32 %v2618, %v2620
        %2731 = vadd.xlane.f32.xlu0 %v2730
        %v2732 = vpop.xlane.xlu0 %2731
        %v2733 = vadd.f32 %v2622, %v2624
        %2734 = vadd.xlane.f32.xlu0 %v2733
        %v2735 = vpop.xlane.xlu0 %2734
        %v2736 = vadd.f32 %v2626, %v2628
        %2737 = vadd.xlane.f32.xlu0 %v2736
        %v2738 = vpop.xlane.xlu0 %2737
        %v2739 = vadd.f32 %v2630, %v2632
        %2740 = vadd.xlane.f32.xlu0 %v2739
        %v2741 = vpop.xlane.xlu0 %2740
        %v2742 = vadd.f32 %v2634, %v2636
        %2743 = vadd.xlane.f32.xlu0 %v2742
        %v2744 = vpop.xlane.xlu0 %2743
        %v2745 = vadd.f32 %v2638, %v2640
        %2746 = vadd.xlane.f32.xlu0 %v2745
        %v2747 = vpop.xlane.xlu0 %2746
        %v2748 = vadd.f32 %v2642, %v2644
        %2749 = vadd.xlane.f32.xlu0 %v2748
        %v2750 = vpop.xlane.xlu0 %2749
        %v2751 = vadd.f32 %v2646, %v2648
        %2752 = vadd.xlane.f32.xlu0 %v2751
        %v2753 = vpop.xlane.xlu0 %2752
        %v2754 = vadd.f32 %v2650, %v2652
        %2755 = vadd.xlane.f32.xlu0 %v2754
        %v2756 = vpop.xlane.xlu0 %2755
        %v2757 = vadd.f32 %v2654, %v2656
        %2758 = vadd.xlane.f32.xlu0 %v2757
        %v2759 = vpop.xlane.xlu0 %2758
        %v2760 = vadd.f32 %v2658, %v2660
        %2761 = vadd.xlane.f32.xlu0 %v2760
        %v2762 = vpop.xlane.xlu0 %2761
        %v2763 = vadd.f32 %v2662, %v2664
        %2764 = vadd.xlane.f32.xlu0 %v2763
        %v2765 = vpop.xlane.xlu0 %2764
        %v2766 = vadd.f32 %v2666, %v2668
        %2767 = vadd.xlane.f32.xlu0 %v2766
        %v2768 = vpop.xlane.xlu0 %2767
        %v2769 = vadd.f32 %v2670, %v2672
        %2770 = vadd.xlane.f32.xlu0 %v2769
        %v2771 = vpop.xlane.xlu0 %2770
        %v2772 = vadd.f32 %v2674, %v2676
        %2773 = vadd.xlane.f32.xlu0 %v2772
        %v2774 = vpop.xlane.xlu0 %2773
        %v2775 = vadd.f32 %v2678, %v2680
        %2776 = vadd.xlane.f32.xlu0 %v2775
        %v2777 = vpop.xlane.xlu0 %2776
        %v2778 = vadd.f32 %v2682, %v2684
        %2779 = vadd.xlane.f32.xlu0 %v2778
        %v2780 = vpop.xlane.xlu0 %2779
        %v2781 = vrcp.pop %v2687
        %v2782 = vrcp.pop %v2690
        %v2783 = vrcp.pop %v2693
        %v2784 = vrcp.pop %v2696
        %v2785 = vrcp.pop %v2699
        %v2786 = vrcp.pop %v2702
        %v2787 = vrcp.pop %v2705
        %v2788 = vrcp.pop %v2708
        %v2789 = vrcp.pop %v2711
        %v2790 = vrcp.pop %v2714
        %v2791 = vrcp.pop %v2717
        %v2792 = vrcp.pop %v2720
        %v2793 = vrcp.pop %v2723
        %v2794 = vrcp.pop %v2726
        %v2795 = vrcp.pop %v2729
        %v2796 = vrcp.pop %v2732
        %v2797 = vrcp.pop %v2735
        %v2798 = vrcp.pop %v2738
        %v2799 = vrcp.pop %v2741
        %v2800 = vrcp.pop %v2744
        %v2801 = vrcp.pop %v2747
        %v2802 = vrcp.pop %v2750
        %v2803 = vrcp.pop %v2753
        %v2804 = vrcp.pop %v2756
        %v2805 = vrcp.pop %v2759
        %v2806 = vrcp.pop %v2762
        %v2807 = vrcp.pop %v2765
        %v2808 = vrcp.pop %v2768
        %v2809 = vrcp.pop %v2771
        %v2810 = vrcp.pop %v2774
        %v2811 = vrcp.pop %v2777
        %v2812 = vrcp.pop %v2780
        %v2813 = vmul.f32 %v388, %v2781
        %v2814 = vmul.f32 %v393, %v2782
        %v2815 = vmul.f32 %v398, %v2783
        %v2816 = vmul.f32 %v403, %v2784
        %v2817 = vmul.f32 %v408, %v2785
        %v2818 = vmul.f32 %v413, %v2786
        %v2819 = vmul.f32 %v418, %v2787
        %v2820 = vmul.f32 %v423, %v2788
        %v2821 = vmul.f32 %v428, %v2789
        %v2822 = vmul.f32 %v433, %v2790
        %v2823 = vmul.f32 %v438, %v2791
        %v2824 = vmul.f32 %v443, %v2792
        %v2825 = vmul.f32 %v448, %v2793
        %v2826 = vmul.f32 %v453, %v2794
        %v2827 = vmul.f32 %v458, %v2795
        %v2828 = vmul.f32 %v463, %v2796
        %v2829 = vmul.f32 %v468, %v2797
        %v2830 = vmul.f32 %v473, %v2798
        %v2831 = vmul.f32 %v478, %v2799
        %v2832 = vmul.f32 %v483, %v2800
        %v2833 = vmul.f32 %v488, %v2801
        %v2834 = vmul.f32 %v493, %v2802
        %v2835 = vmul.f32 %v498, %v2803
        %v2836 = vmul.f32 %v503, %v2804
        %v2837 = vmul.f32 %v508, %v2805
        %v2838 = vmul.f32 %v513, %v2806
        %v2839 = vmul.f32 %v518, %v2807
        %v2840 = vmul.f32 %v523, %v2808
        %v2841 = vmul.f32 %v528, %v2809
        %v2842 = vmul.f32 %v533, %v2810
        %v2843 = vmul.f32 %v538, %v2811
        %v2844 = vmul.f32 %v543, %v2812
        %v2845 = vsel %vm1673, 0.0, %v2813
        %v2846 = vsel %vm1673, 0.0, %v2814
        %v2847 = vsel %vm1673, 0.0, %v2815
        %v2848 = vsel %vm1673, 0.0, %v2816
        %v2849 = vsel %vm1673, 0.0, %v2817
        %v2850 = vsel %vm1673, 0.0, %v2818
        %v2851 = vsel %vm1673, 0.0, %v2819
        %v2852 = vsel %vm1673, 0.0, %v2820
        %v2853 = vsel %vm1673, 0.0, %v2821
        %v2854 = vsel %vm1673, 0.0, %v2822
        %v2855 = vsel %vm1673, 0.0, %v2823
        %v2856 = vsel %vm1673, 0.0, %v2824
        %v2857 = vsel %vm1673, 0.0, %v2825
        %v2858 = vsel %vm1673, 0.0, %v2826
        %v2859 = vsel %vm1673, 0.0, %v2827
        %v2860 = vsel %vm1673, 0.0, %v2828
        %v2861 = vsel %vm1673, 0.0, %v2829
        %v2862 = vsel %vm1673, 0.0, %v2830
        %v2863 = vsel %vm1673, 0.0, %v2831
        %v2864 = vsel %vm1673, 0.0, %v2832
        %v2865 = vsel %vm1673, 0.0, %v2833
        %v2866 = vsel %vm1673, 0.0, %v2834
        %v2867 = vsel %vm1673, 0.0, %v2835
        %v2868 = vsel %vm1673, 0.0, %v2836
        %v2869 = vsel %vm1673, 0.0, %v2837
        %v2870 = vsel %vm1673, 0.0, %v2838
        %v2871 = vsel %vm1673, 0.0, %v2839
        %v2872 = vsel %vm1673, 0.0, %v2840
        %v2873 = vsel %vm1673, 0.0, %v2841
        %v2874 = vsel %vm1673, 0.0, %v2842
        %v2875 = vsel %vm1673, 0.0, %v2843
        %v2876 = vsel %vm1673, 0.0, %v2844
        %v2877 = vpack.c.bf16 %v2846, %v2845
        %v2878 = vpack.c.bf16 %v2848, %v2847
        %v2879 = vpack.c.bf16 %v2850, %v2849
        %v2880 = vpack.c.bf16 %v2852, %v2851
        %v2881 = vpack.c.bf16 %v2854, %v2853
        %v2882 = vpack.c.bf16 %v2856, %v2855
        %v2883 = vpack.c.bf16 %v2858, %v2857
        %v2884 = vpack.c.bf16 %v2860, %v2859
        %v2885 = vpack.c.bf16 %v2862, %v2861
        %v2886 = vpack.c.bf16 %v2864, %v2863
        %v2887 = vpack.c.bf16 %v2866, %v2865
        %v2888 = vpack.c.bf16 %v2868, %v2867
        %v2889 = vpack.c.bf16 %v2870, %v2869
        %v2890 = vpack.c.bf16 %v2872, %v2871
        %v2891 = vpack.c.bf16 %v2874, %v2873
        %v2892 = vpack.c.bf16 %v2876, %v2875
        %v2893 = vpack.c.bf16 %v2562, %v2558
        %v2894 = vpack.c.bf16 %v2564, %v2560
        %v2895 = vpack.c.bf16 %v2570, %v2566
        %v2896 = vpack.c.bf16 %v2572, %v2568
        %v2897 = vpack.c.bf16 %v2578, %v2574
        %v2898 = vpack.c.bf16 %v2580, %v2576
        %v2899 = vpack.c.bf16 %v2586, %v2582
        %v2900 = vpack.c.bf16 %v2588, %v2584
        %v2901 = vpack.c.bf16 %v2594, %v2590
        %v2902 = vpack.c.bf16 %v2596, %v2592
        %v2903 = vpack.c.bf16 %v2602, %v2598
        %v2904 = vpack.c.bf16 %v2604, %v2600
        %v2905 = vpack.c.bf16 %v2610, %v2606
        %v2906 = vpack.c.bf16 %v2612, %v2608
        %v2907 = vpack.c.bf16 %v2618, %v2614
        %v2908 = vpack.c.bf16 %v2620, %v2616
        %v2909 = vpack.c.bf16 %v2626, %v2622
        %v2910 = vpack.c.bf16 %v2628, %v2624
        %v2911 = vpack.c.bf16 %v2634, %v2630
        %v2912 = vpack.c.bf16 %v2636, %v2632
        %v2913 = vpack.c.bf16 %v2642, %v2638
        %v2914 = vpack.c.bf16 %v2644, %v2640
        %v2915 = vpack.c.bf16 %v2650, %v2646
        %v2916 = vpack.c.bf16 %v2652, %v2648
        %v2917 = vpack.c.bf16 %v2658, %v2654
        %v2918 = vpack.c.bf16 %v2660, %v2656
        %v2919 = vpack.c.bf16 %v2666, %v2662
        %v2920 = vpack.c.bf16 %v2668, %v2664
        %v2921 = vpack.c.bf16 %v2674, %v2670
        %v2922 = vpack.c.bf16 %v2676, %v2672
        %v2923 = vpack.c.bf16 %v2682, %v2678
        %v2924 = vpack.c.bf16 %v2684, %v2680
        %2925 = vxpose.xlu0.c.b16.start [1/8] %v2893, 128
        %2926 = vxpose.xlu0.c.b16.cont [2/8] %v2895, 128
        %2927 = vxpose.xlu0.c.b16.cont [3/8] %v2897, 128
        %2928 = vxpose.xlu0.c.b16.cont [4/8] %v2899, 128
        %2929 = vxpose.xlu0.c.b16.cont [5/8] %v2901, 128
        %2930 = vxpose.xlu0.c.b16.cont [6/8] %v2903, 128
        %2931 = vxpose.xlu0.c.b16.cont [7/8] %v2905, 128
        %2932 = vxpose.xlu0.c.b16.end [8/8] %v2907, 128
        %v2933 = vpop.trf.xlu0
        %v2934 = vpop.trf.xlu0
        %v2935 = vpop.trf.xlu0
        %v2936 = vpop.trf.xlu0
        %v2937 = vpop.trf.xlu0
        %v2938 = vpop.trf.xlu0
        %v2939 = vpop.trf.xlu0
        %v2940 = vpop.trf.xlu0
        %2941 = vxpose.xlu0.c.b16.start [1/8] %v2894, 128
        %2942 = vxpose.xlu0.c.b16.cont [2/8] %v2896, 128
        %2943 = vxpose.xlu0.c.b16.cont [3/8] %v2898, 128
        %2944 = vxpose.xlu0.c.b16.cont [4/8] %v2900, 128
        %2945 = vxpose.xlu0.c.b16.cont [5/8] %v2902, 128
        %2946 = vxpose.xlu0.c.b16.cont [6/8] %v2904, 128
        %2947 = vxpose.xlu0.c.b16.cont [7/8] %v2906, 128
        %2948 = vxpose.xlu0.c.b16.end [8/8] %v2908, 128
        %v2949 = vpop.trf.xlu0
        %v2950 = vpop.trf.xlu0
        %v2951 = vpop.trf.xlu0
        %v2952 = vpop.trf.xlu0
        %v2953 = vpop.trf.xlu0
        %v2954 = vpop.trf.xlu0
        %v2955 = vpop.trf.xlu0
        %v2956 = vpop.trf.xlu0
        %2957 = vxpose.xlu0.c.b16.start [1/8] %v2909, 128
        %2958 = vxpose.xlu0.c.b16.cont [2/8] %v2911, 128
        %2959 = vxpose.xlu0.c.b16.cont [3/8] %v2913, 128
        %2960 = vxpose.xlu0.c.b16.cont [4/8] %v2915, 128
        %2961 = vxpose.xlu0.c.b16.cont [5/8] %v2917, 128
        %2962 = vxpose.xlu0.c.b16.cont [6/8] %v2919, 128
        %2963 = vxpose.xlu0.c.b16.cont [7/8] %v2921, 128
        %2964 = vxpose.xlu0.c.b16.end [8/8] %v2923, 128
        %v2965 = vpop.trf.xlu0
        %v2966 = vpop.trf.xlu0
        %v2967 = vpop.trf.xlu0
        %v2968 = vpop.trf.xlu0
        %v2969 = vpop.trf.xlu0
        %v2970 = vpop.trf.xlu0
        %v2971 = vpop.trf.xlu0
        %v2972 = vpop.trf.xlu0
        %2973 = vxpose.xlu0.c.b16.start [1/8] %v2910, 128
        %2974 = vxpose.xlu0.c.b16.cont [2/8] %v2912, 128
        %2975 = vxpose.xlu0.c.b16.cont [3/8] %v2914, 128
        %2976 = vxpose.xlu0.c.b16.cont [4/8] %v2916, 128
        %2977 = vxpose.xlu0.c.b16.cont [5/8] %v2918, 128
        %2978 = vxpose.xlu0.c.b16.cont [6/8] %v2920, 128
        %2979 = vxpose.xlu0.c.b16.cont [7/8] %v2922, 128
        %2980 = vxpose.xlu0.c.b16.end [8/8] %v2924, 128
        %v2981 = vpop.trf.xlu0
        %v2982 = vpop.trf.xlu0
        %v2983 = vpop.trf.xlu0
        %v2984 = vpop.trf.xlu0
        %v2985 = vpop.trf.xlu0
        %v2986 = vpop.trf.xlu0
        %v2987 = vpop.trf.xlu0
        %v2988 = vpop.trf.xlu0
        %2989 = vmatprep.subr.bf16.mxu0 0
        %2990 = vmatpush1.bf16.msra.mxu0 %v2877
        %2991 = vmatprep.subr.bf16.mxu0 0
        %2992 = vmatpush1.bf16.msra.mxu0 %v2878
        %2993 = vmatprep.subr.bf16.mxu0 0
        %2994 = vmatpush1.bf16.msra.mxu0 %v2879
        %2995 = vmatprep.subr.bf16.mxu0 0
        %2996 = vmatpush1.bf16.msra.mxu0 %v2880
        %2997 = vmatprep.subr.bf16.mxu0 0
        %2998 = vmatpush1.bf16.msra.mxu0 %v2881
        %2999 = vmatprep.subr.bf16.mxu0 0
        %3000 = vmatpush1.bf16.msra.mxu0 %v2882
        %3001 = vmatprep.subr.bf16.mxu0 0
        %3002 = vmatpush1.bf16.msra.mxu0 %v2883
        %3003 = vmatprep.subr.bf16.mxu0 0
        %3004 = vmatpush1.bf16.msra.mxu0 %v2884
        %3005 = vmatprep.subr.bf16.mxu0 0
        %3006 = vmatpush1.bf16.msra.mxu0 %v2885
        %3007 = vmatprep.subr.bf16.mxu0 0
        %3008 = vmatpush1.bf16.msra.mxu0 %v2886
        %3009 = vmatprep.subr.bf16.mxu0 0
        %3010 = vmatpush1.bf16.msra.mxu0 %v2887
        %3011 = vmatprep.subr.bf16.mxu0 0
        %3012 = vmatpush1.bf16.msra.mxu0 %v2888
        %3013 = vmatprep.subr.bf16.mxu0 0
        %3014 = vmatpush1.bf16.msra.mxu0 %v2889
        %3015 = vmatprep.subr.bf16.mxu0 0
        %3016 = vmatpush1.bf16.msra.mxu0 %v2890
        %3017 = vmatprep.subr.bf16.mxu0 0
        %3018 = vmatpush1.bf16.msra.mxu0 %v2891
        %3019 = vmatprep.subr.bf16.mxu0 0
        %3020 = vmatpush1.bf16.msra.mxu0 %v2892
        %3021 = vmatprep.mubr.bf16.mxu0 %v2965
        %3022 = vmatmul.mubr.bf16.gmra.mrb[0].mxu0 %v2933
        %v3023 = vpop.f32.mrb[0].mxu0
        %v3024 = vadd.f32 0.0, %v3023
        %v3025 = vpop.f32.mrb[0].mxu0
        %v3026 = vpop.f32.mrb[0].mxu0
        %v3027 = vadd.f32 0.0, %v3026
        %v3028 = vpop.f32.mrb[0].mxu0
        %3029 = vmatprep.mubr.bf16.mxu0 %v2966
        %3030 = vmatmul.mubr.bf16.gmra.mrb[0].mxu0 %v2934
        %v3031 = vpop.f32.mrb[0].mxu0
        %v3032 = vadd.f32 0.0, %v3031
        %v3033 = vpop.f32.mrb[0].mxu0
        %v3034 = vpop.f32.mrb[0].mxu0
        %v3035 = vadd.f32 0.0, %v3034
        %v3036 = vpop.f32.mrb[0].mxu0
        %3037 = vmatprep.mubr.bf16.mxu0 %v2967
        %3038 = vmatmul.mubr.bf16.gmra.mrb[0].mxu0 %v2935
        %v3039 = vpop.f32.mrb[0].mxu0
        %v3040 = vadd.f32 0.0, %v3039
        %v3041 = vpop.f32.mrb[0].mxu0
        %v3042 = vpop.f32.mrb[0].mxu0
        %v3043 = vadd.f32 0.0, %v3042
        %v3044 = vpop.f32.mrb[0].mxu0
        %3045 = vmatprep.mubr.bf16.mxu0 %v2968
        %3046 = vmatmul.mubr.bf16.gmra.mrb[0].mxu0 %v2936
        %v3047 = vpop.f32.mrb[0].mxu0
        %v3048 = vadd.f32 0.0, %v3047
        %v3049 = vpop.f32.mrb[0].mxu0
        %v3050 = vpop.f32.mrb[0].mxu0
        %v3051 = vadd.f32 0.0, %v3050
        %v3052 = vpop.f32.mrb[0].mxu0
        %3053 = vmatprep.mubr.bf16.mxu0 %v2969
        %3054 = vmatmul.mubr.bf16.gmra.mrb[0].mxu0 %v2937
        %v3055 = vpop.f32.mrb[0].mxu0
        %v3056 = vadd.f32 0.0, %v3055
        %v3057 = vpop.f32.mrb[0].mxu0
        %v3058 = vpop.f32.mrb[0].mxu0
        %v3059 = vadd.f32 0.0, %v3058
        %v3060 = vpop.f32.mrb[0].mxu0
        %3061 = vmatprep.mubr.bf16.mxu0 %v2970
        %3062 = vmatmul.mubr.bf16.gmra.mrb[0].mxu0 %v2938
        %v3063 = vpop.f32.mrb[0].mxu0
        %v3064 = vadd.f32 0.0, %v3063
        %v3065 = vpop.f32.mrb[0].mxu0
        %v3066 = vpop.f32.mrb[0].mxu0
        %v3067 = vadd.f32 0.0, %v3066
        %v3068 = vpop.f32.mrb[0].mxu0
        %3069 = vmatprep.mubr.bf16.mxu0 %v2971
        %3070 = vmatmul.mubr.bf16.gmra.mrb[0].mxu0 %v2939
        %v3071 = vpop.f32.mrb[0].mxu0
        %v3072 = vadd.f32 0.0, %v3071
        %v3073 = vpop.f32.mrb[0].mxu0
        %v3074 = vpop.f32.mrb[0].mxu0
        %v3075 = vadd.f32 0.0, %v3074
        %v3076 = vpop.f32.mrb[0].mxu0
        %3077 = vmatprep.mubr.bf16.mxu0 %v2972
        %3078 = vmatmul.mubr.bf16.gmra.mrb[0].mxu0 %v2940
        %v3079 = vpop.f32.mrb[0].mxu0
        %v3080 = vadd.f32 0.0, %v3079
        %v3081 = vpop.f32.mrb[0].mxu0
        %v3082 = vpop.f32.mrb[0].mxu0
        %v3083 = vadd.f32 0.0, %v3082
        %v3084 = vpop.f32.mrb[0].mxu0
        %3085 = vmatprep.mubr.bf16.mxu0 %v2981
        %3086 = vmatmul.mubr.bf16.gmra.mrb[0].mxu0 %v2949
        %v3087 = vpop.f32.mrb[0].mxu0
        %v3088 = vadd.f32 0.0, %v3087
        %v3089 = vpop.f32.mrb[0].mxu0
        %v3090 = vpop.f32.mrb[0].mxu0
        %v3091 = vadd.f32 0.0, %v3090
        %v3092 = vpop.f32.mrb[0].mxu0
        %3093 = vmatprep.mubr.bf16.mxu0 %v2982
        %3094 = vmatmul.mubr.bf16.gmra.mrb[0].mxu0 %v2950
        %v3095 = vpop.f32.mrb[0].mxu0
        %v3096 = vadd.f32 0.0, %v3095
        %v3097 = vpop.f32.mrb[0].mxu0
        %v3098 = vpop.f32.mrb[0].mxu0
        %v3099 = vadd.f32 0.0, %v3098
        %v3100 = vpop.f32.mrb[0].mxu0
        %3101 = vmatprep.mubr.bf16.mxu0 %v2983
        %3102 = vmatmul.mubr.bf16.gmra.mrb[0].mxu0 %v2951
        %v3103 = vpop.f32.mrb[0].mxu0
        %v3104 = vadd.f32 0.0, %v3103
        %v3105 = vpop.f32.mrb[0].mxu0
        %v3106 = vpop.f32.mrb[0].mxu0
        %v3107 = vadd.f32 0.0, %v3106
        %v3108 = vpop.f32.mrb[0].mxu0
        %3109 = vmatprep.mubr.bf16.mxu0 %v2984
        %3110 = vmatmul.mubr.bf16.gmra.mrb[0].mxu0 %v2952
        %v3111 = vpop.f32.mrb[0].mxu0
        %v3112 = vadd.f32 0.0, %v3111
        %v3113 = vpop.f32.mrb[0].mxu0
        %v3114 = vpop.f32.mrb[0].mxu0
        %v3115 = vadd.f32 0.0, %v3114
        %v3116 = vpop.f32.mrb[0].mxu0
        %3117 = vmatprep.mubr.bf16.mxu0 %v2985
        %3118 = vmatmul.mubr.bf16.gmra.mrb[0].mxu0 %v2953
        %v3119 = vpop.f32.mrb[0].mxu0
        %v3120 = vadd.f32 0.0, %v3119
        %v3121 = vpop.f32.mrb[0].mxu0
        %v3122 = vpop.f32.mrb[0].mxu0
        %v3123 = vadd.f32 0.0, %v3122
        %v3124 = vpop.f32.mrb[0].mxu0
        %3125 = vmatprep.mubr.bf16.mxu0 %v2986
        %3126 = vmatmul.mubr.bf16.gmra.mrb[0].mxu0 %v2954
        %v3127 = vpop.f32.mrb[0].mxu0
        %v3128 = vadd.f32 0.0, %v3127
        %v3129 = vpop.f32.mrb[0].mxu0
        %v3130 = vpop.f32.mrb[0].mxu0
        %v3131 = vadd.f32 0.0, %v3130
        %v3132 = vpop.f32.mrb[0].mxu0
        %3133 = vmatprep.mubr.bf16.mxu0 %v2987
        %3134 = vmatmul.mubr.bf16.gmra.mrb[0].mxu0 %v2955
        %v3135 = vpop.f32.mrb[0].mxu0
        %v3136 = vadd.f32 0.0, %v3135
        %v3137 = vpop.f32.mrb[0].mxu0
        %v3138 = vpop.f32.mrb[0].mxu0
        %v3139 = vadd.f32 0.0, %v3138
        %v3140 = vpop.f32.mrb[0].mxu0
        %3141 = vmatprep.mubr.bf16.mxu0 %v2988
        %3142 = vmatmul.mubr.bf16.gmra.mrb[0].mxu0 %v2956
        %v3143 = vpop.f32.mrb[0].mxu0
        %v3144 = vadd.f32 0.0, %v3143
        %v3145 = vpop.f32.mrb[0].mxu0
        %v3146 = vpop.f32.mrb[0].mxu0
        %v3147 = vadd.f32 0.0, %v3146
        %v3148 = vpop.f32.mrb[0].mxu0
        %3149 = vdwg.mxu0
        %s3150 = sld [smem:[#allocation2 + $0x1]]
        %v3151 = vstv %s3150
        %v3152 = vadd.f32 %v3024, %v3151
        %v3153 = vadd.f32 %v3027, %v3151
        %v3154 = vadd.f32 %v3032, %v3151
        %v3155 = vadd.f32 %v3035, %v3151
        %v3156 = vadd.f32 %v3040, %v3151
        %v3157 = vadd.f32 %v3043, %v3151
        %v3158 = vadd.f32 %v3048, %v3151
        %v3159 = vadd.f32 %v3051, %v3151
        %v3160 = vadd.f32 %v3056, %v3151
        %v3161 = vadd.f32 %v3059, %v3151
        %v3162 = vadd.f32 %v3064, %v3151
        %v3163 = vadd.f32 %v3067, %v3151
        %v3164 = vadd.f32 %v3072, %v3151
        %v3165 = vadd.f32 %v3075, %v3151
        %v3166 = vadd.f32 %v3080, %v3151
        %v3167 = vadd.f32 %v3083, %v3151
        %v3168 = vadd.f32 %v3088, %v3151
        %v3169 = vadd.f32 %v3091, %v3151
        %v3170 = vadd.f32 %v3096, %v3151
        %v3171 = vadd.f32 %v3099, %v3151
        %v3172 = vadd.f32 %v3104, %v3151
        %v3173 = vadd.f32 %v3107, %v3151
        %v3174 = vadd.f32 %v3112, %v3151
        %v3175 = vadd.f32 %v3115, %v3151
        %v3176 = vadd.f32 %v3120, %v3151
        %v3177 = vadd.f32 %v3123, %v3151
        %v3178 = vadd.f32 %v3128, %v3151
        %v3179 = vadd.f32 %v3131, %v3151
        %v3180 = vadd.f32 %v3136, %v3151
        %v3181 = vadd.f32 %v3139, %v3151
        %v3182 = vadd.f32 %v3144, %v3151
        %v3183 = vadd.f32 %v3147, %v3151
        %v3184 = vxor.u32 %v3152, 2147483648
        %v3185 = vxor.u32 %v3153, 2147483648
        %v3186 = vxor.u32 %v3154, 2147483648
        %v3187 = vxor.u32 %v3155, 2147483648
        %v3188 = vxor.u32 %v3156, 2147483648
        %v3189 = vxor.u32 %v3157, 2147483648
        %v3190 = vxor.u32 %v3158, 2147483648
        %v3191 = vxor.u32 %v3159, 2147483648
        %v3192 = vxor.u32 %v3160, 2147483648
        %v3193 = vxor.u32 %v3161, 2147483648
        %v3194 = vxor.u32 %v3162, 2147483648
        %v3195 = vxor.u32 %v3163, 2147483648
        %v3196 = vxor.u32 %v3164, 2147483648
        %v3197 = vxor.u32 %v3165, 2147483648
        %v3198 = vxor.u32 %v3166, 2147483648
        %v3199 = vxor.u32 %v3167, 2147483648
        %v3200 = vxor.u32 %v3168, 2147483648
        %v3201 = vxor.u32 %v3169, 2147483648
        %v3202 = vxor.u32 %v3170, 2147483648
        %v3203 = vxor.u32 %v3171, 2147483648
        %v3204 = vxor.u32 %v3172, 2147483648
        %v3205 = vxor.u32 %v3173, 2147483648
        %v3206 = vxor.u32 %v3174, 2147483648
        %v3207 = vxor.u32 %v3175, 2147483648
        %v3208 = vxor.u32 %v3176, 2147483648
        %v3209 = vxor.u32 %v3177, 2147483648
        %v3210 = vxor.u32 %v3178, 2147483648
        %v3211 = vxor.u32 %v3179, 2147483648
        %v3212 = vxor.u32 %v3180, 2147483648
        %v3213 = vxor.u32 %v3181, 2147483648
        %v3214 = vxor.u32 %v3182, 2147483648
        %v3215 = vxor.u32 %v3183, 2147483648
        %v3216 = vmul.f32 %v3184, 1.442695
        %v3217 = vpow.pop %v3216
        %v3218 = vmul.f32 %v3185, 1.442695
        %v3219 = vpow.pop %v3218
        %v3220 = vmul.f32 %v3186, 1.442695
        %v3221 = vpow.pop %v3220
        %v3222 = vmul.f32 %v3187, 1.442695
        %v3223 = vpow.pop %v3222
        %v3224 = vmul.f32 %v3188, 1.442695
        %v3225 = vpow.pop %v3224
        %v3226 = vmul.f32 %v3189, 1.442695
        %v3227 = vpow.pop %v3226
        %v3228 = vmul.f32 %v3190, 1.442695
        %v3229 = vpow.pop %v3228
        %v3230 = vmul.f32 %v3191, 1.442695
        %v3231 = vpow.pop %v3230
        %v3232 = vmul.f32 %v3192, 1.442695
        %v3233 = vpow.pop %v3232
        %v3234 = vmul.f32 %v3193, 1.442695
        %v3235 = vpow.pop %v3234
        %v3236 = vmul.f32 %v3194, 1.442695
        %v3237 = vpow.pop %v3236
        %v3238 = vmul.f32 %v3195, 1.442695
        %v3239 = vpow.pop %v3238
        %v3240 = vmul.f32 %v3196, 1.442695
        %v3241 = vpow.pop %v3240
        %v3242 = vmul.f32 %v3197, 1.442695
        %v3243 = vpow.pop %v3242
        %v3244 = vmul.f32 %v3198, 1.442695
        %v3245 = vpow.pop %v3244
        %v3246 = vmul.f32 %v3199, 1.442695
        %v3247 = vpow.pop %v3246
        %v3248 = vmul.f32 %v3200, 1.442695
        %v3249 = vpow.pop %v3248
        %v3250 = vmul.f32 %v3201, 1.442695
        %v3251 = vpow.pop %v3250
        %v3252 = vmul.f32 %v3202, 1.442695
        %v3253 = vpow.pop %v3252
        %v3254 = vmul.f32 %v3203, 1.442695
        %v3255 = vpow.pop %v3254
        %v3256 = vmul.f32 %v3204, 1.442695
        %v3257 = vpow.pop %v3256
        %v3258 = vmul.f32 %v3205, 1.442695
        %v3259 = vpow.pop %v3258
        %v3260 = vmul.f32 %v3206, 1.442695
        %v3261 = vpow.pop %v3260
        %v3262 = vmul.f32 %v3207, 1.442695
        %v3263 = vpow.pop %v3262
        %v3264 = vmul.f32 %v3208, 1.442695
        %v3265 = vpow.pop %v3264
        %v3266 = vmul.f32 %v3209, 1.442695
        %v3267 = vpow.pop %v3266
        %v3268 = vmul.f32 %v3210, 1.442695
        %v3269 = vpow.pop %v3268
        %v3270 = vmul.f32 %v3211, 1.442695
        %v3271 = vpow.pop %v3270
        %v3272 = vmul.f32 %v3212, 1.442695
        %v3273 = vpow.pop %v3272
        %v3274 = vmul.f32 %v3213, 1.442695
        %v3275 = vpow.pop %v3274
        %v3276 = vmul.f32 %v3214, 1.442695
        %v3277 = vpow.pop %v3276
        %v3278 = vmul.f32 %v3215, 1.442695
        %v3279 = vpow.pop %v3278
        %v3280 = vadd.f32 %v3217, 1.0
        %v3281 = vadd.f32 %v3219, 1.0
        %v3282 = vadd.f32 %v3221, 1.0
        %v3283 = vadd.f32 %v3223, 1.0
        %v3284 = vadd.f32 %v3225, 1.0
        %v3285 = vadd.f32 %v3227, 1.0
        %v3286 = vadd.f32 %v3229, 1.0
        %v3287 = vadd.f32 %v3231, 1.0
        %v3288 = vadd.f32 %v3233, 1.0
        %v3289 = vadd.f32 %v3235, 1.0
        %v3290 = vadd.f32 %v3237, 1.0
        %v3291 = vadd.f32 %v3239, 1.0
        %v3292 = vadd.f32 %v3241, 1.0
        %v3293 = vadd.f32 %v3243, 1.0
        %v3294 = vadd.f32 %v3245, 1.0
        %v3295 = vadd.f32 %v3247, 1.0
        %v3296 = vadd.f32 %v3249, 1.0
        %v3297 = vadd.f32 %v3251, 1.0
        %v3298 = vadd.f32 %v3253, 1.0
        %v3299 = vadd.f32 %v3255, 1.0
        %v3300 = vadd.f32 %v3257, 1.0
        %v3301 = vadd.f32 %v3259, 1.0
        %v3302 = vadd.f32 %v3261, 1.0
        %v3303 = vadd.f32 %v3263, 1.0
        %v3304 = vadd.f32 %v3265, 1.0
        %v3305 = vadd.f32 %v3267, 1.0
        %v3306 = vadd.f32 %v3269, 1.0
        %v3307 = vadd.f32 %v3271, 1.0
        %v3308 = vadd.f32 %v3273, 1.0
        %v3309 = vadd.f32 %v3275, 1.0
        %v3310 = vadd.f32 %v3277, 1.0
        %v3311 = vadd.f32 %v3279, 1.0
        %v3312 = vrcp.pop %v3280
        %v3313 = vmul.f32 1.0, %v3312
        %v3314 = vrcp.pop %v3281
        %v3315 = vmul.f32 1.0, %v3314
        %v3316 = vrcp.pop %v3282
        %v3317 = vmul.f32 1.0, %v3316
        %v3318 = vrcp.pop %v3283
        %v3319 = vmul.f32 1.0, %v3318
        %v3320 = vrcp.pop %v3284
        %v3321 = vmul.f32 1.0, %v3320
        %v3322 = vrcp.pop %v3285
        %v3323 = vmul.f32 1.0, %v3322
        %v3324 = vrcp.pop %v3286
        %v3325 = vmul.f32 1.0, %v3324
        %v3326 = vrcp.pop %v3287
        %v3327 = vmul.f32 1.0, %v3326
        %v3328 = vrcp.pop %v3288
        %v3329 = vmul.f32 1.0, %v3328
        %v3330 = vrcp.pop %v3289
        %v3331 = vmul.f32 1.0, %v3330
        %v3332 = vrcp.pop %v3290
        %v3333 = vmul.f32 1.0, %v3332
        %v3334 = vrcp.pop %v3291
        %v3335 = vmul.f32 1.0, %v3334
        %v3336 = vrcp.pop %v3292
        %v3337 = vmul.f32 1.0, %v3336
        %v3338 = vrcp.pop %v3293
        %v3339 = vmul.f32 1.0, %v3338
        %v3340 = vrcp.pop %v3294
        %v3341 = vmul.f32 1.0, %v3340
        %v3342 = vrcp.pop %v3295
        %v3343 = vmul.f32 1.0, %v3342
        %v3344 = vrcp.pop %v3296
        %v3345 = vmul.f32 1.0, %v3344
        %v3346 = vrcp.pop %v3297
        %v3347 = vmul.f32 1.0, %v3346
        %v3348 = vrcp.pop %v3298
        %v3349 = vmul.f32 1.0, %v3348
        %v3350 = vrcp.pop %v3299
        %v3351 = vmul.f32 1.0, %v3350
        %v3352 = vrcp.pop %v3300
        %v3353 = vmul.f32 1.0, %v3352
        %v3354 = vrcp.pop %v3301
        %v3355 = vmul.f32 1.0, %v3354
        %v3356 = vrcp.pop %v3302
        %v3357 = vmul.f32 1.0, %v3356
        %v3358 = vrcp.pop %v3303
        %v3359 = vmul.f32 1.0, %v3358
        %v3360 = vrcp.pop %v3304
        %v3361 = vmul.f32 1.0, %v3360
        %v3362 = vrcp.pop %v3305
        %v3363 = vmul.f32 1.0, %v3362
        %v3364 = vrcp.pop %v3306
        %v3365 = vmul.f32 1.0, %v3364
        %v3366 = vrcp.pop %v3307
        %v3367 = vmul.f32 1.0, %v3366
        %v3368 = vrcp.pop %v3308
        %v3369 = vmul.f32 1.0, %v3368
        %v3370 = vrcp.pop %v3309
        %v3371 = vmul.f32 1.0, %v3370
        %v3372 = vrcp.pop %v3310
        %v3373 = vmul.f32 1.0, %v3372
        %v3374 = vrcp.pop %v3311
        %v3375 = vmul.f32 1.0, %v3374
        %3377 = vset.pattern.permute.xlu0 97
        %3378 = vperm.xlu0 %3377, %v3313
        %v3379 = vpop.permute.xlu0 %3378
        %3382 = vset.pattern.permute.xlu0 97
        %3383 = vperm.xlu0 %3382, %v3315
        %v3384 = vpop.permute.xlu0 %3383
        %3387 = vset.pattern.permute.xlu0 97
        %3388 = vperm.xlu0 %3387, %v3317
        %v3389 = vpop.permute.xlu0 %3388
        %3392 = vset.pattern.permute.xlu0 97
        %3393 = vperm.xlu0 %3392, %v3319
        %v3394 = vpop.permute.xlu0 %3393
        %3397 = vset.pattern.permute.xlu0 97
        %3398 = vperm.xlu0 %3397, %v3321
        %v3399 = vpop.permute.xlu0 %3398
        %3402 = vset.pattern.permute.xlu0 97
        %3403 = vperm.xlu0 %3402, %v3323
        %v3404 = vpop.permute.xlu0 %3403
        %3407 = vset.pattern.permute.xlu0 97
        %3408 = vperm.xlu0 %3407, %v3325
        %v3409 = vpop.permute.xlu0 %3408
        %3412 = vset.pattern.permute.xlu0 97
        %3413 = vperm.xlu0 %3412, %v3327
        %v3414 = vpop.permute.xlu0 %3413
        %3417 = vset.pattern.permute.xlu0 97
        %3418 = vperm.xlu0 %3417, %v3329
        %v3419 = vpop.permute.xlu0 %3418
        %3422 = vset.pattern.permute.xlu0 97
        %3423 = vperm.xlu0 %3422, %v3331
        %v3424 = vpop.permute.xlu0 %3423
        %3427 = vset.pattern.permute.xlu0 97
        %3428 = vperm.xlu0 %3427, %v3333
        %v3429 = vpop.permute.xlu0 %3428
        %3432 = vset.pattern.permute.xlu0 97
        %3433 = vperm.xlu0 %3432, %v3335
        %v3434 = vpop.permute.xlu0 %3433
        %3437 = vset.pattern.permute.xlu0 97
        %3438 = vperm.xlu0 %3437, %v3337
        %v3439 = vpop.permute.xlu0 %3438
        %3442 = vset.pattern.permute.xlu0 97
        %3443 = vperm.xlu0 %3442, %v3339
        %v3444 = vpop.permute.xlu0 %3443
        %3447 = vset.pattern.permute.xlu0 97
        %3448 = vperm.xlu0 %3447, %v3341
        %v3449 = vpop.permute.xlu0 %3448
        %3452 = vset.pattern.permute.xlu0 97
        %3453 = vperm.xlu0 %3452, %v3343
        %v3454 = vpop.permute.xlu0 %3453
        %3457 = vset.pattern.permute.xlu0 97
        %3458 = vperm.xlu0 %3457, %v3345
        %v3459 = vpop.permute.xlu0 %3458
        %3462 = vset.pattern.permute.xlu0 97
        %3463 = vperm.xlu0 %3462, %v3347
        %v3464 = vpop.permute.xlu0 %3463
        %3467 = vset.pattern.permute.xlu0 97
        %3468 = vperm.xlu0 %3467, %v3349
        %v3469 = vpop.permute.xlu0 %3468
        %3472 = vset.pattern.permute.xlu0 97
        %3473 = vperm.xlu0 %3472, %v3351
        %v3474 = vpop.permute.xlu0 %3473
        %3477 = vset.pattern.permute.xlu0 97
        %3478 = vperm.xlu0 %3477, %v3353
        %v3479 = vpop.permute.xlu0 %3478
        %3482 = vset.pattern.permute.xlu0 97
        %3483 = vperm.xlu0 %3482, %v3355
        %v3484 = vpop.permute.xlu0 %3483
        %3487 = vset.pattern.permute.xlu0 97
        %3488 = vperm.xlu0 %3487, %v3357
        %v3489 = vpop.permute.xlu0 %3488
        %3492 = vset.pattern.permute.xlu0 97
        %3493 = vperm.xlu0 %3492, %v3359
        %v3494 = vpop.permute.xlu0 %3493
        %3497 = vset.pattern.permute.xlu0 97
        %3498 = vperm.xlu0 %3497, %v3361
        %v3499 = vpop.permute.xlu0 %3498
        %3502 = vset.pattern.permute.xlu0 97
        %3503 = vperm.xlu0 %3502, %v3363
        %v3504 = vpop.permute.xlu0 %3503
        %3507 = vset.pattern.permute.xlu0 97
        %3508 = vperm.xlu0 %3507, %v3365
        %v3509 = vpop.permute.xlu0 %3508
        %3512 = vset.pattern.permute.xlu0 97
        %3513 = vperm.xlu0 %3512, %v3367
        %v3514 = vpop.permute.xlu0 %3513
        %3517 = vset.pattern.permute.xlu0 97
        %3518 = vperm.xlu0 %3517, %v3369
        %v3519 = vpop.permute.xlu0 %3518
        %3522 = vset.pattern.permute.xlu0 97
        %3523 = vperm.xlu0 %3522, %v3371
        %v3524 = vpop.permute.xlu0 %3523
        %3527 = vset.pattern.permute.xlu0 97
        %3528 = vperm.xlu0 %3527, %v3373
        %v3529 = vpop.permute.xlu0 %3528
        %3532 = vset.pattern.permute.xlu0 97
        %3533 = vperm.xlu0 %3532, %v3375
        %v3534 = vpop.permute.xlu0 %3533
        %v3536 = vmul.f32 %v3024, %v3379
        %v3537 = vmul.f32 %v3027, %v3384
        %v3538 = vmul.f32 %v3032, %v3389
        %v3539 = vmul.f32 %v3035, %v3394
        %v3540 = vmul.f32 %v3040, %v3399
        %v3541 = vmul.f32 %v3043, %v3404
        %v3542 = vmul.f32 %v3048, %v3409
        %v3543 = vmul.f32 %v3051, %v3414
        %v3544 = vmul.f32 %v3056, %v3419
        %v3545 = vmul.f32 %v3059, %v3424
        %v3546 = vmul.f32 %v3064, %v3429
        %v3547 = vmul.f32 %v3067, %v3434
        %v3548 = vmul.f32 %v3072, %v3439
        %v3549 = vmul.f32 %v3075, %v3444
        %v3550 = vmul.f32 %v3080, %v3449
        %v3551 = vmul.f32 %v3083, %v3454
        %v3552 = vmul.f32 %v3088, %v3459
        %v3553 = vmul.f32 %v3091, %v3464
        %v3554 = vmul.f32 %v3096, %v3469
        %v3555 = vmul.f32 %v3099, %v3474
        %v3556 = vmul.f32 %v3104, %v3479
        %v3557 = vmul.f32 %v3107, %v3484
        %v3558 = vmul.f32 %v3112, %v3489
        %v3559 = vmul.f32 %v3115, %v3494
        %v3560 = vmul.f32 %v3120, %v3499
        %v3561 = vmul.f32 %v3123, %v3504
        %v3562 = vmul.f32 %v3128, %v3509
        %v3563 = vmul.f32 %v3131, %v3514
        %v3564 = vmul.f32 %v3136, %v3519
        %v3565 = vmul.f32 %v3139, %v3524
        %v3566 = vmul.f32 %v3144, %v3529
        %v3567 = vmul.f32 %v3147, %v3534
        %v3568 = vadd.f32 %v2365, %v3536
        %v3569 = vadd.f32 %v2366, %v3537
        %v3570 = vadd.f32 %v2367, %v3538
        %v3571 = vadd.f32 %v2368, %v3539
        %v3572 = vadd.f32 %v2369, %v3540
        %v3573 = vadd.f32 %v2370, %v3541
        %v3574 = vadd.f32 %v2371, %v3542
        %v3575 = vadd.f32 %v2372, %v3543
        %v3576 = vadd.f32 %v2373, %v3544
        %v3577 = vadd.f32 %v2374, %v3545
        %v3578 = vadd.f32 %v2375, %v3546
        %v3579 = vadd.f32 %v2376, %v3547
        %v3580 = vadd.f32 %v2377, %v3548
        %v3581 = vadd.f32 %v2378, %v3549
        %v3582 = vadd.f32 %v2379, %v3550
        %v3583 = vadd.f32 %v2380, %v3551
        %v3584 = vadd.f32 %v2381, %v3552
        %v3585 = vadd.f32 %v2382, %v3553
        %v3586 = vadd.f32 %v2383, %v3554
        %v3587 = vadd.f32 %v2384, %v3555
        %v3588 = vadd.f32 %v2385, %v3556
        %v3589 = vadd.f32 %v2386, %v3557
        %v3590 = vadd.f32 %v2387, %v3558
        %v3591 = vadd.f32 %v2388, %v3559
        %v3592 = vadd.f32 %v2389, %v3560
        %v3593 = vadd.f32 %v2390, %v3561
        %v3594 = vadd.f32 %v2391, %v3562
        %v3595 = vadd.f32 %v2392, %v3563
        %v3596 = vadd.f32 %v2393, %v3564
        %v3597 = vadd.f32 %v2394, %v3565
        %v3598 = vadd.f32 %v2395, %v3566
        %v3599 = vadd.f32 %v2396, %v3567
        %v3600 = vld [vmem:[%s3] sm:$0xff]
        %v3601 = vld [vmem:[%s3 + $0x8] sm:$0xff]
        %v3602 = vld [vmem:[%s3 + $0x10] sm:$0xff]
        %v3603 = vld [vmem:[%s3 + $0x18] sm:$0xff]
        %v3604 = vld [vmem:[%s3 + $0x20] sm:$0xff]
        %v3605 = vld [vmem:[%s3 + $0x28] sm:$0xff]
        %v3606 = vld [vmem:[%s3 + $0x30] sm:$0xff]
        %v3607 = vld [vmem:[%s3 + $0x38] sm:$0xff]
        %v3608 = vld [vmem:[%s3 + $0x40] sm:$0xff]
        %v3609 = vld [vmem:[%s3 + $0x48] sm:$0xff]
        %v3610 = vld [vmem:[%s3 + $0x50] sm:$0xff]
        %v3611 = vld [vmem:[%s3 + $0x58] sm:$0xff]
        %v3612 = vld [vmem:[%s3 + $0x60] sm:$0xff]
        %v3613 = vld [vmem:[%s3 + $0x68] sm:$0xff]
        %v3614 = vld [vmem:[%s3 + $0x70] sm:$0xff]
        %v3615 = vld [vmem:[%s3 + $0x78] sm:$0xff]
        %v3616 = vld [vmem:[%s4] sm:$0xff]
        %v3617 = vld [vmem:[%s4 + $0x8] sm:$0xff]
        %v3618 = vld [vmem:[%s4 + $0x10] sm:$0xff]
        %v3619 = vld [vmem:[%s4 + $0x18] sm:$0xff]
        %v3620 = vld [vmem:[%s4 + $0x20] sm:$0xff]
        %v3621 = vld [vmem:[%s4 + $0x28] sm:$0xff]
        %v3622 = vld [vmem:[%s4 + $0x30] sm:$0xff]
        %v3623 = vld [vmem:[%s4 + $0x38] sm:$0xff]
        %v3624 = vld [vmem:[%s4 + $0x40] sm:$0xff]
        %v3625 = vld [vmem:[%s4 + $0x48] sm:$0xff]
        %v3626 = vld [vmem:[%s4 + $0x50] sm:$0xff]
        %v3627 = vld [vmem:[%s4 + $0x58] sm:$0xff]
        %v3628 = vld [vmem:[%s4 + $0x60] sm:$0xff]
        %v3629 = vld [vmem:[%s4 + $0x68] sm:$0xff]
        %v3630 = vld [vmem:[%s4 + $0x70] sm:$0xff]
        %v3631 = vld [vmem:[%s4 + $0x78] sm:$0xff]
        %3632 = vmatprep.subr.mxu0 0.0
        %3633 = vmatpush1.msra.mxu0 %v3616
        %3634 = vmatprep.subr.mxu0 0.0
        %3635 = vmatpush1.msra.mxu0 %v3617
        %3636 = vmatprep.subr.mxu0 0.0
        %3637 = vmatpush1.msra.mxu0 %v3618
        %3638 = vmatprep.subr.mxu0 0.0
        %3639 = vmatpush1.msra.mxu0 %v3619
        %3640 = vmatprep.subr.mxu0 0.0
        %3641 = vmatpush1.msra.mxu0 %v3620
        %3642 = vmatprep.subr.mxu0 0.0
        %3643 = vmatpush1.msra.mxu0 %v3621
        %3644 = vmatprep.subr.mxu0 0.0
        %3645 = vmatpush1.msra.mxu0 %v3622
        %3646 = vmatprep.subr.mxu0 0.0
        %3647 = vmatpush1.msra.mxu0 %v3623
        %3648 = vmatprep.subr.mxu0 0.0
        %3649 = vmatpush1.msra.mxu0 %v3624
        %3650 = vmatprep.subr.mxu0 0.0
        %3651 = vmatpush1.msra.mxu0 %v3625
        %3652 = vmatprep.subr.mxu0 0.0
        %3653 = vmatpush1.msra.mxu0 %v3626
        %3654 = vmatprep.subr.mxu0 0.0
        %3655 = vmatpush1.msra.mxu0 %v3627
        %3656 = vmatprep.subr.mxu0 0.0
        %3657 = vmatpush1.msra.mxu0 %v3628
        %3658 = vmatprep.subr.mxu0 0.0
        %3659 = vmatpush1.msra.mxu0 %v3629
        %3660 = vmatprep.subr.mxu0 0.0
        %3661 = vmatpush1.msra.mxu0 %v3630
        %3662 = vmatprep.subr.mxu0 0.0
        %3663 = vmatpush1.msra.mxu0 %v3631
        %3664 = vmatprep.subr.mxu0 0.0
        %3665 = vmatpush1.msra.mxu0 0.0
        %3666 = vmatprep.subr.mxu0 0.0
        %3667 = vmatpush1.msra.mxu0 0.0
        %3668 = vmatprep.subr.mxu0 0.0
        %3669 = vmatpush1.msra.mxu0 0.0
        %3670 = vmatprep.subr.mxu0 0.0
        %3671 = vmatpush1.msra.mxu0 0.0
        %3672 = vmatprep.subr.mxu0 0.0
        %3673 = vmatpush1.msra.mxu0 0.0
        %3674 = vmatprep.subr.mxu0 0.0
        %3675 = vmatpush1.msra.mxu0 0.0
        %3676 = vmatprep.subr.mxu0 0.0
        %3677 = vmatpush1.msra.mxu0 0.0
        %3678 = vmatprep.subr.mxu0 0.0
        %3679 = vmatpush1.msra.mxu0 0.0
        %3680 = vmatprep.subr.mxu0 0.0
        %3681 = vmatpush1.msra.mxu0 0.0
        %3682 = vmatprep.subr.mxu0 0.0
        %3683 = vmatpush1.msra.mxu0 0.0
        %3684 = vmatprep.subr.mxu0 0.0
        %3685 = vmatpush1.msra.mxu0 0.0
        %3686 = vmatprep.subr.mxu0 0.0
        %3687 = vmatpush1.msra.mxu0 0.0
        %3688 = vmatprep.subr.mxu0 0.0
        %3689 = vmatpush1.msra.mxu0 0.0
        %3690 = vmatprep.subr.mxu0 0.0
        %3691 = vmatpush1.msra.mxu0 0.0
        %3692 = vmatprep.subr.mxu0 0.0
        %3693 = vmatpush1.msra.mxu0 0.0
        %3694 = vmatprep.subr.mxu0 0.0
        %3695 = vmatpush1.msra.mxu0 0.0
        %3696 = vmatprep.mubr.f32.mxu0 0.0
        %3697 = vmatmul.mubr.f32.gmra.mrb[0].mxu0 %v3568
        %v3698 = vpop.f32.mrb[0].mxu0
        %v3699 = vadd.f32 0.0, %v3698
        %v3700 = vpop.f32.mrb[0].mxu0
        %3701 = vmatprep.mubr.f32.mxu0 0.0
        %3702 = vmatmul.mubr.f32.gmra.mrb[0].mxu0 %v3569
        %v3703 = vpop.f32.mrb[0].mxu0
        %v3704 = vadd.f32 0.0, %v3703
        %v3705 = vpop.f32.mrb[0].mxu0
        %3706 = vmatprep.mubr.f32.mxu0 0.0
        %3707 = vmatmul.mubr.f32.gmra.mrb[0].mxu0 %v3570
        %v3708 = vpop.f32.mrb[0].mxu0
        %v3709 = vadd.f32 0.0, %v3708
        %v3710 = vpop.f32.mrb[0].mxu0
        %3711 = vmatprep.mubr.f32.mxu0 0.0
        %3712 = vmatmul.mubr.f32.gmra.mrb[0].mxu0 %v3571
        %v3713 = vpop.f32.mrb[0].mxu0
        %v3714 = vadd.f32 0.0, %v3713
        %v3715 = vpop.f32.mrb[0].mxu0
        %3716 = vmatprep.mubr.f32.mxu0 0.0
        %3717 = vmatmul.mubr.f32.gmra.mrb[0].mxu0 %v3572
        %v3718 = vpop.f32.mrb[0].mxu0
        %v3719 = vadd.f32 0.0, %v3718
        %v3720 = vpop.f32.mrb[0].mxu0
        %3721 = vmatprep.mubr.f32.mxu0 0.0
        %3722 = vmatmul.mubr.f32.gmra.mrb[0].mxu0 %v3573
        %v3723 = vpop.f32.mrb[0].mxu0
        %v3724 = vadd.f32 0.0, %v3723
        %v3725 = vpop.f32.mrb[0].mxu0
        %3726 = vmatprep.mubr.f32.mxu0 0.0
        %3727 = vmatmul.mubr.f32.gmra.mrb[0].mxu0 %v3574
        %v3728 = vpop.f32.mrb[0].mxu0
        %v3729 = vadd.f32 0.0, %v3728
        %v3730 = vpop.f32.mrb[0].mxu0
        %3731 = vmatprep.mubr.f32.mxu0 0.0
        %3732 = vmatmul.mubr.f32.gmra.mrb[0].mxu0 %v3575
        %v3733 = vpop.f32.mrb[0].mxu0
        %v3734 = vadd.f32 0.0, %v3733
        %v3735 = vpop.f32.mrb[0].mxu0
        %3736 = vmatprep.mubr.f32.mxu0 0.0
        %3737 = vmatmul.mubr.f32.gmra.mrb[0].mxu0 %v3576
        %v3738 = vpop.f32.mrb[0].mxu0
        %v3739 = vadd.f32 0.0, %v3738
        %v3740 = vpop.f32.mrb[0].mxu0
        %3741 = vmatprep.mubr.f32.mxu0 0.0
        %3742 = vmatmul.mubr.f32.gmra.mrb[0].mxu0 %v3577
        %v3743 = vpop.f32.mrb[0].mxu0
        %v3744 = vadd.f32 0.0, %v3743
        %v3745 = vpop.f32.mrb[0].mxu0
        %3746 = vmatprep.mubr.f32.mxu0 0.0
        %3747 = vmatmul.mubr.f32.gmra.mrb[0].mxu0 %v3578
        %v3748 = vpop.f32.mrb[0].mxu0
        %v3749 = vadd.f32 0.0, %v3748
        %v3750 = vpop.f32.mrb[0].mxu0
        %3751 = vmatprep.mubr.f32.mxu0 0.0
        %3752 = vmatmul.mubr.f32.gmra.mrb[0].mxu0 %v3579
        %v3753 = vpop.f32.mrb[0].mxu0
        %v3754 = vadd.f32 0.0, %v3753
        %v3755 = vpop.f32.mrb[0].mxu0
        %3756 = vmatprep.mubr.f32.mxu0 0.0
        %3757 = vmatmul.mubr.f32.gmra.mrb[0].mxu0 %v3580
        %v3758 = vpop.f32.mrb[0].mxu0
        %v3759 = vadd.f32 0.0, %v3758
        %v3760 = vpop.f32.mrb[0].mxu0
        %3761 = vmatprep.mubr.f32.mxu0 0.0
        %3762 = vmatmul.mubr.f32.gmra.mrb[0].mxu0 %v3581
        %v3763 = vpop.f32.mrb[0].mxu0
        %v3764 = vadd.f32 0.0, %v3763
        %v3765 = vpop.f32.mrb[0].mxu0
        %3766 = vmatprep.mubr.f32.mxu0 0.0
        %3767 = vmatmul.mubr.f32.gmra.mrb[0].mxu0 %v3582
        %v3768 = vpop.f32.mrb[0].mxu0
        %v3769 = vadd.f32 0.0, %v3768
        %v3770 = vpop.f32.mrb[0].mxu0
        %3771 = vmatprep.mubr.f32.mxu0 0.0
        %3772 = vmatmul.mubr.f32.gmra.mrb[0].mxu0 %v3583
        %v3773 = vpop.f32.mrb[0].mxu0
        %v3774 = vadd.f32 0.0, %v3773
        %v3775 = vpop.f32.mrb[0].mxu0
        %3776 = vmatprep.mubr.f32.mxu0 0.0
        %3777 = vmatmul.mubr.f32.gmra.mrb[0].mxu0 %v3584
        %v3778 = vpop.f32.mrb[0].mxu0
        %v3779 = vadd.f32 0.0, %v3778
        %v3780 = vpop.f32.mrb[0].mxu0
        %3781 = vmatprep.mubr.f32.mxu0 0.0
        %3782 = vmatmul.mubr.f32.gmra.mrb[0].mxu0 %v3585
        %v3783 = vpop.f32.mrb[0].mxu0
        %v3784 = vadd.f32 0.0, %v3783
        %v3785 = vpop.f32.mrb[0].mxu0
        %3786 = vmatprep.mubr.f32.mxu0 0.0
        %3787 = vmatmul.mubr.f32.gmra.mrb[0].mxu0 %v3586
        %v3788 = vpop.f32.mrb[0].mxu0
        %v3789 = vadd.f32 0.0, %v3788
        %v3790 = vpop.f32.mrb[0].mxu0
        %3791 = vmatprep.mubr.f32.mxu0 0.0
        %3792 = vmatmul.mubr.f32.gmra.mrb[0].mxu0 %v3587
        %v3793 = vpop.f32.mrb[0].mxu0
        %v3794 = vadd.f32 0.0, %v3793
        %v3795 = vpop.f32.mrb[0].mxu0
        %3796 = vmatprep.mubr.f32.mxu0 0.0
        %3797 = vmatmul.mubr.f32.gmra.mrb[0].mxu0 %v3588
        %v3798 = vpop.f32.mrb[0].mxu0
        %v3799 = vadd.f32 0.0, %v3798
        %v3800 = vpop.f32.mrb[0].mxu0
        %3801 = vmatprep.mubr.f32.mxu0 0.0
        %3802 = vmatmul.mubr.f32.gmra.mrb[0].mxu0 %v3589
        %v3803 = vpop.f32.mrb[0].mxu0
        %v3804 = vadd.f32 0.0, %v3803
        %v3805 = vpop.f32.mrb[0].mxu0
        %3806 = vmatprep.mubr.f32.mxu0 0.0
        %3807 = vmatmul.mubr.f32.gmra.mrb[0].mxu0 %v3590
        %v3808 = vpop.f32.mrb[0].mxu0
        %v3809 = vadd.f32 0.0, %v3808
        %v3810 = vpop.f32.mrb[0].mxu0
        %3811 = vmatprep.mubr.f32.mxu0 0.0
        %3812 = vmatmul.mubr.f32.gmra.mrb[0].mxu0 %v3591
        %v3813 = vpop.f32.mrb[0].mxu0
        %v3814 = vadd.f32 0.0, %v3813
        %v3815 = vpop.f32.mrb[0].mxu0
        %3816 = vmatprep.mubr.f32.mxu0 0.0
        %3817 = vmatmul.mubr.f32.gmra.mrb[0].mxu0 %v3592
        %v3818 = vpop.f32.mrb[0].mxu0
        %v3819 = vadd.f32 0.0, %v3818
        %v3820 = vpop.f32.mrb[0].mxu0
        %3821 = vmatprep.mubr.f32.mxu0 0.0
        %3822 = vmatmul.mubr.f32.gmra.mrb[0].mxu0 %v3593
        %v3823 = vpop.f32.mrb[0].mxu0
        %v3824 = vadd.f32 0.0, %v3823
        %v3825 = vpop.f32.mrb[0].mxu0
        %3826 = vmatprep.mubr.f32.mxu0 0.0
        %3827 = vmatmul.mubr.f32.gmra.mrb[0].mxu0 %v3594
        %v3828 = vpop.f32.mrb[0].mxu0
        %v3829 = vadd.f32 0.0, %v3828
        %v3830 = vpop.f32.mrb[0].mxu0
        %3831 = vmatprep.mubr.f32.mxu0 0.0
        %3832 = vmatmul.mubr.f32.gmra.mrb[0].mxu0 %v3595
        %v3833 = vpop.f32.mrb[0].mxu0
        %v3834 = vadd.f32 0.0, %v3833
        %v3835 = vpop.f32.mrb[0].mxu0
        %3836 = vmatprep.mubr.f32.mxu0 0.0
        %3837 = vmatmul.mubr.f32.gmra.mrb[0].mxu0 %v3596
        %v3838 = vpop.f32.mrb[0].mxu0
        %v3839 = vadd.f32 0.0, %v3838
        %v3840 = vpop.f32.mrb[0].mxu0
        %3841 = vmatprep.mubr.f32.mxu0 0.0
        %3842 = vmatmul.mubr.f32.gmra.mrb[0].mxu0 %v3597
        %v3843 = vpop.f32.mrb[0].mxu0
        %v3844 = vadd.f32 0.0, %v3843
        %v3845 = vpop.f32.mrb[0].mxu0
        %3846 = vmatprep.mubr.f32.mxu0 0.0
        %3847 = vmatmul.mubr.f32.gmra.mrb[0].mxu0 %v3598
        %v3848 = vpop.f32.mrb[0].mxu0
        %v3849 = vadd.f32 0.0, %v3848
        %v3850 = vpop.f32.mrb[0].mxu0
        %3851 = vmatprep.mubr.f32.mxu0 0.0
        %3852 = vmatmul.mubr.f32.gmra.mrb[0].mxu0 %v3599
        %v3853 = vpop.f32.mrb[0].mxu0
        %v3854 = vadd.f32 0.0, %v3853
        %v3855 = vpop.f32.mrb[0].mxu0
        %3856 = vdwg.mxu0
        %3857 = vmatprep.subr.mxu0 0.0
        %3858 = vmatpush1.msra.mxu0 %v3600
        %3859 = vmatprep.subr.mxu0 0.0
        %3860 = vmatpush1.msra.mxu0 %v3601
        %3861 = vmatprep.subr.mxu0 0.0
        %3862 = vmatpush1.msra.mxu0 %v3602
        %3863 = vmatprep.subr.mxu0 0.0
        %3864 = vmatpush1.msra.mxu0 %v3603
        %3865 = vmatprep.subr.mxu0 0.0
        %3866 = vmatpush1.msra.mxu0 %v3604
        %3867 = vmatprep.subr.mxu0 0.0
        %3868 = vmatpush1.msra.mxu0 %v3605
        %3869 = vmatprep.subr.mxu0 0.0
        %3870 = vmatpush1.msra.mxu0 %v3606
        %3871 = vmatprep.subr.mxu0 0.0
        %3872 = vmatpush1.msra.mxu0 %v3607
        %3873 = vmatprep.subr.mxu0 0.0
        %3874 = vmatpush1.msra.mxu0 %v3608
        %3875 = vmatprep.subr.mxu0 0.0
        %3876 = vmatpush1.msra.mxu0 %v3609
        %3877 = vmatprep.subr.mxu0 0.0
        %3878 = vmatpush1.msra.mxu0 %v3610
        %3879 = vmatprep.subr.mxu0 0.0
        %3880 = vmatpush1.msra.mxu0 %v3611
        %3881 = vmatprep.subr.mxu0 0.0
        %3882 = vmatpush1.msra.mxu0 %v3612
        %3883 = vmatprep.subr.mxu0 0.0
        %3884 = vmatpush1.msra.mxu0 %v3613
        %3885 = vmatprep.subr.mxu0 0.0
        %3886 = vmatpush1.msra.mxu0 %v3614
        %3887 = vmatprep.subr.mxu0 0.0
        %3888 = vmatpush1.msra.mxu0 %v3615
        %3889 = vmatprep.subr.mxu0 0.0
        %3890 = vmatpush1.msra.mxu0 0.0
        %3891 = vmatprep.subr.mxu0 0.0
        %3892 = vmatpush1.msra.mxu0 0.0
        %3893 = vmatprep.subr.mxu0 0.0
        %3894 = vmatpush1.msra.mxu0 0.0
        %3895 = vmatprep.subr.mxu0 0.0
        %3896 = vmatpush1.msra.mxu0 0.0
        %3897 = vmatprep.subr.mxu0 0.0
        %3898 = vmatpush1.msra.mxu0 0.0
        %3899 = vmatprep.subr.mxu0 0.0
        %3900 = vmatpush1.msra.mxu0 0.0
        %3901 = vmatprep.subr.mxu0 0.0
        %3902 = vmatpush1.msra.mxu0 0.0
        %3903 = vmatprep.subr.mxu0 0.0
        %3904 = vmatpush1.msra.mxu0 0.0
        %3905 = vmatprep.subr.mxu0 0.0
        %3906 = vmatpush1.msra.mxu0 0.0
        %3907 = vmatprep.subr.mxu0 0.0
        %3908 = vmatpush1.msra.mxu0 0.0
        %3909 = vmatprep.subr.mxu0 0.0
        %3910 = vmatpush1.msra.mxu0 0.0
        %3911 = vmatprep.subr.mxu0 0.0
        %3912 = vmatpush1.msra.mxu0 0.0
        %3913 = vmatprep.subr.mxu0 0.0
        %3914 = vmatpush1.msra.mxu0 0.0
        %3915 = vmatprep.subr.mxu0 0.0
        %3916 = vmatpush1.msra.mxu0 0.0
        %3917 = vmatprep.subr.mxu0 0.0
        %3918 = vmatpush1.msra.mxu0 0.0
        %3919 = vmatprep.subr.mxu0 0.0
        %3920 = vmatpush1.msra.mxu0 0.0
        %3921 = vmatprep.mubr.f32.mxu0 0.0
        %3922 = vmatmul.mubr.f32.gmra.mrb[0].mxu0 %v388
        %v3923 = vpop.f32.mrb[0].mxu0
        %v3924 = vadd.f32 %v3699, %v3923
        %v3925 = vpop.f32.mrb[0].mxu0
        %3926 = vmatprep.mubr.f32.mxu0 0.0
        %3927 = vmatmul.mubr.f32.gmra.mrb[0].mxu0 %v393
        %v3928 = vpop.f32.mrb[0].mxu0
        %v3929 = vadd.f32 %v3704, %v3928
        %v3930 = vpop.f32.mrb[0].mxu0
        %3931 = vmatprep.mubr.f32.mxu0 0.0
        %3932 = vmatmul.mubr.f32.gmra.mrb[0].mxu0 %v398
        %v3933 = vpop.f32.mrb[0].mxu0
        %v3934 = vadd.f32 %v3709, %v3933
        %v3935 = vpop.f32.mrb[0].mxu0
        %3936 = vmatprep.mubr.f32.mxu0 0.0
        %3937 = vmatmul.mubr.f32.gmra.mrb[0].mxu0 %v403
        %v3938 = vpop.f32.mrb[0].mxu0
        %v3939 = vadd.f32 %v3714, %v3938
        %v3940 = vpop.f32.mrb[0].mxu0
        %3941 = vmatprep.mubr.f32.mxu0 0.0
        %3942 = vmatmul.mubr.f32.gmra.mrb[0].mxu0 %v408
        %v3943 = vpop.f32.mrb[0].mxu0
        %v3944 = vadd.f32 %v3719, %v3943
        %v3945 = vpop.f32.mrb[0].mxu0
        %3946 = vmatprep.mubr.f32.mxu0 0.0
        %3947 = vmatmul.mubr.f32.gmra.mrb[0].mxu0 %v413
        %v3948 = vpop.f32.mrb[0].mxu0
        %v3949 = vadd.f32 %v3724, %v3948
        %v3950 = vpop.f32.mrb[0].mxu0
        %3951 = vmatprep.mubr.f32.mxu0 0.0
        %3952 = vmatmul.mubr.f32.gmra.mrb[0].mxu0 %v418
        %v3953 = vpop.f32.mrb[0].mxu0
        %v3954 = vadd.f32 %v3729, %v3953
        %v3955 = vpop.f32.mrb[0].mxu0
        %3956 = vmatprep.mubr.f32.mxu0 0.0
        %3957 = vmatmul.mubr.f32.gmra.mrb[0].mxu0 %v423
        %v3958 = vpop.f32.mrb[0].mxu0
        %v3959 = vadd.f32 %v3734, %v3958
        %v3960 = vpop.f32.mrb[0].mxu0
        %3961 = vmatprep.mubr.f32.mxu0 0.0
        %3962 = vmatmul.mubr.f32.gmra.mrb[0].mxu0 %v428
        %v3963 = vpop.f32.mrb[0].mxu0
        %v3964 = vadd.f32 %v3739, %v3963
        %v3965 = vpop.f32.mrb[0].mxu0
        %3966 = vmatprep.mubr.f32.mxu0 0.0
        %3967 = vmatmul.mubr.f32.gmra.mrb[0].mxu0 %v433
        %v3968 = vpop.f32.mrb[0].mxu0
        %v3969 = vadd.f32 %v3744, %v3968
        %v3970 = vpop.f32.mrb[0].mxu0
        %3971 = vmatprep.mubr.f32.mxu0 0.0
        %3972 = vmatmul.mubr.f32.gmra.mrb[0].mxu0 %v438
        %v3973 = vpop.f32.mrb[0].mxu0
        %v3974 = vadd.f32 %v3749, %v3973
        %v3975 = vpop.f32.mrb[0].mxu0
        %3976 = vmatprep.mubr.f32.mxu0 0.0
        %3977 = vmatmul.mubr.f32.gmra.mrb[0].mxu0 %v443
        %v3978 = vpop.f32.mrb[0].mxu0
        %v3979 = vadd.f32 %v3754, %v3978
        %v3980 = vpop.f32.mrb[0].mxu0
        %3981 = vmatprep.mubr.f32.mxu0 0.0
        %3982 = vmatmul.mubr.f32.gmra.mrb[0].mxu0 %v448
        %v3983 = vpop.f32.mrb[0].mxu0
        %v3984 = vadd.f32 %v3759, %v3983
        %v3985 = vpop.f32.mrb[0].mxu0
        %3986 = vmatprep.mubr.f32.mxu0 0.0
        %3987 = vmatmul.mubr.f32.gmra.mrb[0].mxu0 %v453
        %v3988 = vpop.f32.mrb[0].mxu0
        %v3989 = vadd.f32 %v3764, %v3988
        %v3990 = vpop.f32.mrb[0].mxu0
        %3991 = vmatprep.mubr.f32.mxu0 0.0
        %3992 = vmatmul.mubr.f32.gmra.mrb[0].mxu0 %v458
        %v3993 = vpop.f32.mrb[0].mxu0
        %v3994 = vadd.f32 %v3769, %v3993
        %v3995 = vpop.f32.mrb[0].mxu0
        %3996 = vmatprep.mubr.f32.mxu0 0.0
        %3997 = vmatmul.mubr.f32.gmra.mrb[0].mxu0 %v463
        %v3998 = vpop.f32.mrb[0].mxu0
        %v3999 = vadd.f32 %v3774, %v3998
        %v4000 = vpop.f32.mrb[0].mxu0
        %4001 = vmatprep.mubr.f32.mxu0 0.0
        %4002 = vmatmul.mubr.f32.gmra.mrb[0].mxu0 %v468
        %v4003 = vpop.f32.mrb[0].mxu0
        %v4004 = vadd.f32 %v3779, %v4003
        %v4005 = vpop.f32.mrb[0].mxu0
        %4006 = vmatprep.mubr.f32.mxu0 0.0
        %4007 = vmatmul.mubr.f32.gmra.mrb[0].mxu0 %v473
        %v4008 = vpop.f32.mrb[0].mxu0
        %v4009 = vadd.f32 %v3784, %v4008
        %v4010 = vpop.f32.mrb[0].mxu0
        %4011 = vmatprep.mubr.f32.mxu0 0.0
        %4012 = vmatmul.mubr.f32.gmra.mrb[0].mxu0 %v478
        %v4013 = vpop.f32.mrb[0].mxu0
        %v4014 = vadd.f32 %v3789, %v4013
        %v4015 = vpop.f32.mrb[0].mxu0
        %4016 = vmatprep.mubr.f32.mxu0 0.0
        %4017 = vmatmul.mubr.f32.gmra.mrb[0].mxu0 %v483
        %v4018 = vpop.f32.mrb[0].mxu0
        %v4019 = vadd.f32 %v3794, %v4018
        %v4020 = vpop.f32.mrb[0].mxu0
        %4021 = vmatprep.mubr.f32.mxu0 0.0
        %4022 = vmatmul.mubr.f32.gmra.mrb[0].mxu0 %v488
        %v4023 = vpop.f32.mrb[0].mxu0
        %v4024 = vadd.f32 %v3799, %v4023
        %v4025 = vpop.f32.mrb[0].mxu0
        %4026 = vmatprep.mubr.f32.mxu0 0.0
        %4027 = vmatmul.mubr.f32.gmra.mrb[0].mxu0 %v493
        %v4028 = vpop.f32.mrb[0].mxu0
        %v4029 = vadd.f32 %v3804, %v4028
        %v4030 = vpop.f32.mrb[0].mxu0
        %4031 = vmatprep.mubr.f32.mxu0 0.0
        %4032 = vmatmul.mubr.f32.gmra.mrb[0].mxu0 %v498
        %v4033 = vpop.f32.mrb[0].mxu0
        %v4034 = vadd.f32 %v3809, %v4033
        %v4035 = vpop.f32.mrb[0].mxu0
        %4036 = vmatprep.mubr.f32.mxu0 0.0
        %4037 = vmatmul.mubr.f32.gmra.mrb[0].mxu0 %v503
        %v4038 = vpop.f32.mrb[0].mxu0
        %v4039 = vadd.f32 %v3814, %v4038
        %v4040 = vpop.f32.mrb[0].mxu0
        %4041 = vmatprep.mubr.f32.mxu0 0.0
        %4042 = vmatmul.mubr.f32.gmra.mrb[0].mxu0 %v508
        %v4043 = vpop.f32.mrb[0].mxu0
        %v4044 = vadd.f32 %v3819, %v4043
        %v4045 = vpop.f32.mrb[0].mxu0
        %4046 = vmatprep.mubr.f32.mxu0 0.0
        %4047 = vmatmul.mubr.f32.gmra.mrb[0].mxu0 %v513
        %v4048 = vpop.f32.mrb[0].mxu0
        %v4049 = vadd.f32 %v3824, %v4048
        %v4050 = vpop.f32.mrb[0].mxu0
        %4051 = vmatprep.mubr.f32.mxu0 0.0
        %4052 = vmatmul.mubr.f32.gmra.mrb[0].mxu0 %v518
        %v4053 = vpop.f32.mrb[0].mxu0
        %v4054 = vadd.f32 %v3829, %v4053
        %v4055 = vpop.f32.mrb[0].mxu0
        %4056 = vmatprep.mubr.f32.mxu0 0.0
        %4057 = vmatmul.mubr.f32.gmra.mrb[0].mxu0 %v523
        %v4058 = vpop.f32.mrb[0].mxu0
        %v4059 = vadd.f32 %v3834, %v4058
        %v4060 = vpop.f32.mrb[0].mxu0
        %4061 = vmatprep.mubr.f32.mxu0 0.0
        %4062 = vmatmul.mubr.f32.gmra.mrb[0].mxu0 %v528
        %v4063 = vpop.f32.mrb[0].mxu0
        %v4064 = vadd.f32 %v3839, %v4063
        %v4065 = vpop.f32.mrb[0].mxu0
        %4066 = vmatprep.mubr.f32.mxu0 0.0
        %4067 = vmatmul.mubr.f32.gmra.mrb[0].mxu0 %v533
        %v4068 = vpop.f32.mrb[0].mxu0
        %v4069 = vadd.f32 %v3844, %v4068
        %v4070 = vpop.f32.mrb[0].mxu0
        %4071 = vmatprep.mubr.f32.mxu0 0.0
        %4072 = vmatmul.mubr.f32.gmra.mrb[0].mxu0 %v538
        %v4073 = vpop.f32.mrb[0].mxu0
        %v4074 = vadd.f32 %v3849, %v4073
        %v4075 = vpop.f32.mrb[0].mxu0
        %4076 = vmatprep.mubr.f32.mxu0 0.0
        %4077 = vmatmul.mubr.f32.gmra.mrb[0].mxu0 %v543
        %v4078 = vpop.f32.mrb[0].mxu0
        %v4079 = vadd.f32 %v3854, %v4078
        %v4080 = vpop.f32.mrb[0].mxu0
        %4081 = vdwg.mxu0
        %v4082 = vlaneseq
        %v4083 = vshrl.u32 %v4082, 7
        %v4084 = vsub.s32 0, %v4083
        %v4085 = vrot.slane %v300, %v4084
        %v4086 = vadd.f32 %v3924, %v4085
        %v4087 = vadd.f32 %v3929, %v4085
        %v4088 = vadd.f32 %v3934, %v4085
        %v4089 = vadd.f32 %v3939, %v4085
        %v4090 = vadd.f32 %v3944, %v4085
        %v4091 = vadd.f32 %v3949, %v4085
        %v4092 = vadd.f32 %v3954, %v4085
        %v4093 = vadd.f32 %v3959, %v4085
        %v4094 = vadd.f32 %v3964, %v4085
        %v4095 = vadd.f32 %v3969, %v4085
        %v4096 = vadd.f32 %v3974, %v4085
        %v4097 = vadd.f32 %v3979, %v4085
        %v4098 = vadd.f32 %v3984, %v4085
        %v4099 = vadd.f32 %v3989, %v4085
        %v4100 = vadd.f32 %v3994, %v4085
        %v4101 = vadd.f32 %v3999, %v4085
        %v4102 = vadd.f32 %v4004, %v4085
        %v4103 = vadd.f32 %v4009, %v4085
        %v4104 = vadd.f32 %v4014, %v4085
        %v4105 = vadd.f32 %v4019, %v4085
        %v4106 = vadd.f32 %v4024, %v4085
        %v4107 = vadd.f32 %v4029, %v4085
        %v4108 = vadd.f32 %v4034, %v4085
        %v4109 = vadd.f32 %v4039, %v4085
        %v4110 = vadd.f32 %v4044, %v4085
        %v4111 = vadd.f32 %v4049, %v4085
        %v4112 = vadd.f32 %v4054, %v4085
        %v4113 = vadd.f32 %v4059, %v4085
        %v4114 = vadd.f32 %v4064, %v4085
        %v4115 = vadd.f32 %v4069, %v4085
        %v4116 = vadd.f32 %v4074, %v4085
        %v4117 = vadd.f32 %v4079, %v4085
        %4118 = vst [vmem:[%s265] sm:$0xff] %v4086
        %4119 = vst [vmem:[%s265 + $0x8] sm:$0xff] %v4087
        %4120 = vst [vmem:[%s265 + $0x10] sm:$0xff] %v4088
        %4121 = vst [vmem:[%s265 + $0x18] sm:$0xff] %v4089
        %4122 = vst [vmem:[%s265 + $0x20] sm:$0xff] %v4090
        %4123 = vst [vmem:[%s265 + $0x28] sm:$0xff] %v4091
        %4124 = vst [vmem:[%s265 + $0x30] sm:$0xff] %v4092
        %4125 = vst [vmem:[%s265 + $0x38] sm:$0xff] %v4093
        %4126 = vst [vmem:[%s265 + $0x40] sm:$0xff] %v4094
        %4127 = vst [vmem:[%s265 + $0x48] sm:$0xff] %v4095
        %4128 = vst [vmem:[%s265 + $0x50] sm:$0xff] %v4096
        %4129 = vst [vmem:[%s265 + $0x58] sm:$0xff] %v4097
        %4130 = vst [vmem:[%s265 + $0x60] sm:$0xff] %v4098
        %4131 = vst [vmem:[%s265 + $0x68] sm:$0xff] %v4099
        %4132 = vst [vmem:[%s265 + $0x70] sm:$0xff] %v4100
        %4133 = vst [vmem:[%s265 + $0x78] sm:$0xff] %v4101
        %4134 = vst [vmem:[%s265 + $0x80] sm:$0xff] %v4102
        %4135 = vst [vmem:[%s265 + $0x88] sm:$0xff] %v4103
        %4136 = vst [vmem:[%s265 + $0x90] sm:$0xff] %v4104
        %4137 = vst [vmem:[%s265 + $0x98] sm:$0xff] %v4105
        %4138 = vst [vmem:[%s265 + $0xa0] sm:$0xff] %v4106
        %4139 = vst [vmem:[%s265 + $0xa8] sm:$0xff] %v4107
        %4140 = vst [vmem:[%s265 + $0xb0] sm:$0xff] %v4108
        %4141 = vst [vmem:[%s265 + $0xb8] sm:$0xff] %v4109
        %4142 = vst [vmem:[%s265 + $0xc0] sm:$0xff] %v4110
        %4143 = vst [vmem:[%s265 + $0xc8] sm:$0xff] %v4111
        %4144 = vst [vmem:[%s265 + $0xd0] sm:$0xff] %v4112
        %4145 = vst [vmem:[%s265 + $0xd8] sm:$0xff] %v4113
        %4146 = vst [vmem:[%s265 + $0xe0] sm:$0xff] %v4114
        %4147 = vst [vmem:[%s265 + $0xe8] sm:$0xff] %v4115
        %4148 = vst [vmem:[%s265 + $0xf0] sm:$0xff] %v4116
        %4149 = vst [vmem:[%s265 + $0xf8] sm:$0xff] %v4117
        %p4150 = scmp.lt.s32.totalorder %s18, 1
        %s4151 = scalar_select %p4150, %s18, 1
        %s4152 = smul.addr %s4151, 32
        %s4153 = smul.addr %s4152, 8
        %s4154 = scalar_lea.vmem %s6, %s4153
        // Predicated region
        $region49: #{coatten_block.1} parent=43 // pred_check
          %p4155 = pneg %p167
        $region50: #{coatten_block.1} parent=43 // pred_check_branch
          %4157 = sbr.rel (%p4155) target = $region52
        $region51: #{coatten_block.1} parent=43 // pred_region
          _
        $region52: #{coatten_block.1} parent=43 // pred_fallthru
          _
      $region44: #{coatten_block.1} parent=5 // pred_fallthru
        _
      %p4158 = scmp.le.s32.totalorder 2, %s13
      // Predicated region
      $region53: #{coatten_block.1} parent=5 // pred_check
        %p4159 = pneg %p4158
      $region54: #{coatten_block.1} parent=5 // pred_check_branch
        %4161 = sbr.rel (%p4159) target = $region56
      $region55: #{coatten_block.1} parent=5 // pred_region
        %s4162 = ssub.s32 %s13, 2
        // Predicated region
        $region57: #{coatten_block.1} parent=55 // pred_check
          %p4163 = pneg %p173
        $region58: #{coatten_block.1} parent=55 // pred_check_branch
          %4165 = sbr.rel (%p4163) target = $region60
        $region59: #{coatten_block.1} parent=55 // pred_region
          %p4166 = scmp.lt.s32.totalorder %s19, 1
          %s4167 = scalar_select %p4166, %s19, 1
          %s4168 = smul.addr %s4167, 32
          %s4169 = smul.addr %s4168, 8
          %s4170 = scalar_lea.vmem %s6, %s4169
        $region60: #{coatten_block.1} parent=55 // pred_fallthru
          _
      $region56: #{coatten_block.1} parent=5 // pred_fallthru
        _
    $region6: #{coatten_block.1} parent=1 // loop_footer
      %s17 = sadd.s32 1, %s13
    $region7: #{coatten_block.1} parent=1 // loop_footer_branch
      %12 = sbr.rel target = $region3
    $region8: #{coatten_block.1} parent=1 // loop_exit
      _
    %4171 = vsyncpa [#allocation3], 1
    %s4172 = scalar_lea.sflag [#allocation3], 1
    %4173 = vsyncpa %s4172, 1

</llo_original>
